<compile_context>
chip_gen: v6e
topology: v6e:2x2x1
jax: 0.10.0
libtpu: 0.0.40
codegen_flags: <defaults>
</compile_context>

<pallas_src>
import numpy as np
import jax
import jax.numpy as jnp
from jax import lax
from jax.experimental import pallas as pl
from jax.experimental.pallas import tpu as pltpu


def _round_up(x, m):
    return (x + m - 1) // m * m


# ---------------------------------------------------------------------------
# LocalResponseNorm over the channel (last) axis, matching
# torch.nn.LocalResponseNorm(size=4, alpha=1e-4, beta=0.75, k=2.0):
#   out[n, c] = x[n, c] / (k + alpha/size * sum_{d=-size//2}^{(size-1)//2}
#                          x[n, c+d]^2) ** beta
# PRECONDITION: the last axis carries at least size//2 trailing zero lanes
# beyond the true channel count (guaranteed by prepare_params' zero padding),
# so cyclic lane rotations wrap only zeros and exactly reproduce PyTorch's
# zero-padded window with no per-lane edge masks.
# ---------------------------------------------------------------------------
def _lrn(x, *, size=4, alpha=1e-4, beta=0.75, k=2.0, out_dtype=jnp.float32):
    c = x.shape[-1]
    sq = x * x
    acc = sq
    for d in range(-(size // 2), (size - 1) // 2 + 1):
        if d == 0:
            continue
        # rolled[:, i] = sq[:, (i + d) mod c]   (lane rotation, XLU slot)
        acc = acc + pltpu.roll(sq, shift=(-d) % c, axis=1)
    base = k + (alpha / size) * acc
    if beta == 0.75:
        # base^-0.75 = rsqrt(base) * sqrt(rsqrt(base)); 2 EUP ops, no divide.
        inv = lax.rsqrt(base)
        p = inv * jnp.sqrt(inv)
    else:
        p = jnp.exp(-beta * jnp.log(base))
    # Fuse the cast needed by the following bf16 matmul into the output mul.
    return (x * p).astype(out_dtype)


def textnet_kernel(x_ref, w1_ref, b1_ref, w2_ref, b2_ref, w3_ref, b3_ref,
                   out_ref):
    # bf16 MXU operands, f32 accumulation & elementwise math.
    x = x_ref[...].astype(jnp.bfloat16)                       # (TN, dim_pad)

    # feature[0:2]: Conv2d(1, 4096, (1, dimTxt)) + ReLU  == dense + ReLU
    h = jnp.dot(x, w1_ref[...], preferred_element_type=jnp.float32)
    h = jnp.maximum(h + b1_ref[...], 0.0)                     # (TN, hidden_pad)
    # feature[2]: LocalResponseNorm (mask-free on zero-padded lanes)
    h = _lrn(h, out_dtype=jnp.bfloat16)
    # feature[3:5]: Conv2d(4096, SEMANTIC_EMBED, 1x1) + ReLU
    e = jnp.dot(h, w2_ref[...], preferred_element_type=jnp.float32)
    e = jnp.maximum(e + b2_ref[...], 0.0)                     # (TN, embed_pad)
    # self.norm: LocalResponseNorm
    e = _lrn(e, out_dtype=jnp.bfloat16)
    # hash: Conv2d(SEMANTIC_EMBED, bit, 1x1) + Tanh (bit padded to 128 lanes)
    o = jnp.dot(e, w3_ref[...], preferred_element_type=jnp.float32)
    out_ref[...] = jnp.tanh(o + b3_ref[...])                  # (TN, bit_pad)


def prepare_params(params, *, lrn_size=4):
    """One-time weight prep (call once, outside the per-step forward).

    params: (W1, b1, W2, b2, W3, b3) with W* dense (in, out) f32 matrices and
    b* as (out,) or (1, out).  Returns zero-padded, lane-dense weights with
    MXU operands cast to bf16, plus true/padded dims.
    """
    W1, b1, W2, b2, W3, b3 = params
    dim_txt, hidden = W1.shape
    embed = W2.shape[1]
    bit = W3.shape[1]
    guard = lrn_size // 2          # trailing zero lanes needed by mask-free LRN

    dim_pad = _round_up(dim_txt, 128)
    hidden_pad = _round_up(hidden + guard, 128)
    embed_pad = _round_up(embed + guard, 128)
    bit_pad = _round_up(bit, 128)

    def pad_w(a, rows, cols):
        a = jnp.asarray(a, jnp.float32)
        return jnp.pad(a, ((0, rows - a.shape[0]), (0, cols - a.shape[1])))

    def pad_b(b, cols):
        b = jnp.asarray(b, jnp.float32).reshape(1, -1)
        return jnp.pad(b, ((0, 0), (0, cols - b.shape[1])))

    return dict(
        W1=pad_w(W1, dim_pad, hidden_pad).astype(jnp.bfloat16),
        b1=pad_b(b1, hidden_pad),
        W2=pad_w(W2, hidden_pad, embed_pad).astype(jnp.bfloat16),
        b2=pad_b(b2, embed_pad),
        W3=pad_w(W3, embed_pad, bit_pad).astype(jnp.bfloat16),
        b3=pad_b(b3, bit_pad),
        dims=(dim_txt, hidden, embed, bit),
        padded=(dim_pad, hidden_pad, embed_pad, bit_pad),
    )


def textnet_forward(y, prepped, *, tile_rows=256):
    """y: (N, dimTxt) f32.  prepped: output of prepare_params()."""
    dim_txt, hidden, embed, bit = prepped["dims"]
    dim_pad, hidden_pad, embed_pad, bit_pad = prepped["padded"]
    W1b, b1 = prepped["W1"], prepped["b1"]
    W2b, b2 = prepped["W2"], prepped["b2"]
    W3b, b3 = prepped["W3"], prepped["b3"]

    n = y.shape[0]
    # Near-equal row tiles, and >= 2 tiles when possible so the "parallel"
    # batch axis spans both TensorCores on v7x (no-op on v5e/v6e).
    num_tiles = max(pl.cdiv(n, tile_rows), 1)
    if num_tiles == 1 and n > 8:
        num_tiles = 2
    tn = _round_up(pl.cdiv(n, num_tiles), 8)       # f32 sublane multiple
    n_pad = _round_up(n, tn)

    # Plain-JAX glue: pad batch rows and text-feature lanes (the zero lanes
    # line up with W1's zero-padded rows, so matmul-1 is unchanged).
    y_p = jnp.pad(y.astype(jnp.float32),
                  ((0, n_pad - n), (0, dim_pad - dim_txt)))

    def pinned(rows, cols):                        # weights stay VMEM-resident
        return pl.BlockSpec((rows, cols), lambda i: (0, 0))

    flops = 2 * n_pad * (dim_pad * hidden_pad + hidden_pad * embed_pad
                         + embed_pad * bit_pad)
    transcendentals = n_pad * (2 * (hidden_pad + embed_pad) + bit_pad)
    bytes_accessed = (4 * (y_p.size + b1.size + b2.size + b3.size
                           + n_pad * bit_pad)
                      + 2 * (W1b.size + W2b.size + W3b.size))

    # Scoped-VMEM cap: ~8 live full-width f32 temporaries per row tile plus
    # double-buffered weights / IO tiles.  ~47 MiB at the default TN=256
    # (inside v7x's 64 MiB with headroom); scales up if tile_rows is raised
    # on v6e (128 MiB VMEM).
    vmem_limit = min(100 * 1024 * 1024,
                     12 * 1024 * 1024 + 8 * tn * hidden_pad * 4)

    out = pl.pallas_call(
        textnet_kernel,
        out_shape=jax.ShapeDtypeStruct((n_pad, bit_pad), jnp.float32),
        grid=(n_pad // tn,),
        in_specs=[
            pl.BlockSpec((tn, dim_pad), lambda i: (i, 0)),   # x tile
            pinned(dim_pad, hidden_pad),                     # W1 (bf16)
            pinned(1, hidden_pad),                           # b1 (f32)
            pinned(hidden_pad, embed_pad),                   # W2 (bf16)
            pinned(1, embed_pad),                            # b2 (f32)
            pinned(embed_pad, bit_pad),                      # W3 (bf16)
            pinned(1, bit_pad),                              # b3 (f32)
        ],
        out_specs=pl.BlockSpec((tn, bit_pad), lambda i: (i, 0)),
        compiler_params=pltpu.CompilerParams(
            dimension_semantics=("parallel",),
            vmem_limit_bytes=vmem_limit,
        ),
        cost_estimate=pl.CostEstimate(
            flops=flops,
            transcendentals=transcendentals,
            bytes_accessed=bytes_accessed,
        ),
    )(y_p, W1b, b1, W2b, b2, W3b, b3)
    return out[:n, :bit]


# ---------------------------------------------------------------------------
# Pure-JAX f32 reference (same math as the PyTorch module) for correctness.
# ---------------------------------------------------------------------------
def reference_forward(y, params):
    W1, b1, W2, b2, W3, b3 = params

    def lrn(x, size=4, alpha=1e-4, beta=0.75, k=2.0):
        c = x.shape[-1]
        sq = x * x
        pad = jnp.pad(sq, ((0, 0), (size // 2, (size - 1) // 2)))
        s = sum(pad[:, i:i + c] for i in range(size))
        return x / (k + (alpha / size) * s) ** beta

    dot = lambda a, b: jnp.dot(a, b, precision="highest")
    h = jnp.maximum(dot(y, W1) + b1, 0.0)
    h = lrn(h)
    e = jnp.maximum(dot(h, W2) + b2, 0.0)
    e = lrn(e)
    return jnp.tanh(dot(e, W3) + b3)


if __name__ == "__main__":
    # Small shapes consistent with the module (4096 hidden is hardcoded there).
    N, DIM_TXT, HIDDEN, SEM_EMBED, BIT = 2, 16, 4096, 32, 16

    key = jax.random.PRNGKey(0)
    ks = jax.random.split(key, 7)
    # Large-magnitude text features so the LRN (alpha=1e-4) actually moves the
    # denominator away from k=2 and window/roll bugs are not hidden below
    # tolerance.
    y = 3000.0 * jax.random.normal(ks[0], (N, DIM_TXT), jnp.float32)

    # Deterministic init mirroring nn.init.normal_(std=0.01) on torch-shaped
    # conv weights, then reshaped to dense (in, out) matrices.
    w1_conv = 0.01 * jax.random.normal(ks[1], (HIDDEN, 1, 1, DIM_TXT), jnp.float32)
    b1 = 0.01 * jax.random.normal(ks[2], (HIDDEN,), jnp.float32)
    w2_conv = 0.01 * jax.random.normal(ks[3], (SEM_EMBED, HIDDEN, 1, 1), jnp.float32)
    b2 = 0.01 * jax.random.normal(ks[4], (SEM_EMBED,), jnp.float32)
    w3_conv = 0.01 * jax.random.normal(ks[5], (BIT, SEM_EMBED, 1, 1), jnp.float32)
    b3 = 0.01 * jax.random.normal(ks[6], (BIT,), jnp.float32)

    params = (
        w1_conv.reshape(HIDDEN, DIM_TXT).T,    # (dimTxt, 4096)
        b1.reshape(1, HIDDEN),
        w2_conv.reshape(SEM_EMBED, HIDDEN).T,  # (4096, E)
        b2.reshape(1, SEM_EMBED),
        w3_conv.reshape(BIT, SEM_EMBED).T,     # (E, bit)
        b3.reshape(1, BIT),
    )

    prepped = prepare_params(params)           # one-time weight prep (hoisted)
    fwd = jax.jit(lambda yy: textnet_forward(yy, prepped))

    out = fwd(y)
    jax.block_until_ready(out)

    ref = reference_forward(y, params)
    # Tolerances account for bf16 MXU operands vs. the all-f32 reference.
    np.testing.assert_allclose(np.asarray(out), np.asarray(ref),
                               rtol=2.5e-2, atol=2.5e-2)
    print("KERNEL_OK")
</pallas_src>

<mosaic_0001>
module attributes {stable_mosaic.version = 11 : i64} {
  func.func @textnet_kernel(%arg0: i32, %arg1: memref<8x128xf32, #tpu.memory_space<vmem>>, %arg2: memref<128x4224xbf16, #tpu.memory_space<vmem>>, %arg3: memref<1x4224xf32, #tpu.memory_space<vmem>>, %arg4: memref<4224x128xbf16, #tpu.memory_space<vmem>>, %arg5: memref<1x128xf32, #tpu.memory_space<vmem>>, %arg6: memref<128x128xbf16, #tpu.memory_space<vmem>>, %arg7: memref<1x128xf32, #tpu.memory_space<vmem>>, %arg8: memref<8x128xf32, #tpu.memory_space<vmem>>) attributes {dimension_semantics = [#tpu.dimension_semantics<parallel>], iteration_bounds = array<i64: 1>, scalar_prefetch = 0 : i64, scratch_operands = 0 : i64, tpu.core_type = #tpu.core_type<tc>, window_params = [{transform_indices = @transform_0, window_bounds = array<i64: 8, 128>}, {pipeline_mode = #tpu.pipeline_mode<synchronous>, transform_indices = @transform_1, window_bounds = array<i64: 128, 4224>}, {pipeline_mode = #tpu.pipeline_mode<synchronous>, transform_indices = @transform_2, window_bounds = array<i64: 1, 4224>}, {pipeline_mode = #tpu.pipeline_mode<synchronous>, transform_indices = @transform_3, window_bounds = array<i64: 4224, 128>}, {pipeline_mode = #tpu.pipeline_mode<synchronous>, transform_indices = @transform_4, window_bounds = array<i64: 1, 128>}, {pipeline_mode = #tpu.pipeline_mode<synchronous>, transform_indices = @transform_5, window_bounds = array<i64: 128, 128>}, {pipeline_mode = #tpu.pipeline_mode<synchronous>, transform_indices = @transform_6, window_bounds = array<i64: 1, 128>}, {transform_indices = @transform_7, window_bounds = array<i64: 8, 128>}]} {
    %c0 = arith.constant 0 : index
    %c0_0 = arith.constant 0 : index
    %0 = vector.load %arg1[%c0, %c0_0] : memref<8x128xf32, #tpu.memory_space<vmem>>, vector<8x128xf32>
    %1 = arith.truncf %0 : vector<8x128xf32> to vector<8x128xbf16>
    %c0_1 = arith.constant 0 : index
    %c0_2 = arith.constant 0 : index
    %2 = vector.load %arg2[%c0_1, %c0_2] : memref<128x4224xbf16, #tpu.memory_space<vmem>>, vector<128x4224xbf16>
    %cst = arith.constant dense<0.000000e+00> : vector<8x4224xf32>
    %3 = tpu.matmul %1, %2, %cst {dimension_numbers = #tpu.dot_dimension_numbers<[1], [0], [0], [1], [0, 0, 1, 1], [], []>} : vector<8x128xbf16>, vector<128x4224xbf16>, vector<8x4224xf32> -> vector<8x4224xf32>
    %c0_3 = arith.constant 0 : index
    %c0_4 = arith.constant 0 : index
    %4 = vector.load %arg3[%c0_3, %c0_4] : memref<1x4224xf32, #tpu.memory_space<vmem>>, vector<1x4224xf32>
    %5 = vector.broadcast %4 : vector<1x4224xf32> to vector<8x4224xf32>
    %6 = arith.addf %3, %5 : vector<8x4224xf32>
    %cst_5 = arith.constant 0.000000e+00 : f32
    %7 = vector.broadcast %cst_5 : f32 to vector<8x4224xf32>
    %8 = arith.maximumf %6, %7 : vector<8x4224xf32>
    %9 = arith.mulf %8, %8 : vector<8x4224xf32>
    %c2_i32 = arith.constant 2 : i32
    %10 = tpu.dynamic_rotate %9 by %c2_i32 dim 1 : vector<8x4224xf32>, i32 -> vector<8x4224xf32>
    %11 = arith.addf %9, %10 : vector<8x4224xf32>
    %c1_i32 = arith.constant 1 : i32
    %12 = tpu.dynamic_rotate %9 by %c1_i32 dim 1 : vector<8x4224xf32>, i32 -> vector<8x4224xf32>
    %13 = arith.addf %11, %12 : vector<8x4224xf32>
    %c4223_i32 = arith.constant 4223 : i32
    %14 = tpu.dynamic_rotate %9 by %c4223_i32 dim 1 : vector<8x4224xf32>, i32 -> vector<8x4224xf32>
    %15 = arith.addf %13, %14 : vector<8x4224xf32>
    %cst_6 = arith.constant 2.500000e-05 : f32
    %16 = vector.broadcast %cst_6 : f32 to vector<8x4224xf32>
    %17 = arith.mulf %16, %15 : vector<8x4224xf32>
    %cst_7 = arith.constant 2.000000e+00 : f32
    %18 = vector.broadcast %cst_7 : f32 to vector<8x4224xf32>
    %19 = arith.addf %18, %17 : vector<8x4224xf32>
    %20 = math.rsqrt %19 : vector<8x4224xf32>
    %21 = math.sqrt %20 : vector<8x4224xf32>
    %22 = arith.mulf %20, %21 : vector<8x4224xf32>
    %23 = arith.mulf %8, %22 : vector<8x4224xf32>
    %24 = arith.truncf %23 : vector<8x4224xf32> to vector<8x4224xbf16>
    %c0_8 = arith.constant 0 : index
    %c0_9 = arith.constant 0 : index
    %25 = vector.load %arg4[%c0_8, %c0_9] : memref<4224x128xbf16, #tpu.memory_space<vmem>>, vector<4224x128xbf16>
    %cst_10 = arith.constant dense<0.000000e+00> : vector<8x128xf32>
    %26 = tpu.matmul %24, %25, %cst_10 {dimension_numbers = #tpu.dot_dimension_numbers<[1], [0], [0], [1], [0, 0, 1, 1], [], []>} : vector<8x4224xbf16>, vector<4224x128xbf16>, vector<8x128xf32> -> vector<8x128xf32>
    %c0_11 = arith.constant 0 : index
    %c0_12 = arith.constant 0 : index
    %27 = vector.load %arg5[%c0_11, %c0_12] : memref<1x128xf32, #tpu.memory_space<vmem>>, vector<1x128xf32>
    %28 = vector.broadcast %27 : vector<1x128xf32> to vector<8x128xf32>
    %29 = arith.addf %26, %28 : vector<8x128xf32>
    %cst_13 = arith.constant 0.000000e+00 : f32
    %30 = vector.broadcast %cst_13 : f32 to vector<8x128xf32>
    %31 = arith.maximumf %29, %30 : vector<8x128xf32>
    %32 = arith.mulf %31, %31 : vector<8x128xf32>
    %c2_i32_14 = arith.constant 2 : i32
    %33 = tpu.dynamic_rotate %32 by %c2_i32_14 dim 1 : vector<8x128xf32>, i32 -> vector<8x128xf32>
    %34 = arith.addf %32, %33 : vector<8x128xf32>
    %c1_i32_15 = arith.constant 1 : i32
    %35 = tpu.dynamic_rotate %32 by %c1_i32_15 dim 1 : vector<8x128xf32>, i32 -> vector<8x128xf32>
    %36 = arith.addf %34, %35 : vector<8x128xf32>
    %c127_i32 = arith.constant 127 : i32
    %37 = tpu.dynamic_rotate %32 by %c127_i32 dim 1 : vector<8x128xf32>, i32 -> vector<8x128xf32>
    %38 = arith.addf %36, %37 : vector<8x128xf32>
    %cst_16 = arith.constant 2.500000e-05 : f32
    %39 = vector.broadcast %cst_16 : f32 to vector<8x128xf32>
    %40 = arith.mulf %39, %38 : vector<8x128xf32>
    %cst_17 = arith.constant 2.000000e+00 : f32
    %41 = vector.broadcast %cst_17 : f32 to vector<8x128xf32>
    %42 = arith.addf %41, %40 : vector<8x128xf32>
    %43 = math.rsqrt %42 : vector<8x128xf32>
    %44 = math.sqrt %43 : vector<8x128xf32>
    %45 = arith.mulf %43, %44 : vector<8x128xf32>
    %46 = arith.mulf %31, %45 : vector<8x128xf32>
    %47 = arith.truncf %46 : vector<8x128xf32> to vector<8x128xbf16>
    %c0_18 = arith.constant 0 : index
    %c0_19 = arith.constant 0 : index
    %48 = vector.load %arg6[%c0_18, %c0_19] : memref<128x128xbf16, #tpu.memory_space<vmem>>, vector<128x128xbf16>
    %cst_20 = arith.constant dense<0.000000e+00> : vector<8x128xf32>
    %49 = tpu.matmul %47, %48, %cst_20 {dimension_numbers = #tpu.dot_dimension_numbers<[1], [0], [0], [1], [0, 0, 1, 1], [], []>} : vector<8x128xbf16>, vector<128x128xbf16>, vector<8x128xf32> -> vector<8x128xf32>
    %c0_21 = arith.constant 0 : index
    %c0_22 = arith.constant 0 : index
    %50 = vector.load %arg7[%c0_21, %c0_22] : memref<1x128xf32, #tpu.memory_space<vmem>>, vector<1x128xf32>
    %51 = vector.broadcast %50 : vector<1x128xf32> to vector<8x128xf32>
    %52 = arith.addf %49, %51 : vector<8x128xf32>
    %53 = math.tanh %52 : vector<8x128xf32>
    %c0_23 = arith.constant 0 : index
    %c0_24 = arith.constant 0 : index
    %54 = vector.load %arg8[%c0_23, %c0_24] : memref<8x128xf32, #tpu.memory_space<vmem>>, vector<8x128xf32>
    tpu.vector_store %arg8[%c0_23, %c0_24], %53 {strides = array<i32>} : memref<8x128xf32, #tpu.memory_space<vmem>>, vector<8x128xf32>,
    return
  }
  func.func @transform_0(%arg0: i32) -> (i32, i32) {
    %c0_i32 = arith.constant 0 : i32
    %c0_i32_0 = arith.constant 0 : i32
    return %arg0, %c0_i32 : i32, i32
  }
  func.func @transform_1(%arg0: i32) -> (i32, i32) {
    %c0_i32 = arith.constant 0 : i32
    %c0_i32_0 = arith.constant 0 : i32
    %c0_i32_1 = arith.constant 0 : i32
    return %c0_i32, %c0_i32_0 : i32, i32
  }
  func.func @transform_2(%arg0: i32) -> (i32, i32) {
    %c0_i32 = arith.constant 0 : i32
    %c0_i32_0 = arith.constant 0 : i32
    %c0_i32_1 = arith.constant 0 : i32
    return %c0_i32, %c0_i32_0 : i32, i32
  }
  func.func @transform_3(%arg0: i32) -> (i32, i32) {
    %c0_i32 = arith.constant 0 : i32
    %c0_i32_0 = arith.constant 0 : i32
    %c0_i32_1 = arith.constant 0 : i32
    return %c0_i32, %c0_i32_0 : i32, i32
  }
  func.func @transform_4(%arg0: i32) -> (i32, i32) {
    %c0_i32 = arith.constant 0 : i32
    %c0_i32_0 = arith.constant 0 : i32
    %c0_i32_1 = arith.constant 0 : i32
    return %c0_i32, %c0_i32_0 : i32, i32
  }
  func.func @transform_5(%arg0: i32) -> (i32, i32) {
    %c0_i32 = arith.constant 0 : i32
    %c0_i32_0 = arith.constant 0 : i32
    %c0_i32_1 = arith.constant 0 : i32
    return %c0_i32, %c0_i32_0 : i32, i32
  }
  func.func @transform_6(%arg0: i32) -> (i32, i32) {
    %c0_i32 = arith.constant 0 : i32
    %c0_i32_0 = arith.constant 0 : i32
    %c0_i32_1 = arith.constant 0 : i32
    return %c0_i32, %c0_i32_0 : i32, i32
  }
  func.func @transform_7(%arg0: i32) -> (i32, i32) {
    %c0_i32 = arith.constant 0 : i32
    %c0_i32_0 = arith.constant 0 : i32
    return %arg0, %c0_i32 : i32, i32
  }
}

</mosaic_0001>

<llo_original>
// kernel: _lambda_.1
$region0: #{_lambda_.1}
  #allocation0 [shape = 'u32[]', space=smem, size = 0x4, offset = 0x4, fixed_abs, tag = 'smem constant byte address 0x4 - core index']
  #allocation1 [shape = 'u32[144,128]{1,0:T(1,128)}', space=vmem, size = 0x12000, scoped, tag = 'internal scratch']
  %s0 = inlined_call_operand.vmem [shape: f32[8,128], index: 0, kind: input, shape index: {}]
  %s1 = inlined_call_operand.hbm [shape: bf16[128,4224], index: 1, kind: input, shape index: {}]
  %s2 = inlined_call_operand.hbm [shape: f32[1,4224], index: 2, kind: input, shape index: {}]
  %s3 = inlined_call_operand.hbm [shape: bf16[4224,128], index: 3, kind: input, shape index: {}]
  %s4 = inlined_call_operand.hbm [shape: f32[1,128], index: 4, kind: input, shape index: {}]
  %s5 = inlined_call_operand.hbm [shape: bf16[128,128], index: 5, kind: input, shape index: {}]
  %s6 = inlined_call_operand.hbm [shape: f32[1,128], index: 6, kind: input, shape index: {}]
  %s7 = inlined_call_operand.vmem [shape: f32[8,128], index: 7, kind: output, shape index: {}]
  %s8 = sld [smem:[#allocation0]]
  $region62: #{_lambda_.1} parent=0
    _
  %s10 = ssub.s32 1, %s8
  %s11 = scalar_select 0, %s10, %s8
  $region1: #{_lambda_.1} parent=0
    #allocation2 [shape = 'u8[1081344]{0}', space=vmem, size = 0x108000, scoped, tag = 'input window, operand 1, single buffered']
    #allocation3 [shape = 's32[1]{0}', space=sflag, size = 0x4, scoped, tag = 'scoped memory for _lambda_.1']
    #allocation4 [shape = 'u8[16896]{0}', space=vmem, size = 0x4400, scoped, tag = 'input window, operand 2, single buffered']
    #allocation5 [shape = 's32[1]{0}', space=sflag, size = 0x4, scoped, tag = 'scoped memory for _lambda_.1']
    #allocation6 [shape = 'u8[1081344]{0}', space=vmem, size = 0x108000, scoped, tag = 'input window, operand 3, single buffered']
    #allocation7 [shape = 'u8[512]{0}', space=vmem, size = 0x400, scoped, tag = 'input window, operand 4, single buffered']
    #allocation8 [shape = 's32[1]{0}', space=sflag, size = 0x4, scoped, tag = 'scoped memory for _lambda_.1']
    #allocation9 [shape = 'u8[32768]{0}', space=vmem, size = 0x8000, scoped, tag = 'input window, operand 5, single buffered']
    #allocation10 [shape = 'u8[512]{0}', space=vmem, size = 0x400, scoped, tag = 'input window, operand 6, single buffered']
    #allocation11 [shape = 's32[1]{0}', space=sflag, size = 0x4, scoped, tag = 'scoped memory for _lambda_.1']
    %12 = vsyncpa [#allocation3], 0
    %13 = vsyncpa [#allocation5], 0
    %14 = vsyncpa [#allocation8], 0
    %15 = vsyncpa [#allocation11], 0
    // Predicated region
    $region2: #{_lambda_.1} parent=1 // pred_check
      _
    $region3: #{_lambda_.1} parent=1 // pred_check_branch
      %17 = sbr.rel (0) target = $region5
    $region4: #{_lambda_.1} parent=1 // pred_region
      _
    $region5: #{_lambda_.1} parent=1 // pred_fallthru
      _
    // Predicated region
    $region6: #{_lambda_.1} parent=1 // pred_check
      _
    $region7: #{_lambda_.1} parent=1 // pred_check_branch
      %19 = sbr.rel (0) target = $region9
    $region8: #{_lambda_.1} parent=1 // pred_region
      %s21 = ssub.s32 33792, 33792
      %22 = vsyncadd [#allocation3], %s21
      %s23 = sshll.u32 [#allocation2], 4
      %s24 = int_to_ptr.vmem [resolvable:$true] %s23
      %29 = dma.hbm_to_vmem [thread:$0]  %s1, 33792, %s24, [#allocation3], 2112, 2112, 132
    $region9: #{_lambda_.1} parent=1 // pred_fallthru
      _
    // Predicated region
    $region10: #{_lambda_.1} parent=1 // pred_check
      _
    $region11: #{_lambda_.1} parent=1 // pred_check_branch
      %31 = sbr.rel (0) target = $region13
    $region12: #{_lambda_.1} parent=1 // pred_region
      %s33 = ssub.s32 528, 528
      %34 = vsyncadd [#allocation5], %s33
      %s36 = sshll.u32 [#allocation4], 4
      %s37 = int_to_ptr.vmem [resolvable:$true] %s36
      %39 = dma.hbm_to_vmem [thread:$0]  %s2, 528, %s37, [#allocation5]
    $region13: #{_lambda_.1} parent=1 // pred_fallthru
      _
    // Predicated region
    $region14: #{_lambda_.1} parent=1 // pred_check
      _
    $region15: #{_lambda_.1} parent=1 // pred_check_branch
      %41 = sbr.rel (0) target = $region17
    $region16: #{_lambda_.1} parent=1 // pred_region
      %s43 = ssub.s32 33792, 33792
      %44 = vsyncadd [#allocation5], %s43
      %s45 = sshll.u32 [#allocation6], 4
      %s46 = int_to_ptr.vmem [resolvable:$true] %s45
      %51 = dma.hbm_to_vmem [thread:$0]  %s3, 33792, %s46, [#allocation5], 64, 64, 4
    $region17: #{_lambda_.1} parent=1 // pred_fallthru
      _
    // Predicated region
    $region18: #{_lambda_.1} parent=1 // pred_check
      _
    $region19: #{_lambda_.1} parent=1 // pred_check_branch
      %53 = sbr.rel (0) target = $region21
    $region20: #{_lambda_.1} parent=1 // pred_region
      %s55 = ssub.s32 16, 16
      %56 = vsyncadd [#allocation8], %s55
      %s58 = sshll.u32 [#allocation7], 4
      %s59 = int_to_ptr.vmem [resolvable:$true] %s58
      %61 = dma.hbm_to_vmem [thread:$0]  %s4, 16, %s59, [#allocation8]
    $region21: #{_lambda_.1} parent=1 // pred_fallthru
      _
    // Predicated region
    $region22: #{_lambda_.1} parent=1 // pred_check
      _
    $region23: #{_lambda_.1} parent=1 // pred_check_branch
      %63 = sbr.rel (0) target = $region25
    $region24: #{_lambda_.1} parent=1 // pred_region
      %s65 = ssub.s32 1024, 1024
      %66 = vsyncadd [#allocation8], %s65
      %s67 = sshll.u32 [#allocation9], 4
      %s68 = int_to_ptr.vmem [resolvable:$true] %s67
      %73 = dma.hbm_to_vmem [thread:$0]  %s5, 1024, %s68, [#allocation8], 64, 64, 4
    $region25: #{_lambda_.1} parent=1 // pred_fallthru
      _
    // Predicated region
    $region26: #{_lambda_.1} parent=1 // pred_check
      _
    $region27: #{_lambda_.1} parent=1 // pred_check_branch
      %75 = sbr.rel (0) target = $region29
    $region28: #{_lambda_.1} parent=1 // pred_region
      %s77 = ssub.s32 16, 16
      %78 = vsyncadd [#allocation11], %s77
      %s80 = sshll.u32 [#allocation10], 4
      %s81 = int_to_ptr.vmem [resolvable:$true] %s80
      %83 = dma.hbm_to_vmem [thread:$0]  %s6, 16, %s81, [#allocation11]
    $region29: #{_lambda_.1} parent=1 // pred_fallthru
      _
    // Predicated region
    $region30: #{_lambda_.1} parent=1 // pred_check
      _
    $region31: #{_lambda_.1} parent=1 // pred_check_branch
      %85 = sbr.rel (0) target = $region33
    $region32: #{_lambda_.1} parent=1 // pred_region
      %86 = dma.done [#allocation3], 33792
    $region33: #{_lambda_.1} parent=1 // pred_fallthru
      _
    // Predicated region
    $region34: #{_lambda_.1} parent=1 // pred_check
      _
    $region35: #{_lambda_.1} parent=1 // pred_check_branch
      %88 = sbr.rel (0) target = $region37
    $region36: #{_lambda_.1} parent=1 // pred_region
      %89 = dma.done [#allocation5], 528
    $region37: #{_lambda_.1} parent=1 // pred_fallthru
      _
    // Predicated region
    $region38: #{_lambda_.1} parent=1 // pred_check
      _
    $region39: #{_lambda_.1} parent=1 // pred_check_branch
      %91 = sbr.rel (0) target = $region41
    $region40: #{_lambda_.1} parent=1 // pred_region
      %92 = dma.done [#allocation5], 33792
    $region41: #{_lambda_.1} parent=1 // pred_fallthru
      _
    // Predicated region
    $region42: #{_lambda_.1} parent=1 // pred_check
      _
    $region43: #{_lambda_.1} parent=1 // pred_check_branch
      %94 = sbr.rel (0) target = $region45
    $region44: #{_lambda_.1} parent=1 // pred_region
      %95 = dma.done [#allocation8], 16
    $region45: #{_lambda_.1} parent=1 // pred_fallthru
      _
    // Predicated region
    $region46: #{_lambda_.1} parent=1 // pred_check
      _
    $region47: #{_lambda_.1} parent=1 // pred_check_branch
      %97 = sbr.rel (0) target = $region49
    $region48: #{_lambda_.1} parent=1 // pred_region
      %98 = dma.done [#allocation8], 1024
    $region49: #{_lambda_.1} parent=1 // pred_fallthru
      _
    // Predicated region
    $region50: #{_lambda_.1} parent=1 // pred_check
      _
    $region51: #{_lambda_.1} parent=1 // pred_check_branch
      %100 = sbr.rel (0) target = $region53
    $region52: #{_lambda_.1} parent=1 // pred_region
      %101 = dma.done [#allocation11], 16
    $region53: #{_lambda_.1} parent=1 // pred_fallthru
      _
    %v103 = vld [vmem:[%s0] sm:$0xff]
    %v104 = vpack.c.bf16 %v103, %v103
    %v105 = vld [vmem:[#allocation2] sm:$0xff]
    %v106 = vld [vmem:[#allocation2 + $0x8] sm:$0xff]
    %v107 = vld [vmem:[#allocation2 + $0x10] sm:$0xff]
    %v108 = vld [vmem:[#allocation2 + $0x18] sm:$0xff]
    %v109 = vld [vmem:[#allocation2 + $0x20] sm:$0xff]
    %v110 = vld [vmem:[#allocation2 + $0x28] sm:$0xff]
    %v111 = vld [vmem:[#allocation2 + $0x30] sm:$0xff]
    %v112 = vld [vmem:[#allocation2 + $0x38] sm:$0xff]
    %v113 = vld [vmem:[#allocation2 + $0x40] sm:$0xff]
    %v114 = vld [vmem:[#allocation2 + $0x48] sm:$0xff]
    %v115 = vld [vmem:[#allocation2 + $0x50] sm:$0xff]
    %v116 = vld [vmem:[#allocation2 + $0x58] sm:$0xff]
    %v117 = vld [vmem:[#allocation2 + $0x60] sm:$0xff]
    %v118 = vld [vmem:[#allocation2 + $0x68] sm:$0xff]
    %v119 = vld [vmem:[#allocation2 + $0x70] sm:$0xff]
    %v120 = vld [vmem:[#allocation2 + $0x78] sm:$0xff]
    %v121 = vld [vmem:[#allocation2 + $0x80] sm:$0xf]
    %v122 = vld [vmem:[#allocation2 + $0x84] sm:$0xff]
    %v123 = vld [vmem:[#allocation2 + $0x8c] sm:$0xff]
    %v124 = vld [vmem:[#allocation2 + $0x94] sm:$0xff]
    %v125 = vld [vmem:[#allocation2 + $0x9c] sm:$0xff]
    %v126 = vld [vmem:[#allocation2 + $0xa4] sm:$0xff]
    %v127 = vld [vmem:[#allocation2 + $0xac] sm:$0xff]
    %v128 = vld [vmem:[#allocation2 + $0xb4] sm:$0xff]
    %v129 = vld [vmem:[#allocation2 + $0xbc] sm:$0xff]
    %v130 = vld [vmem:[#allocation2 + $0xc4] sm:$0xff]
    %v131 = vld [vmem:[#allocation2 + $0xcc] sm:$0xff]
    %v132 = vld [vmem:[#allocation2 + $0xd4] sm:$0xff]
    %v133 = vld [vmem:[#allocation2 + $0xdc] sm:$0xff]
    %v134 = vld [vmem:[#allocation2 + $0xe4] sm:$0xff]
    %v135 = vld [vmem:[#allocation2 + $0xec] sm:$0xff]
    %v136 = vld [vmem:[#allocation2 + $0xf4] sm:$0xff]
    %v137 = vld [vmem:[#allocation2 + $0xfc] sm:$0xff]
    %v138 = vld [vmem:[#allocation2 + $0x104] sm:$0xf]
    %v139 = vld [vmem:[#allocation2 + $0x108] sm:$0xff]
    %v140 = vld [vmem:[#allocation2 + $0x110] sm:$0xff]
    %v141 = vld [vmem:[#allocation2 + $0x118] sm:$0xff]
    %v142 = vld [vmem:[#allocation2 + $0x120] sm:$0xff]
    %v143 = vld [vmem:[#allocation2 + $0x128] sm:$0xff]
    %v144 = vld [vmem:[#allocation2 + $0x130] sm:$0xff]
    %v145 = vld [vmem:[#allocation2 + $0x138] sm:$0xff]
    %v146 = vld [vmem:[#allocation2 + $0x140] sm:$0xff]
    %v147 = vld [vmem:[#allocation2 + $0x148] sm:$0xff]
    %v148 = vld [vmem:[#allocation2 + $0x150] sm:$0xff]
    %v149 = vld [vmem:[#allocation2 + $0x158] sm:$0xff]
    %v150 = vld [vmem:[#allocation2 + $0x160] sm:$0xff]
    %v151 = vld [vmem:[#allocation2 + $0x168] sm:$0xff]
    %v152 = vld [vmem:[#allocation2 + $0x170] sm:$0xff]
    %v153 = vld [vmem:[#allocation2 + $0x178] sm:$0xff]
    %v154 = vld [vmem:[#allocation2 + $0x180] sm:$0xff]
    %v155 = vld [vmem:[#allocation2 + $0x188] sm:$0xf]
    %v156 = vld [vmem:[#allocation2 + $0x18c] sm:$0xff]
    %v157 = vld [vmem:[#allocation2 + $0x194] sm:$0xff]
    %v158 = vld [vmem:[#allocation2 + $0x19c] sm:$0xff]
    %v159 = vld [vmem:[#allocation2 + $0x1a4] sm:$0xff]
    %v160 = vld [vmem:[#allocation2 + $0x1ac] sm:$0xff]
    %v161 = vld [vmem:[#allocation2 + $0x1b4] sm:$0xff]
    %v162 = vld [vmem:[#allocation2 + $0x1bc] sm:$0xff]
    %v163 = vld [vmem:[#allocation2 + $0x1c4] sm:$0xff]
    %v164 = vld [vmem:[#allocation2 + $0x1cc] sm:$0xff]
    %v165 = vld [vmem:[#allocation2 + $0x1d4] sm:$0xff]
    %v166 = vld [vmem:[#allocation2 + $0x1dc] sm:$0xff]
    %v167 = vld [vmem:[#allocation2 + $0x1e4] sm:$0xff]
    %v168 = vld [vmem:[#allocation2 + $0x1ec] sm:$0xff]
    %v169 = vld [vmem:[#allocation2 + $0x1f4] sm:$0xff]
    %v170 = vld [vmem:[#allocation2 + $0x1fc] sm:$0xff]
    %v171 = vld [vmem:[#allocation2 + $0x204] sm:$0xff]
    %v172 = vld [vmem:[#allocation2 + $0x20c] sm:$0xf]
    %v173 = vld [vmem:[#allocation2 + $0x210] sm:$0xff]
    %v174 = vld [vmem:[#allocation2 + $0x218] sm:$0xff]
    %v175 = vld [vmem:[#allocation2 + $0x220] sm:$0xff]
    %v176 = vld [vmem:[#allocation2 + $0x228] sm:$0xff]
    %v177 = vld [vmem:[#allocation2 + $0x230] sm:$0xff]
    %v178 = vld [vmem:[#allocation2 + $0x238] sm:$0xff]
    %v179 = vld [vmem:[#allocation2 + $0x240] sm:$0xff]
    %v180 = vld [vmem:[#allocation2 + $0x248] sm:$0xff]
    %v181 = vld [vmem:[#allocation2 + $0x250] sm:$0xff]
    %v182 = vld [vmem:[#allocation2 + $0x258] sm:$0xff]
    %v183 = vld [vmem:[#allocation2 + $0x260] sm:$0xff]
    %v184 = vld [vmem:[#allocation2 + $0x268] sm:$0xff]
    %v185 = vld [vmem:[#allocation2 + $0x270] sm:$0xff]
    %v186 = vld [vmem:[#allocation2 + $0x278] sm:$0xff]
    %v187 = vld [vmem:[#allocation2 + $0x280] sm:$0xff]
    %v188 = vld [vmem:[#allocation2 + $0x288] sm:$0xff]
    %v189 = vld [vmem:[#allocation2 + $0x290] sm:$0xf]
    %v190 = vld [vmem:[#allocation2 + $0x294] sm:$0xff]
    %v191 = vld [vmem:[#allocation2 + $0x29c] sm:$0xff]
    %v192 = vld [vmem:[#allocation2 + $0x2a4] sm:$0xff]
    %v193 = vld [vmem:[#allocation2 + $0x2ac] sm:$0xff]
    %v194 = vld [vmem:[#allocation2 + $0x2b4] sm:$0xff]
    %v195 = vld [vmem:[#allocation2 + $0x2bc] sm:$0xff]
    %v196 = vld [vmem:[#allocation2 + $0x2c4] sm:$0xff]
    %v197 = vld [vmem:[#allocation2 + $0x2cc] sm:$0xff]
    %v198 = vld [vmem:[#allocation2 + $0x2d4] sm:$0xff]
    %v199 = vld [vmem:[#allocation2 + $0x2dc] sm:$0xff]
    %v200 = vld [vmem:[#allocation2 + $0x2e4] sm:$0xff]
    %v201 = vld [vmem:[#allocation2 + $0x2ec] sm:$0xff]
    %v202 = vld [vmem:[#allocation2 + $0x2f4] sm:$0xff]
    %v203 = vld [vmem:[#allocation2 + $0x2fc] sm:$0xff]
    %v204 = vld [vmem:[#allocation2 + $0x304] sm:$0xff]
    %v205 = vld [vmem:[#allocation2 + $0x30c] sm:$0xff]
    %v206 = vld [vmem:[#allocation2 + $0x314] sm:$0xf]
    %v207 = vld [vmem:[#allocation2 + $0x318] sm:$0xff]
    %v208 = vld [vmem:[#allocation2 + $0x320] sm:$0xff]
    %v209 = vld [vmem:[#allocation2 + $0x328] sm:$0xff]
    %v210 = vld [vmem:[#allocation2 + $0x330] sm:$0xff]
    %v211 = vld [vmem:[#allocation2 + $0x338] sm:$0xff]
    %v212 = vld [vmem:[#allocation2 + $0x340] sm:$0xff]
    %v213 = vld [vmem:[#allocation2 + $0x348] sm:$0xff]
    %v214 = vld [vmem:[#allocation2 + $0x350] sm:$0xff]
    %v215 = vld [vmem:[#allocation2 + $0x358] sm:$0xff]
    %v216 = vld [vmem:[#allocation2 + $0x360] sm:$0xff]
    %v217 = vld [vmem:[#allocation2 + $0x368] sm:$0xff]
    %v218 = vld [vmem:[#allocation2 + $0x370] sm:$0xff]
    %v219 = vld [vmem:[#allocation2 + $0x378] sm:$0xff]
    %v220 = vld [vmem:[#allocation2 + $0x380] sm:$0xff]
    %v221 = vld [vmem:[#allocation2 + $0x388] sm:$0xff]
    %v222 = vld [vmem:[#allocation2 + $0x390] sm:$0xff]
    %v223 = vld [vmem:[#allocation2 + $0x398] sm:$0xf]
    %v224 = vld [vmem:[#allocation2 + $0x39c] sm:$0xff]
    %v225 = vld [vmem:[#allocation2 + $0x3a4] sm:$0xff]
    %v226 = vld [vmem:[#allocation2 + $0x3ac] sm:$0xff]
    %v227 = vld [vmem:[#allocation2 + $0x3b4] sm:$0xff]
    %v228 = vld [vmem:[#allocation2 + $0x3bc] sm:$0xff]
    %v229 = vld [vmem:[#allocation2 + $0x3c4] sm:$0xff]
    %v230 = vld [vmem:[#allocation2 + $0x3cc] sm:$0xff]
    %v231 = vld [vmem:[#allocation2 + $0x3d4] sm:$0xff]
    %v232 = vld [vmem:[#allocation2 + $0x3dc] sm:$0xff]
    %v233 = vld [vmem:[#allocation2 + $0x3e4] sm:$0xff]
    %v234 = vld [vmem:[#allocation2 + $0x3ec] sm:$0xff]
    %v235 = vld [vmem:[#allocation2 + $0x3f4] sm:$0xff]
    %v236 = vld [vmem:[#allocation2 + $0x3fc] sm:$0xff]
    %v237 = vld [vmem:[#allocation2 + $0x404] sm:$0xff]
    %v238 = vld [vmem:[#allocation2 + $0x40c] sm:$0xff]
    %v239 = vld [vmem:[#allocation2 + $0x414] sm:$0xff]
    %v240 = vld [vmem:[#allocation2 + $0x41c] sm:$0xf]
    %v241 = vld [vmem:[#allocation2 + $0x420] sm:$0xff]
    %v242 = vld [vmem:[#allocation2 + $0x428] sm:$0xff]
    %v243 = vld [vmem:[#allocation2 + $0x430] sm:$0xff]
    %v244 = vld [vmem:[#allocation2 + $0x438] sm:$0xff]
    %v245 = vld [vmem:[#allocation2 + $0x440] sm:$0xff]
    %v246 = vld [vmem:[#allocation2 + $0x448] sm:$0xff]
    %v247 = vld [vmem:[#allocation2 + $0x450] sm:$0xff]
    %v248 = vld [vmem:[#allocation2 + $0x458] sm:$0xff]
    %v249 = vld [vmem:[#allocation2 + $0x460] sm:$0xff]
    %v250 = vld [vmem:[#allocation2 + $0x468] sm:$0xff]
    %v251 = vld [vmem:[#allocation2 + $0x470] sm:$0xff]
    %v252 = vld [vmem:[#allocation2 + $0x478] sm:$0xff]
    %v253 = vld [vmem:[#allocation2 + $0x480] sm:$0xff]
    %v254 = vld [vmem:[#allocation2 + $0x488] sm:$0xff]
    %v255 = vld [vmem:[#allocation2 + $0x490] sm:$0xff]
    %v256 = vld [vmem:[#allocation2 + $0x498] sm:$0xff]
    %v257 = vld [vmem:[#allocation2 + $0x4a0] sm:$0xf]
    %v258 = vld [vmem:[#allocation2 + $0x4a4] sm:$0xff]
    %v259 = vld [vmem:[#allocation2 + $0x4ac] sm:$0xff]
    %v260 = vld [vmem:[#allocation2 + $0x4b4] sm:$0xff]
    %v261 = vld [vmem:[#allocation2 + $0x4bc] sm:$0xff]
    %v262 = vld [vmem:[#allocation2 + $0x4c4] sm:$0xff]
    %v263 = vld [vmem:[#allocation2 + $0x4cc] sm:$0xff]
    %v264 = vld [vmem:[#allocation2 + $0x4d4] sm:$0xff]
    %v265 = vld [vmem:[#allocation2 + $0x4dc] sm:$0xff]
    %v266 = vld [vmem:[#allocation2 + $0x4e4] sm:$0xff]
    %v267 = vld [vmem:[#allocation2 + $0x4ec] sm:$0xff]
    %v268 = vld [vmem:[#allocation2 + $0x4f4] sm:$0xff]
    %v269 = vld [vmem:[#allocation2 + $0x4fc] sm:$0xff]
    %v270 = vld [vmem:[#allocation2 + $0x504] sm:$0xff]
    %v271 = vld [vmem:[#allocation2 + $0x50c] sm:$0xff]
    %v272 = vld [vmem:[#allocation2 + $0x514] sm:$0xff]
    %v273 = vld [vmem:[#allocation2 + $0x51c] sm:$0xff]
    %v274 = vld [vmem:[#allocation2 + $0x524] sm:$0xf]
    %v275 = vld [vmem:[#allocation2 + $0x528] sm:$0xff]
    %v276 = vld [vmem:[#allocation2 + $0x530] sm:$0xff]
    %v277 = vld [vmem:[#allocation2 + $0x538] sm:$0xff]
    %v278 = vld [vmem:[#allocation2 + $0x540] sm:$0xff]
    %v279 = vld [vmem:[#allocation2 + $0x548] sm:$0xff]
    %v280 = vld [vmem:[#allocation2 + $0x550] sm:$0xff]
    %v281 = vld [vmem:[#allocation2 + $0x558] sm:$0xff]
    %v282 = vld [vmem:[#allocation2 + $0x560] sm:$0xff]
    %v283 = vld [vmem:[#allocation2 + $0x568] sm:$0xff]
    %v284 = vld [vmem:[#allocation2 + $0x570] sm:$0xff]
    %v285 = vld [vmem:[#allocation2 + $0x578] sm:$0xff]
    %v286 = vld [vmem:[#allocation2 + $0x580] sm:$0xff]
    %v287 = vld [vmem:[#allocation2 + $0x588] sm:$0xff]
    %v288 = vld [vmem:[#allocation2 + $0x590] sm:$0xff]
    %v289 = vld [vmem:[#allocation2 + $0x598] sm:$0xff]
    %v290 = vld [vmem:[#allocation2 + $0x5a0] sm:$0xff]
    %v291 = vld [vmem:[#allocation2 + $0x5a8] sm:$0xf]
    %v292 = vld [vmem:[#allocation2 + $0x5ac] sm:$0xff]
    %v293 = vld [vmem:[#allocation2 + $0x5b4] sm:$0xff]
    %v294 = vld [vmem:[#allocation2 + $0x5bc] sm:$0xff]
    %v295 = vld [vmem:[#allocation2 + $0x5c4] sm:$0xff]
    %v296 = vld [vmem:[#allocation2 + $0x5cc] sm:$0xff]
    %v297 = vld [vmem:[#allocation2 + $0x5d4] sm:$0xff]
    %v298 = vld [vmem:[#allocation2 + $0x5dc] sm:$0xff]
    %v299 = vld [vmem:[#allocation2 + $0x5e4] sm:$0xff]
    %v300 = vld [vmem:[#allocation2 + $0x5ec] sm:$0xff]
    %v301 = vld [vmem:[#allocation2 + $0x5f4] sm:$0xff]
    %v302 = vld [vmem:[#allocation2 + $0x5fc] sm:$0xff]
    %v303 = vld [vmem:[#allocation2 + $0x604] sm:$0xff]
    %v304 = vld [vmem:[#allocation2 + $0x60c] sm:$0xff]
    %v305 = vld [vmem:[#allocation2 + $0x614] sm:$0xff]
    %v306 = vld [vmem:[#allocation2 + $0x61c] sm:$0xff]
    %v307 = vld [vmem:[#allocation2 + $0x624] sm:$0xff]
    %v308 = vld [vmem:[#allocation2 + $0x62c] sm:$0xf]
    %v309 = vld [vmem:[#allocation2 + $0x630] sm:$0xff]
    %v310 = vld [vmem:[#allocation2 + $0x638] sm:$0xff]
    %v311 = vld [vmem:[#allocation2 + $0x640] sm:$0xff]
    %v312 = vld [vmem:[#allocation2 + $0x648] sm:$0xff]
    %v313 = vld [vmem:[#allocation2 + $0x650] sm:$0xff]
    %v314 = vld [vmem:[#allocation2 + $0x658] sm:$0xff]
    %v315 = vld [vmem:[#allocation2 + $0x660] sm:$0xff]
    %v316 = vld [vmem:[#allocation2 + $0x668] sm:$0xff]
    %v317 = vld [vmem:[#allocation2 + $0x670] sm:$0xff]
    %v318 = vld [vmem:[#allocation2 + $0x678] sm:$0xff]
    %v319 = vld [vmem:[#allocation2 + $0x680] sm:$0xff]
    %v320 = vld [vmem:[#allocation2 + $0x688] sm:$0xff]
    %v321 = vld [vmem:[#allocation2 + $0x690] sm:$0xff]
    %v322 = vld [vmem:[#allocation2 + $0x698] sm:$0xff]
    %v323 = vld [vmem:[#allocation2 + $0x6a0] sm:$0xff]
    %v324 = vld [vmem:[#allocation2 + $0x6a8] sm:$0xff]
    %v325 = vld [vmem:[#allocation2 + $0x6b0] sm:$0xf]
    %v326 = vld [vmem:[#allocation2 + $0x6b4] sm:$0xff]
    %v327 = vld [vmem:[#allocation2 + $0x6bc] sm:$0xff]
    %v328 = vld [vmem:[#allocation2 + $0x6c4] sm:$0xff]
    %v329 = vld [vmem:[#allocation2 + $0x6cc] sm:$0xff]
    %v330 = vld [vmem:[#allocation2 + $0x6d4] sm:$0xff]
    %v331 = vld [vmem:[#allocation2 + $0x6dc] sm:$0xff]
    %v332 = vld [vmem:[#allocation2 + $0x6e4] sm:$0xff]
    %v333 = vld [vmem:[#allocation2 + $0x6ec] sm:$0xff]
    %v334 = vld [vmem:[#allocation2 + $0x6f4] sm:$0xff]
    %v335 = vld [vmem:[#allocation2 + $0x6fc] sm:$0xff]
    %v336 = vld [vmem:[#allocation2 + $0x704] sm:$0xff]
    %v337 = vld [vmem:[#allocation2 + $0x70c] sm:$0xff]
    %v338 = vld [vmem:[#allocation2 + $0x714] sm:$0xff]
    %v339 = vld [vmem:[#allocation2 + $0x71c] sm:$0xff]
    %v340 = vld [vmem:[#allocation2 + $0x724] sm:$0xff]
    %v341 = vld [vmem:[#allocation2 + $0x72c] sm:$0xff]
    %v342 = vld [vmem:[#allocation2 + $0x734] sm:$0xf]
    %v343 = vld [vmem:[#allocation2 + $0x738] sm:$0xff]
    %v344 = vld [vmem:[#allocation2 + $0x740] sm:$0xff]
    %v345 = vld [vmem:[#allocation2 + $0x748] sm:$0xff]
    %v346 = vld [vmem:[#allocation2 + $0x750] sm:$0xff]
    %v347 = vld [vmem:[#allocation2 + $0x758] sm:$0xff]
    %v348 = vld [vmem:[#allocation2 + $0x760] sm:$0xff]
    %v349 = vld [vmem:[#allocation2 + $0x768] sm:$0xff]
    %v350 = vld [vmem:[#allocation2 + $0x770] sm:$0xff]
    %v351 = vld [vmem:[#allocation2 + $0x778] sm:$0xff]
    %v352 = vld [vmem:[#allocation2 + $0x780] sm:$0xff]
    %v353 = vld [vmem:[#allocation2 + $0x788] sm:$0xff]
    %v354 = vld [vmem:[#allocation2 + $0x790] sm:$0xff]
    %v355 = vld [vmem:[#allocation2 + $0x798] sm:$0xff]
    %v356 = vld [vmem:[#allocation2 + $0x7a0] sm:$0xff]
    %v357 = vld [vmem:[#allocation2 + $0x7a8] sm:$0xff]
    %v358 = vld [vmem:[#allocation2 + $0x7b0] sm:$0xff]
    %v359 = vld [vmem:[#allocation2 + $0x7b8] sm:$0xf]
    %v360 = vld [vmem:[#allocation2 + $0x7bc] sm:$0xff]
    %v361 = vld [vmem:[#allocation2 + $0x7c4] sm:$0xff]
    %v362 = vld [vmem:[#allocation2 + $0x7cc] sm:$0xff]
    %v363 = vld [vmem:[#allocation2 + $0x7d4] sm:$0xff]
    %v364 = vld [vmem:[#allocation2 + $0x7dc] sm:$0xff]
    %v365 = vld [vmem:[#allocation2 + $0x7e4] sm:$0xff]
    %v366 = vld [vmem:[#allocation2 + $0x7ec] sm:$0xff]
    %v367 = vld [vmem:[#allocation2 + $0x7f4] sm:$0xff]
    %v368 = vld [vmem:[#allocation2 + $0x7fc] sm:$0xff]
    %v369 = vld [vmem:[#allocation2 + $0x804] sm:$0xff]
    %v370 = vld [vmem:[#allocation2 + $0x80c] sm:$0xff]
    %v371 = vld [vmem:[#allocation2 + $0x814] sm:$0xff]
    %v372 = vld [vmem:[#allocation2 + $0x81c] sm:$0xff]
    %v373 = vld [vmem:[#allocation2 + $0x824] sm:$0xff]
    %v374 = vld [vmem:[#allocation2 + $0x82c] sm:$0xff]
    %v375 = vld [vmem:[#allocation2 + $0x834] sm:$0xff]
    %v376 = vld [vmem:[#allocation2 + $0x83c] sm:$0xf]
    %v377 = vld [vmem:[#allocation4] sm:$0xff]
    %v378 = vld [vmem:[#allocation4 + $0x8] sm:$0xff]
    %v379 = vld [vmem:[#allocation4 + $0x10] sm:$0xff]
    %v380 = vld [vmem:[#allocation4 + $0x18] sm:$0xff]
    %v381 = vld [vmem:[#allocation4 + $0x20] sm:$0x1]
    %v387 = vlaneseq
    %v388 = vshrl.u32 %v387, 7
    %v389 = vsub.s32 0, %v388
    %v390 = vrot.slane %v377, %v389
    %v391 = vlaneseq
    %v392 = vshrl.u32 %v391, 7
    %v393 = vsub.s32 1, %v392
    %v394 = vrot.slane %v377, %v393
    %v395 = vlaneseq
    %v396 = vshrl.u32 %v395, 7
    %v397 = vsub.s32 2, %v396
    %v398 = vrot.slane %v377, %v397
    %v399 = vlaneseq
    %v400 = vshrl.u32 %v399, 7
    %v401 = vsub.s32 3, %v400
    %v402 = vrot.slane %v377, %v401
    %v403 = vlaneseq
    %v404 = vshrl.u32 %v403, 7
    %v405 = vsub.s32 4, %v404
    %v406 = vrot.slane %v377, %v405
    %v407 = vlaneseq
    %v408 = vshrl.u32 %v407, 7
    %v409 = vsub.s32 5, %v408
    %v410 = vrot.slane %v377, %v409
    %v411 = vlaneseq
    %v412 = vshrl.u32 %v411, 7
    %v413 = vsub.s32 6, %v412
    %v414 = vrot.slane %v377, %v413
    %v415 = vlaneseq
    %v416 = vshrl.u32 %v415, 7
    %v417 = vsub.s32 7, %v416
    %v418 = vrot.slane %v377, %v417
    %v419 = vlaneseq
    %v420 = vshrl.u32 %v419, 7
    %v421 = vsub.s32 0, %v420
    %v422 = vrot.slane %v378, %v421
    %v423 = vlaneseq
    %v424 = vshrl.u32 %v423, 7
    %v425 = vsub.s32 1, %v424
    %v426 = vrot.slane %v378, %v425
    %v427 = vlaneseq
    %v428 = vshrl.u32 %v427, 7
    %v429 = vsub.s32 2, %v428
    %v430 = vrot.slane %v378, %v429
    %v431 = vlaneseq
    %v432 = vshrl.u32 %v431, 7
    %v433 = vsub.s32 3, %v432
    %v434 = vrot.slane %v378, %v433
    %v435 = vlaneseq
    %v436 = vshrl.u32 %v435, 7
    %v437 = vsub.s32 4, %v436
    %v438 = vrot.slane %v378, %v437
    %v439 = vlaneseq
    %v440 = vshrl.u32 %v439, 7
    %v441 = vsub.s32 5, %v440
    %v442 = vrot.slane %v378, %v441
    %v443 = vlaneseq
    %v444 = vshrl.u32 %v443, 7
    %v445 = vsub.s32 6, %v444
    %v446 = vrot.slane %v378, %v445
    %v447 = vlaneseq
    %v448 = vshrl.u32 %v447, 7
    %v449 = vsub.s32 7, %v448
    %v450 = vrot.slane %v378, %v449
    %v451 = vlaneseq
    %v452 = vshrl.u32 %v451, 7
    %v453 = vsub.s32 0, %v452
    %v454 = vrot.slane %v379, %v453
    %v455 = vlaneseq
    %v456 = vshrl.u32 %v455, 7
    %v457 = vsub.s32 1, %v456
    %v458 = vrot.slane %v379, %v457
    %v459 = vlaneseq
    %v460 = vshrl.u32 %v459, 7
    %v461 = vsub.s32 2, %v460
    %v462 = vrot.slane %v379, %v461
    %v463 = vlaneseq
    %v464 = vshrl.u32 %v463, 7
    %v465 = vsub.s32 3, %v464
    %v466 = vrot.slane %v379, %v465
    %v467 = vlaneseq
    %v468 = vshrl.u32 %v467, 7
    %v469 = vsub.s32 4, %v468
    %v470 = vrot.slane %v379, %v469
    %v471 = vlaneseq
    %v472 = vshrl.u32 %v471, 7
    %v473 = vsub.s32 5, %v472
    %v474 = vrot.slane %v379, %v473
    %v475 = vlaneseq
    %v476 = vshrl.u32 %v475, 7
    %v477 = vsub.s32 6, %v476
    %v478 = vrot.slane %v379, %v477
    %v479 = vlaneseq
    %v480 = vshrl.u32 %v479, 7
    %v481 = vsub.s32 7, %v480
    %v482 = vrot.slane %v379, %v481
    %v483 = vlaneseq
    %v484 = vshrl.u32 %v483, 7
    %v485 = vsub.s32 0, %v484
    %v486 = vrot.slane %v380, %v485
    %v487 = vlaneseq
    %v488 = vshrl.u32 %v487, 7
    %v489 = vsub.s32 1, %v488
    %v490 = vrot.slane %v380, %v489
    %v491 = vlaneseq
    %v492 = vshrl.u32 %v491, 7
    %v493 = vsub.s32 2, %v492
    %v494 = vrot.slane %v380, %v493
    %v495 = vlaneseq
    %v496 = vshrl.u32 %v495, 7
    %v497 = vsub.s32 3, %v496
    %v498 = vrot.slane %v380, %v497
    %v499 = vlaneseq
    %v500 = vshrl.u32 %v499, 7
    %v501 = vsub.s32 4, %v500
    %v502 = vrot.slane %v380, %v501
    %v503 = vlaneseq
    %v504 = vshrl.u32 %v503, 7
    %v505 = vsub.s32 5, %v504
    %v506 = vrot.slane %v380, %v505
    %v507 = vlaneseq
    %v508 = vshrl.u32 %v507, 7
    %v509 = vsub.s32 6, %v508
    %v510 = vrot.slane %v380, %v509
    %v511 = vlaneseq
    %v512 = vshrl.u32 %v511, 7
    %v513 = vsub.s32 7, %v512
    %v514 = vrot.slane %v380, %v513
    %v515 = vlaneseq
    %v516 = vshrl.u32 %v515, 7
    %v517 = vsub.s32 0, %v516
    %v518 = vrot.slane %v381, %v517
    %v824 = vunpack.c.l.b16 %v105
    %v825 = vunpack.c.h.b16 %v105
    %v826 = vunpack.c.l.b16 %v106
    %v827 = vunpack.c.h.b16 %v106
    %v828 = vunpack.c.l.b16 %v107
    %v829 = vunpack.c.h.b16 %v107
    %v830 = vunpack.c.l.b16 %v108
    %v831 = vunpack.c.h.b16 %v108
    %v832 = vunpack.c.l.b16 %v109
    %v833 = vunpack.c.h.b16 %v109
    %v834 = vunpack.c.l.b16 %v110
    %v835 = vunpack.c.h.b16 %v110
    %v836 = vunpack.c.l.b16 %v111
    %v837 = vunpack.c.h.b16 %v111
    %v838 = vunpack.c.l.b16 %v112
    %v839 = vunpack.c.h.b16 %v112
    %v840 = vunpack.c.l.b16 %v113
    %v841 = vunpack.c.h.b16 %v113
    %v842 = vunpack.c.l.b16 %v114
    %v843 = vunpack.c.h.b16 %v114
    %v844 = vunpack.c.l.b16 %v115
    %v845 = vunpack.c.h.b16 %v115
    %v846 = vunpack.c.l.b16 %v116
    %v847 = vunpack.c.h.b16 %v116
    %v848 = vunpack.c.l.b16 %v117
    %v849 = vunpack.c.h.b16 %v117
    %v850 = vunpack.c.l.b16 %v118
    %v851 = vunpack.c.h.b16 %v118
    %v852 = vunpack.c.l.b16 %v119
    %v853 = vunpack.c.h.b16 %v119
    %v854 = vunpack.c.l.b16 %v120
    %v855 = vunpack.c.h.b16 %v120
    %v856 = vunpack.c.l.b16 %v121
    %v857 = vunpack.c.l.b16 %v122
    %v858 = vunpack.c.h.b16 %v122
    %v859 = vunpack.c.l.b16 %v123
    %v860 = vunpack.c.h.b16 %v123
    %v861 = vunpack.c.l.b16 %v124
    %v862 = vunpack.c.h.b16 %v124
    %v863 = vunpack.c.l.b16 %v125
    %v864 = vunpack.c.h.b16 %v125
    %v865 = vunpack.c.l.b16 %v126
    %v866 = vunpack.c.h.b16 %v126
    %v867 = vunpack.c.l.b16 %v127
    %v868 = vunpack.c.h.b16 %v127
    %v869 = vunpack.c.l.b16 %v128
    %v870 = vunpack.c.h.b16 %v128
    %v871 = vunpack.c.l.b16 %v129
    %v872 = vunpack.c.h.b16 %v129
    %v873 = vunpack.c.l.b16 %v130
    %v874 = vunpack.c.h.b16 %v130
    %v875 = vunpack.c.l.b16 %v131
    %v876 = vunpack.c.h.b16 %v131
    %v877 = vunpack.c.l.b16 %v132
    %v878 = vunpack.c.h.b16 %v132
    %v879 = vunpack.c.l.b16 %v133
    %v880 = vunpack.c.h.b16 %v133
    %v881 = vunpack.c.l.b16 %v134
    %v882 = vunpack.c.h.b16 %v134
    %v883 = vunpack.c.l.b16 %v135
    %v884 = vunpack.c.h.b16 %v135
    %v885 = vunpack.c.l.b16 %v136
    %v886 = vunpack.c.h.b16 %v136
    %v887 = vunpack.c.l.b16 %v137
    %v888 = vunpack.c.h.b16 %v137
    %v889 = vunpack.c.l.b16 %v138
    %v890 = vunpack.c.l.b16 %v139
    %v891 = vunpack.c.h.b16 %v139
    %v892 = vunpack.c.l.b16 %v140
    %v893 = vunpack.c.h.b16 %v140
    %v894 = vunpack.c.l.b16 %v141
    %v895 = vunpack.c.h.b16 %v141
    %v896 = vunpack.c.l.b16 %v142
    %v897 = vunpack.c.h.b16 %v142
    %v898 = vunpack.c.l.b16 %v143
    %v899 = vunpack.c.h.b16 %v143
    %v900 = vunpack.c.l.b16 %v144
    %v901 = vunpack.c.h.b16 %v144
    %v902 = vunpack.c.l.b16 %v145
    %v903 = vunpack.c.h.b16 %v145
    %v904 = vunpack.c.l.b16 %v146
    %v905 = vunpack.c.h.b16 %v146
    %v906 = vunpack.c.l.b16 %v147
    %v907 = vunpack.c.h.b16 %v147
    %v908 = vunpack.c.l.b16 %v148
    %v909 = vunpack.c.h.b16 %v148
    %v910 = vunpack.c.l.b16 %v149
    %v911 = vunpack.c.h.b16 %v149
    %v912 = vunpack.c.l.b16 %v150
    %v913 = vunpack.c.h.b16 %v150
    %v914 = vunpack.c.l.b16 %v151
    %v915 = vunpack.c.h.b16 %v151
    %v916 = vunpack.c.l.b16 %v152
    %v917 = vunpack.c.h.b16 %v152
    %v918 = vunpack.c.l.b16 %v153
    %v919 = vunpack.c.h.b16 %v153
    %v920 = vunpack.c.l.b16 %v154
    %v921 = vunpack.c.h.b16 %v154
    %v922 = vunpack.c.l.b16 %v155
    %v923 = vunpack.c.l.b16 %v156
    %v924 = vunpack.c.h.b16 %v156
    %v925 = vunpack.c.l.b16 %v157
    %v926 = vunpack.c.h.b16 %v157
    %v927 = vunpack.c.l.b16 %v158
    %v928 = vunpack.c.h.b16 %v158
    %v929 = vunpack.c.l.b16 %v159
    %v930 = vunpack.c.h.b16 %v159
    %v931 = vunpack.c.l.b16 %v160
    %v932 = vunpack.c.h.b16 %v160
    %v933 = vunpack.c.l.b16 %v161
    %v934 = vunpack.c.h.b16 %v161
    %v935 = vunpack.c.l.b16 %v162
    %v936 = vunpack.c.h.b16 %v162
    %v937 = vunpack.c.l.b16 %v163
    %v938 = vunpack.c.h.b16 %v163
    %v939 = vunpack.c.l.b16 %v164
    %v940 = vunpack.c.h.b16 %v164
    %v941 = vunpack.c.l.b16 %v165
    %v942 = vunpack.c.h.b16 %v165
    %v943 = vunpack.c.l.b16 %v166
    %v944 = vunpack.c.h.b16 %v166
    %v945 = vunpack.c.l.b16 %v167
    %v946 = vunpack.c.h.b16 %v167
    %v947 = vunpack.c.l.b16 %v168
    %v948 = vunpack.c.h.b16 %v168
    %v949 = vunpack.c.l.b16 %v169
    %v950 = vunpack.c.h.b16 %v169
    %v951 = vunpack.c.l.b16 %v170
    %v952 = vunpack.c.h.b16 %v170
    %v953 = vunpack.c.l.b16 %v171
    %v954 = vunpack.c.h.b16 %v171
    %v955 = vunpack.c.l.b16 %v172
    %v956 = vunpack.c.l.b16 %v173
    %v957 = vunpack.c.h.b16 %v173
    %v958 = vunpack.c.l.b16 %v174
    %v959 = vunpack.c.h.b16 %v174
    %v960 = vunpack.c.l.b16 %v175
    %v961 = vunpack.c.h.b16 %v175
    %v962 = vunpack.c.l.b16 %v176
    %v963 = vunpack.c.h.b16 %v176
    %v964 = vunpack.c.l.b16 %v177
    %v965 = vunpack.c.h.b16 %v177
    %v966 = vunpack.c.l.b16 %v178
    %v967 = vunpack.c.h.b16 %v178
    %v968 = vunpack.c.l.b16 %v179
    %v969 = vunpack.c.h.b16 %v179
    %v970 = vunpack.c.l.b16 %v180
    %v971 = vunpack.c.h.b16 %v180
    %v972 = vunpack.c.l.b16 %v181
    %v973 = vunpack.c.h.b16 %v181
    %v974 = vunpack.c.l.b16 %v182
    %v975 = vunpack.c.h.b16 %v182
    %v976 = vunpack.c.l.b16 %v183
    %v977 = vunpack.c.h.b16 %v183
    %v978 = vunpack.c.l.b16 %v184
    %v979 = vunpack.c.h.b16 %v184
    %v980 = vunpack.c.l.b16 %v185
    %v981 = vunpack.c.h.b16 %v185
    %v982 = vunpack.c.l.b16 %v186
    %v983 = vunpack.c.h.b16 %v186
    %v984 = vunpack.c.l.b16 %v187
    %v985 = vunpack.c.h.b16 %v187
    %v986 = vunpack.c.l.b16 %v188
    %v987 = vunpack.c.h.b16 %v188
    %v988 = vunpack.c.l.b16 %v189
    %v989 = vunpack.c.l.b16 %v190
    %v990 = vunpack.c.h.b16 %v190
    %v991 = vunpack.c.l.b16 %v191
    %v992 = vunpack.c.h.b16 %v191
    %v993 = vunpack.c.l.b16 %v192
    %v994 = vunpack.c.h.b16 %v192
    %v995 = vunpack.c.l.b16 %v193
    %v996 = vunpack.c.h.b16 %v193
    %v997 = vunpack.c.l.b16 %v194
    %v998 = vunpack.c.h.b16 %v194
    %v999 = vunpack.c.l.b16 %v195
    %v1000 = vunpack.c.h.b16 %v195
    %v1001 = vunpack.c.l.b16 %v196
    %v1002 = vunpack.c.h.b16 %v196
    %v1003 = vunpack.c.l.b16 %v197
    %v1004 = vunpack.c.h.b16 %v197
    %v1005 = vunpack.c.l.b16 %v198
    %v1006 = vunpack.c.h.b16 %v198
    %v1007 = vunpack.c.l.b16 %v199
    %v1008 = vunpack.c.h.b16 %v199
    %v1009 = vunpack.c.l.b16 %v200
    %v1010 = vunpack.c.h.b16 %v200
    %v1011 = vunpack.c.l.b16 %v201
    %v1012 = vunpack.c.h.b16 %v201
    %v1013 = vunpack.c.l.b16 %v202
    %v1014 = vunpack.c.h.b16 %v202
    %v1015 = vunpack.c.l.b16 %v203
    %v1016 = vunpack.c.h.b16 %v203
    %v1017 = vunpack.c.l.b16 %v204
    %v1018 = vunpack.c.h.b16 %v204
    %v1019 = vunpack.c.l.b16 %v205
    %v1020 = vunpack.c.h.b16 %v205
    %v1021 = vunpack.c.l.b16 %v206
    %v1022 = vunpack.c.l.b16 %v207
    %v1023 = vunpack.c.h.b16 %v207
    %v1024 = vunpack.c.l.b16 %v208
    %v1025 = vunpack.c.h.b16 %v208
    %v1026 = vunpack.c.l.b16 %v209
    %v1027 = vunpack.c.h.b16 %v209
    %v1028 = vunpack.c.l.b16 %v210
    %v1029 = vunpack.c.h.b16 %v210
    %v1030 = vunpack.c.l.b16 %v211
    %v1031 = vunpack.c.h.b16 %v211
    %v1032 = vunpack.c.l.b16 %v212
    %v1033 = vunpack.c.h.b16 %v212
    %v1034 = vunpack.c.l.b16 %v213
    %v1035 = vunpack.c.h.b16 %v213
    %v1036 = vunpack.c.l.b16 %v214
    %v1037 = vunpack.c.h.b16 %v214
    %v1038 = vunpack.c.l.b16 %v215
    %v1039 = vunpack.c.h.b16 %v215
    %v1040 = vunpack.c.l.b16 %v216
    %v1041 = vunpack.c.h.b16 %v216
    %v1042 = vunpack.c.l.b16 %v217
    %v1043 = vunpack.c.h.b16 %v217
    %v1044 = vunpack.c.l.b16 %v218
    %v1045 = vunpack.c.h.b16 %v218
    %v1046 = vunpack.c.l.b16 %v219
    %v1047 = vunpack.c.h.b16 %v219
    %v1048 = vunpack.c.l.b16 %v220
    %v1049 = vunpack.c.h.b16 %v220
    %v1050 = vunpack.c.l.b16 %v221
    %v1051 = vunpack.c.h.b16 %v221
    %v1052 = vunpack.c.l.b16 %v222
    %v1053 = vunpack.c.h.b16 %v222
    %v1054 = vunpack.c.l.b16 %v223
    %v1055 = vunpack.c.l.b16 %v224
    %v1056 = vunpack.c.h.b16 %v224
    %v1057 = vunpack.c.l.b16 %v225
    %v1058 = vunpack.c.h.b16 %v225
    %v1059 = vunpack.c.l.b16 %v226
    %v1060 = vunpack.c.h.b16 %v226
    %v1061 = vunpack.c.l.b16 %v227
    %v1062 = vunpack.c.h.b16 %v227
    %v1063 = vunpack.c.l.b16 %v228
    %v1064 = vunpack.c.h.b16 %v228
    %v1065 = vunpack.c.l.b16 %v229
    %v1066 = vunpack.c.h.b16 %v229
    %v1067 = vunpack.c.l.b16 %v230
    %v1068 = vunpack.c.h.b16 %v230
    %v1069 = vunpack.c.l.b16 %v231
    %v1070 = vunpack.c.h.b16 %v231
    %v1071 = vunpack.c.l.b16 %v232
    %v1072 = vunpack.c.h.b16 %v232
    %v1073 = vunpack.c.l.b16 %v233
    %v1074 = vunpack.c.h.b16 %v233
    %v1075 = vunpack.c.l.b16 %v234
    %v1076 = vunpack.c.h.b16 %v234
    %v1077 = vunpack.c.l.b16 %v235
    %v1078 = vunpack.c.h.b16 %v235
    %v1079 = vunpack.c.l.b16 %v236
    %v1080 = vunpack.c.h.b16 %v236
    %v1081 = vunpack.c.l.b16 %v237
    %v1082 = vunpack.c.h.b16 %v237
    %v1083 = vunpack.c.l.b16 %v238
    %v1084 = vunpack.c.h.b16 %v238
    %v1085 = vunpack.c.l.b16 %v239
    %v1086 = vunpack.c.h.b16 %v239
    %v1087 = vunpack.c.l.b16 %v240
    %v1088 = vunpack.c.l.b16 %v241
    %v1089 = vunpack.c.h.b16 %v241
    %v1090 = vunpack.c.l.b16 %v242
    %v1091 = vunpack.c.h.b16 %v242
    %v1092 = vunpack.c.l.b16 %v243
    %v1093 = vunpack.c.h.b16 %v243
    %v1094 = vunpack.c.l.b16 %v244
    %v1095 = vunpack.c.h.b16 %v244
    %v1096 = vunpack.c.l.b16 %v245
    %v1097 = vunpack.c.h.b16 %v245
    %v1098 = vunpack.c.l.b16 %v246
    %v1099 = vunpack.c.h.b16 %v246
    %v1100 = vunpack.c.l.b16 %v247
    %v1101 = vunpack.c.h.b16 %v247
    %v1102 = vunpack.c.l.b16 %v248
    %v1103 = vunpack.c.h.b16 %v248
    %v1104 = vunpack.c.l.b16 %v249
    %v1105 = vunpack.c.h.b16 %v249
    %v1106 = vunpack.c.l.b16 %v250
    %v1107 = vunpack.c.h.b16 %v250
    %v1108 = vunpack.c.l.b16 %v251
    %v1109 = vunpack.c.h.b16 %v251
    %v1110 = vunpack.c.l.b16 %v252
    %v1111 = vunpack.c.h.b16 %v252
    %v1112 = vunpack.c.l.b16 %v253
    %v1113 = vunpack.c.h.b16 %v253
    %v1114 = vunpack.c.l.b16 %v254
    %v1115 = vunpack.c.h.b16 %v254
    %v1116 = vunpack.c.l.b16 %v255
    %v1117 = vunpack.c.h.b16 %v255
    %v1118 = vunpack.c.l.b16 %v256
    %v1119 = vunpack.c.h.b16 %v256
    %v1120 = vunpack.c.l.b16 %v257
    %v1121 = vunpack.c.l.b16 %v258
    %v1122 = vunpack.c.h.b16 %v258
    %v1123 = vunpack.c.l.b16 %v259
    %v1124 = vunpack.c.h.b16 %v259
    %v1125 = vunpack.c.l.b16 %v260
    %v1126 = vunpack.c.h.b16 %v260
    %v1127 = vunpack.c.l.b16 %v261
    %v1128 = vunpack.c.h.b16 %v261
    %v1129 = vunpack.c.l.b16 %v262
    %v1130 = vunpack.c.h.b16 %v262
    %v1131 = vunpack.c.l.b16 %v263
    %v1132 = vunpack.c.h.b16 %v263
    %v1133 = vunpack.c.l.b16 %v264
    %v1134 = vunpack.c.h.b16 %v264
    %v1135 = vunpack.c.l.b16 %v265
    %v1136 = vunpack.c.h.b16 %v265
    %v1137 = vunpack.c.l.b16 %v266
    %v1138 = vunpack.c.h.b16 %v266
    %v1139 = vunpack.c.l.b16 %v267
    %v1140 = vunpack.c.h.b16 %v267
    %v1141 = vunpack.c.l.b16 %v268
    %v1142 = vunpack.c.h.b16 %v268
    %v1143 = vunpack.c.l.b16 %v269
    %v1144 = vunpack.c.h.b16 %v269
    %v1145 = vunpack.c.l.b16 %v270
    %v1146 = vunpack.c.h.b16 %v270
    %v1147 = vunpack.c.l.b16 %v271
    %v1148 = vunpack.c.h.b16 %v271
    %v1149 = vunpack.c.l.b16 %v272
    %v1150 = vunpack.c.h.b16 %v272
    %v1151 = vunpack.c.l.b16 %v273
    %v1152 = vunpack.c.h.b16 %v273
    %v1153 = vunpack.c.l.b16 %v274
    %v1154 = vunpack.c.l.b16 %v275
    %v1155 = vunpack.c.h.b16 %v275
    %v1156 = vunpack.c.l.b16 %v276
    %v1157 = vunpack.c.h.b16 %v276
    %v1158 = vunpack.c.l.b16 %v277
    %v1159 = vunpack.c.h.b16 %v277
    %v1160 = vunpack.c.l.b16 %v278
    %v1161 = vunpack.c.h.b16 %v278
    %v1162 = vunpack.c.l.b16 %v279
    %v1163 = vunpack.c.h.b16 %v279
    %v1164 = vunpack.c.l.b16 %v280
    %v1165 = vunpack.c.h.b16 %v280
    %v1166 = vunpack.c.l.b16 %v281
    %v1167 = vunpack.c.h.b16 %v281
    %v1168 = vunpack.c.l.b16 %v282
    %v1169 = vunpack.c.h.b16 %v282
    %v1170 = vunpack.c.l.b16 %v283
    %v1171 = vunpack.c.h.b16 %v283
    %v1172 = vunpack.c.l.b16 %v284
    %v1173 = vunpack.c.h.b16 %v284
    %v1174 = vunpack.c.l.b16 %v285
    %v1175 = vunpack.c.h.b16 %v285
    %v1176 = vunpack.c.l.b16 %v286
    %v1177 = vunpack.c.h.b16 %v286
    %v1178 = vunpack.c.l.b16 %v287
    %v1179 = vunpack.c.h.b16 %v287
    %v1180 = vunpack.c.l.b16 %v288
    %v1181 = vunpack.c.h.b16 %v288
    %v1182 = vunpack.c.l.b16 %v289
    %v1183 = vunpack.c.h.b16 %v289
    %v1184 = vunpack.c.l.b16 %v290
    %v1185 = vunpack.c.h.b16 %v290
    %v1186 = vunpack.c.l.b16 %v291
    %v1187 = vunpack.c.l.b16 %v292
    %v1188 = vunpack.c.h.b16 %v292
    %v1189 = vunpack.c.l.b16 %v293
    %v1190 = vunpack.c.h.b16 %v293
    %v1191 = vunpack.c.l.b16 %v294
    %v1192 = vunpack.c.h.b16 %v294
    %v1193 = vunpack.c.l.b16 %v295
    %v1194 = vunpack.c.h.b16 %v295
    %v1195 = vunpack.c.l.b16 %v296
    %v1196 = vunpack.c.h.b16 %v296
    %v1197 = vunpack.c.l.b16 %v297
    %v1198 = vunpack.c.h.b16 %v297
    %v1199 = vunpack.c.l.b16 %v298
    %v1200 = vunpack.c.h.b16 %v298
    %v1201 = vunpack.c.l.b16 %v299
    %v1202 = vunpack.c.h.b16 %v299
    %v1203 = vunpack.c.l.b16 %v300
    %v1204 = vunpack.c.h.b16 %v300
    %v1205 = vunpack.c.l.b16 %v301
    %v1206 = vunpack.c.h.b16 %v301
    %v1207 = vunpack.c.l.b16 %v302
    %v1208 = vunpack.c.h.b16 %v302
    %v1209 = vunpack.c.l.b16 %v303
    %v1210 = vunpack.c.h.b16 %v303
    %v1211 = vunpack.c.l.b16 %v304
    %v1212 = vunpack.c.h.b16 %v304
    %v1213 = vunpack.c.l.b16 %v305
    %v1214 = vunpack.c.h.b16 %v305
    %v1215 = vunpack.c.l.b16 %v306
    %v1216 = vunpack.c.h.b16 %v306
    %v1217 = vunpack.c.l.b16 %v307
    %v1218 = vunpack.c.h.b16 %v307
    %v1219 = vunpack.c.l.b16 %v308
    %v1220 = vunpack.c.l.b16 %v309
    %v1221 = vunpack.c.h.b16 %v309
    %v1222 = vunpack.c.l.b16 %v310
    %v1223 = vunpack.c.h.b16 %v310
    %v1224 = vunpack.c.l.b16 %v311
    %v1225 = vunpack.c.h.b16 %v311
    %v1226 = vunpack.c.l.b16 %v312
    %v1227 = vunpack.c.h.b16 %v312
    %v1228 = vunpack.c.l.b16 %v313
    %v1229 = vunpack.c.h.b16 %v313
    %v1230 = vunpack.c.l.b16 %v314
    %v1231 = vunpack.c.h.b16 %v314
    %v1232 = vunpack.c.l.b16 %v315
    %v1233 = vunpack.c.h.b16 %v315
    %v1234 = vunpack.c.l.b16 %v316
    %v1235 = vunpack.c.h.b16 %v316
    %v1236 = vunpack.c.l.b16 %v317
    %v1237 = vunpack.c.h.b16 %v317
    %v1238 = vunpack.c.l.b16 %v318
    %v1239 = vunpack.c.h.b16 %v318
    %v1240 = vunpack.c.l.b16 %v319
    %v1241 = vunpack.c.h.b16 %v319
    %v1242 = vunpack.c.l.b16 %v320
    %v1243 = vunpack.c.h.b16 %v320
    %v1244 = vunpack.c.l.b16 %v321
    %v1245 = vunpack.c.h.b16 %v321
    %v1246 = vunpack.c.l.b16 %v322
    %v1247 = vunpack.c.h.b16 %v322
    %v1248 = vunpack.c.l.b16 %v323
    %v1249 = vunpack.c.h.b16 %v323
    %v1250 = vunpack.c.l.b16 %v324
    %v1251 = vunpack.c.h.b16 %v324
    %v1252 = vunpack.c.l.b16 %v325
    %v1253 = vunpack.c.l.b16 %v326
    %v1254 = vunpack.c.h.b16 %v326
    %v1255 = vunpack.c.l.b16 %v327
    %v1256 = vunpack.c.h.b16 %v327
    %v1257 = vunpack.c.l.b16 %v328
    %v1258 = vunpack.c.h.b16 %v328
    %v1259 = vunpack.c.l.b16 %v329
    %v1260 = vunpack.c.h.b16 %v329
    %v1261 = vunpack.c.l.b16 %v330
    %v1262 = vunpack.c.h.b16 %v330
    %v1263 = vunpack.c.l.b16 %v331
    %v1264 = vunpack.c.h.b16 %v331
    %v1265 = vunpack.c.l.b16 %v332
    %v1266 = vunpack.c.h.b16 %v332
    %v1267 = vunpack.c.l.b16 %v333
    %v1268 = vunpack.c.h.b16 %v333
    %v1269 = vunpack.c.l.b16 %v334
    %v1270 = vunpack.c.h.b16 %v334
    %v1271 = vunpack.c.l.b16 %v335
    %v1272 = vunpack.c.h.b16 %v335
    %v1273 = vunpack.c.l.b16 %v336
    %v1274 = vunpack.c.h.b16 %v336
    %v1275 = vunpack.c.l.b16 %v337
    %v1276 = vunpack.c.h.b16 %v337
    %v1277 = vunpack.c.l.b16 %v338
    %v1278 = vunpack.c.h.b16 %v338
    %v1279 = vunpack.c.l.b16 %v339
    %v1280 = vunpack.c.h.b16 %v339
    %v1281 = vunpack.c.l.b16 %v340
    %v1282 = vunpack.c.h.b16 %v340
    %v1283 = vunpack.c.l.b16 %v341
    %v1284 = vunpack.c.h.b16 %v341
    %v1285 = vunpack.c.l.b16 %v342
    %v1286 = vunpack.c.l.b16 %v343
    %v1287 = vunpack.c.h.b16 %v343
    %v1288 = vunpack.c.l.b16 %v344
    %v1289 = vunpack.c.h.b16 %v344
    %v1290 = vunpack.c.l.b16 %v345
    %v1291 = vunpack.c.h.b16 %v345
    %v1292 = vunpack.c.l.b16 %v346
    %v1293 = vunpack.c.h.b16 %v346
    %v1294 = vunpack.c.l.b16 %v347
    %v1295 = vunpack.c.h.b16 %v347
    %v1296 = vunpack.c.l.b16 %v348
    %v1297 = vunpack.c.h.b16 %v348
    %v1298 = vunpack.c.l.b16 %v349
    %v1299 = vunpack.c.h.b16 %v349
    %v1300 = vunpack.c.l.b16 %v350
    %v1301 = vunpack.c.h.b16 %v350
    %v1302 = vunpack.c.l.b16 %v351
    %v1303 = vunpack.c.h.b16 %v351
    %v1304 = vunpack.c.l.b16 %v352
    %v1305 = vunpack.c.h.b16 %v352
    %v1306 = vunpack.c.l.b16 %v353
    %v1307 = vunpack.c.h.b16 %v353
    %v1308 = vunpack.c.l.b16 %v354
    %v1309 = vunpack.c.h.b16 %v354
    %v1310 = vunpack.c.l.b16 %v355
    %v1311 = vunpack.c.h.b16 %v355
    %v1312 = vunpack.c.l.b16 %v356
    %v1313 = vunpack.c.h.b16 %v356
    %v1314 = vunpack.c.l.b16 %v357
    %v1315 = vunpack.c.h.b16 %v357
    %v1316 = vunpack.c.l.b16 %v358
    %v1317 = vunpack.c.h.b16 %v358
    %v1318 = vunpack.c.l.b16 %v359
    %v1319 = vunpack.c.l.b16 %v360
    %v1320 = vunpack.c.h.b16 %v360
    %v1321 = vunpack.c.l.b16 %v361
    %v1322 = vunpack.c.h.b16 %v361
    %v1323 = vunpack.c.l.b16 %v362
    %v1324 = vunpack.c.h.b16 %v362
    %v1325 = vunpack.c.l.b16 %v363
    %v1326 = vunpack.c.h.b16 %v363
    %v1327 = vunpack.c.l.b16 %v364
    %v1328 = vunpack.c.h.b16 %v364
    %v1329 = vunpack.c.l.b16 %v365
    %v1330 = vunpack.c.h.b16 %v365
    %v1331 = vunpack.c.l.b16 %v366
    %v1332 = vunpack.c.h.b16 %v366
    %v1333 = vunpack.c.l.b16 %v367
    %v1334 = vunpack.c.h.b16 %v367
    %v1335 = vunpack.c.l.b16 %v368
    %v1336 = vunpack.c.h.b16 %v368
    %v1337 = vunpack.c.l.b16 %v369
    %v1338 = vunpack.c.h.b16 %v369
    %v1339 = vunpack.c.l.b16 %v370
    %v1340 = vunpack.c.h.b16 %v370
    %v1341 = vunpack.c.l.b16 %v371
    %v1342 = vunpack.c.h.b16 %v371
    %v1343 = vunpack.c.l.b16 %v372
    %v1344 = vunpack.c.h.b16 %v372
    %v1345 = vunpack.c.l.b16 %v373
    %v1346 = vunpack.c.h.b16 %v373
    %v1347 = vunpack.c.l.b16 %v374
    %v1348 = vunpack.c.h.b16 %v374
    %v1349 = vunpack.c.l.b16 %v375
    %v1350 = vunpack.c.h.b16 %v375
    %v1351 = vunpack.c.l.b16 %v376
    %v1352 = vpack.c.b16 %v857, %v824
    %v1353 = vpack.c.b16 %v858, %v825
    %v1354 = vpack.c.b16 %v859, %v826
    %v1355 = vpack.c.b16 %v860, %v827
    %v1356 = vpack.c.b16 %v861, %v828
    %v1357 = vpack.c.b16 %v862, %v829
    %v1358 = vpack.c.b16 %v863, %v830
    %v1359 = vpack.c.b16 %v864, %v831
    %v1360 = vpack.c.b16 %v865, %v832
    %v1361 = vpack.c.b16 %v866, %v833
    %v1362 = vpack.c.b16 %v867, %v834
    %v1363 = vpack.c.b16 %v868, %v835
    %v1364 = vpack.c.b16 %v869, %v836
    %v1365 = vpack.c.b16 %v870, %v837
    %v1366 = vpack.c.b16 %v871, %v838
    %v1367 = vpack.c.b16 %v872, %v839
    %v1368 = vpack.c.b16 %v873, %v840
    %v1369 = vpack.c.b16 %v874, %v841
    %v1370 = vpack.c.b16 %v875, %v842
    %v1371 = vpack.c.b16 %v876, %v843
    %v1372 = vpack.c.b16 %v877, %v844
    %v1373 = vpack.c.b16 %v878, %v845
    %v1374 = vpack.c.b16 %v879, %v846
    %v1375 = vpack.c.b16 %v880, %v847
    %v1376 = vpack.c.b16 %v881, %v848
    %v1377 = vpack.c.b16 %v882, %v849
    %v1378 = vpack.c.b16 %v883, %v850
    %v1379 = vpack.c.b16 %v884, %v851
    %v1380 = vpack.c.b16 %v885, %v852
    %v1381 = vpack.c.b16 %v886, %v853
    %v1382 = vpack.c.b16 %v887, %v854
    %v1383 = vpack.c.b16 %v888, %v855
    %v1384 = vpack.c.b16 %v889, %v856
    %v1385 = vpack.c.b16 %v923, %v890
    %v1386 = vpack.c.b16 %v924, %v891
    %v1387 = vpack.c.b16 %v925, %v892
    %v1388 = vpack.c.b16 %v926, %v893
    %v1389 = vpack.c.b16 %v927, %v894
    %v1390 = vpack.c.b16 %v928, %v895
    %v1391 = vpack.c.b16 %v929, %v896
    %v1392 = vpack.c.b16 %v930, %v897
    %v1393 = vpack.c.b16 %v931, %v898
    %v1394 = vpack.c.b16 %v932, %v899
    %v1395 = vpack.c.b16 %v933, %v900
    %v1396 = vpack.c.b16 %v934, %v901
    %v1397 = vpack.c.b16 %v935, %v902
    %v1398 = vpack.c.b16 %v936, %v903
    %v1399 = vpack.c.b16 %v937, %v904
    %v1400 = vpack.c.b16 %v938, %v905
    %v1401 = vpack.c.b16 %v939, %v906
    %v1402 = vpack.c.b16 %v940, %v907
    %v1403 = vpack.c.b16 %v941, %v908
    %v1404 = vpack.c.b16 %v942, %v909
    %v1405 = vpack.c.b16 %v943, %v910
    %v1406 = vpack.c.b16 %v944, %v911
    %v1407 = vpack.c.b16 %v945, %v912
    %v1408 = vpack.c.b16 %v946, %v913
    %v1409 = vpack.c.b16 %v947, %v914
    %v1410 = vpack.c.b16 %v948, %v915
    %v1411 = vpack.c.b16 %v949, %v916
    %v1412 = vpack.c.b16 %v950, %v917
    %v1413 = vpack.c.b16 %v951, %v918
    %v1414 = vpack.c.b16 %v952, %v919
    %v1415 = vpack.c.b16 %v953, %v920
    %v1416 = vpack.c.b16 %v954, %v921
    %v1417 = vpack.c.b16 %v955, %v922
    %v1418 = vpack.c.b16 %v989, %v956
    %v1419 = vpack.c.b16 %v990, %v957
    %v1420 = vpack.c.b16 %v991, %v958
    %v1421 = vpack.c.b16 %v992, %v959
    %v1422 = vpack.c.b16 %v993, %v960
    %v1423 = vpack.c.b16 %v994, %v961
    %v1424 = vpack.c.b16 %v995, %v962
    %v1425 = vpack.c.b16 %v996, %v963
    %v1426 = vpack.c.b16 %v997, %v964
    %v1427 = vpack.c.b16 %v998, %v965
    %v1428 = vpack.c.b16 %v999, %v966
    %v1429 = vpack.c.b16 %v1000, %v967
    %v1430 = vpack.c.b16 %v1001, %v968
    %v1431 = vpack.c.b16 %v1002, %v969
    %v1432 = vpack.c.b16 %v1003, %v970
    %v1433 = vpack.c.b16 %v1004, %v971
    %v1434 = vpack.c.b16 %v1005, %v972
    %v1435 = vpack.c.b16 %v1006, %v973
    %v1436 = vpack.c.b16 %v1007, %v974
    %v1437 = vpack.c.b16 %v1008, %v975
    %v1438 = vpack.c.b16 %v1009, %v976
    %v1439 = vpack.c.b16 %v1010, %v977
    %v1440 = vpack.c.b16 %v1011, %v978
    %v1441 = vpack.c.b16 %v1012, %v979
    %v1442 = vpack.c.b16 %v1013, %v980
    %v1443 = vpack.c.b16 %v1014, %v981
    %v1444 = vpack.c.b16 %v1015, %v982
    %v1445 = vpack.c.b16 %v1016, %v983
    %v1446 = vpack.c.b16 %v1017, %v984
    %v1447 = vpack.c.b16 %v1018, %v985
    %v1448 = vpack.c.b16 %v1019, %v986
    %v1449 = vpack.c.b16 %v1020, %v987
    %v1450 = vpack.c.b16 %v1021, %v988
    %v1451 = vpack.c.b16 %v1055, %v1022
    %v1452 = vpack.c.b16 %v1056, %v1023
    %v1453 = vpack.c.b16 %v1057, %v1024
    %v1454 = vpack.c.b16 %v1058, %v1025
    %v1455 = vpack.c.b16 %v1059, %v1026
    %v1456 = vpack.c.b16 %v1060, %v1027
    %v1457 = vpack.c.b16 %v1061, %v1028
    %v1458 = vpack.c.b16 %v1062, %v1029
    %v1459 = vpack.c.b16 %v1063, %v1030
    %v1460 = vpack.c.b16 %v1064, %v1031
    %v1461 = vpack.c.b16 %v1065, %v1032
    %v1462 = vpack.c.b16 %v1066, %v1033
    %v1463 = vpack.c.b16 %v1067, %v1034
    %v1464 = vpack.c.b16 %v1068, %v1035
    %v1465 = vpack.c.b16 %v1069, %v1036
    %v1466 = vpack.c.b16 %v1070, %v1037
    %v1467 = vpack.c.b16 %v1071, %v1038
    %v1468 = vpack.c.b16 %v1072, %v1039
    %v1469 = vpack.c.b16 %v1073, %v1040
    %v1470 = vpack.c.b16 %v1074, %v1041
    %v1471 = vpack.c.b16 %v1075, %v1042
    %v1472 = vpack.c.b16 %v1076, %v1043
    %v1473 = vpack.c.b16 %v1077, %v1044
    %v1474 = vpack.c.b16 %v1078, %v1045
    %v1475 = vpack.c.b16 %v1079, %v1046
    %v1476 = vpack.c.b16 %v1080, %v1047
    %v1477 = vpack.c.b16 %v1081, %v1048
    %v1478 = vpack.c.b16 %v1082, %v1049
    %v1479 = vpack.c.b16 %v1083, %v1050
    %v1480 = vpack.c.b16 %v1084, %v1051
    %v1481 = vpack.c.b16 %v1085, %v1052
    %v1482 = vpack.c.b16 %v1086, %v1053
    %v1483 = vpack.c.b16 %v1087, %v1054
    %v1484 = vpack.c.b16 %v1121, %v1088
    %v1485 = vpack.c.b16 %v1122, %v1089
    %v1486 = vpack.c.b16 %v1123, %v1090
    %v1487 = vpack.c.b16 %v1124, %v1091
    %v1488 = vpack.c.b16 %v1125, %v1092
    %v1489 = vpack.c.b16 %v1126, %v1093
    %v1490 = vpack.c.b16 %v1127, %v1094
    %v1491 = vpack.c.b16 %v1128, %v1095
    %v1492 = vpack.c.b16 %v1129, %v1096
    %v1493 = vpack.c.b16 %v1130, %v1097
    %v1494 = vpack.c.b16 %v1131, %v1098
    %v1495 = vpack.c.b16 %v1132, %v1099
    %v1496 = vpack.c.b16 %v1133, %v1100
    %v1497 = vpack.c.b16 %v1134, %v1101
    %v1498 = vpack.c.b16 %v1135, %v1102
    %v1499 = vpack.c.b16 %v1136, %v1103
    %v1500 = vpack.c.b16 %v1137, %v1104
    %v1501 = vpack.c.b16 %v1138, %v1105
    %v1502 = vpack.c.b16 %v1139, %v1106
    %v1503 = vpack.c.b16 %v1140, %v1107
    %v1504 = vpack.c.b16 %v1141, %v1108
    %v1505 = vpack.c.b16 %v1142, %v1109
    %v1506 = vpack.c.b16 %v1143, %v1110
    %v1507 = vpack.c.b16 %v1144, %v1111
    %v1508 = vpack.c.b16 %v1145, %v1112
    %v1509 = vpack.c.b16 %v1146, %v1113
    %v1510 = vpack.c.b16 %v1147, %v1114
    %v1511 = vpack.c.b16 %v1148, %v1115
    %v1512 = vpack.c.b16 %v1149, %v1116
    %v1513 = vpack.c.b16 %v1150, %v1117
    %v1514 = vpack.c.b16 %v1151, %v1118
    %v1515 = vpack.c.b16 %v1152, %v1119
    %v1516 = vpack.c.b16 %v1153, %v1120
    %v1517 = vpack.c.b16 %v1187, %v1154
    %v1518 = vpack.c.b16 %v1188, %v1155
    %v1519 = vpack.c.b16 %v1189, %v1156
    %v1520 = vpack.c.b16 %v1190, %v1157
    %v1521 = vpack.c.b16 %v1191, %v1158
    %v1522 = vpack.c.b16 %v1192, %v1159
    %v1523 = vpack.c.b16 %v1193, %v1160
    %v1524 = vpack.c.b16 %v1194, %v1161
    %v1525 = vpack.c.b16 %v1195, %v1162
    %v1526 = vpack.c.b16 %v1196, %v1163
    %v1527 = vpack.c.b16 %v1197, %v1164
    %v1528 = vpack.c.b16 %v1198, %v1165
    %v1529 = vpack.c.b16 %v1199, %v1166
    %v1530 = vpack.c.b16 %v1200, %v1167
    %v1531 = vpack.c.b16 %v1201, %v1168
    %v1532 = vpack.c.b16 %v1202, %v1169
    %v1533 = vpack.c.b16 %v1203, %v1170
    %v1534 = vpack.c.b16 %v1204, %v1171
    %v1535 = vpack.c.b16 %v1205, %v1172
    %v1536 = vpack.c.b16 %v1206, %v1173
    %v1537 = vpack.c.b16 %v1207, %v1174
    %v1538 = vpack.c.b16 %v1208, %v1175
    %v1539 = vpack.c.b16 %v1209, %v1176
    %v1540 = vpack.c.b16 %v1210, %v1177
    %v1541 = vpack.c.b16 %v1211, %v1178
    %v1542 = vpack.c.b16 %v1212, %v1179
    %v1543 = vpack.c.b16 %v1213, %v1180
    %v1544 = vpack.c.b16 %v1214, %v1181
    %v1545 = vpack.c.b16 %v1215, %v1182
    %v1546 = vpack.c.b16 %v1216, %v1183
    %v1547 = vpack.c.b16 %v1217, %v1184
    %v1548 = vpack.c.b16 %v1218, %v1185
    %v1549 = vpack.c.b16 %v1219, %v1186
    %v1550 = vpack.c.b16 %v1253, %v1220
    %v1551 = vpack.c.b16 %v1254, %v1221
    %v1552 = vpack.c.b16 %v1255, %v1222
    %v1553 = vpack.c.b16 %v1256, %v1223
    %v1554 = vpack.c.b16 %v1257, %v1224
    %v1555 = vpack.c.b16 %v1258, %v1225
    %v1556 = vpack.c.b16 %v1259, %v1226
    %v1557 = vpack.c.b16 %v1260, %v1227
    %v1558 = vpack.c.b16 %v1261, %v1228
    %v1559 = vpack.c.b16 %v1262, %v1229
    %v1560 = vpack.c.b16 %v1263, %v1230
    %v1561 = vpack.c.b16 %v1264, %v1231
    %v1562 = vpack.c.b16 %v1265, %v1232
    %v1563 = vpack.c.b16 %v1266, %v1233
    %v1564 = vpack.c.b16 %v1267, %v1234
    %v1565 = vpack.c.b16 %v1268, %v1235
    %v1566 = vpack.c.b16 %v1269, %v1236
    %v1567 = vpack.c.b16 %v1270, %v1237
    %v1568 = vpack.c.b16 %v1271, %v1238
    %v1569 = vpack.c.b16 %v1272, %v1239
    %v1570 = vpack.c.b16 %v1273, %v1240
    %v1571 = vpack.c.b16 %v1274, %v1241
    %v1572 = vpack.c.b16 %v1275, %v1242
    %v1573 = vpack.c.b16 %v1276, %v1243
    %v1574 = vpack.c.b16 %v1277, %v1244
    %v1575 = vpack.c.b16 %v1278, %v1245
    %v1576 = vpack.c.b16 %v1279, %v1246
    %v1577 = vpack.c.b16 %v1280, %v1247
    %v1578 = vpack.c.b16 %v1281, %v1248
    %v1579 = vpack.c.b16 %v1282, %v1249
    %v1580 = vpack.c.b16 %v1283, %v1250
    %v1581 = vpack.c.b16 %v1284, %v1251
    %v1582 = vpack.c.b16 %v1285, %v1252
    %v1583 = vpack.c.b16 %v1319, %v1286
    %v1584 = vpack.c.b16 %v1320, %v1287
    %v1585 = vpack.c.b16 %v1321, %v1288
    %v1586 = vpack.c.b16 %v1322, %v1289
    %v1587 = vpack.c.b16 %v1323, %v1290
    %v1588 = vpack.c.b16 %v1324, %v1291
    %v1589 = vpack.c.b16 %v1325, %v1292
    %v1590 = vpack.c.b16 %v1326, %v1293
    %v1591 = vpack.c.b16 %v1327, %v1294
    %v1592 = vpack.c.b16 %v1328, %v1295
    %v1593 = vpack.c.b16 %v1329, %v1296
    %v1594 = vpack.c.b16 %v1330, %v1297
    %v1595 = vpack.c.b16 %v1331, %v1298
    %v1596 = vpack.c.b16 %v1332, %v1299
    %v1597 = vpack.c.b16 %v1333, %v1300
    %v1598 = vpack.c.b16 %v1334, %v1301
    %v1599 = vpack.c.b16 %v1335, %v1302
    %v1600 = vpack.c.b16 %v1336, %v1303
    %v1601 = vpack.c.b16 %v1337, %v1304
    %v1602 = vpack.c.b16 %v1338, %v1305
    %v1603 = vpack.c.b16 %v1339, %v1306
    %v1604 = vpack.c.b16 %v1340, %v1307
    %v1605 = vpack.c.b16 %v1341, %v1308
    %v1606 = vpack.c.b16 %v1342, %v1309
    %v1607 = vpack.c.b16 %v1343, %v1310
    %v1608 = vpack.c.b16 %v1344, %v1311
    %v1609 = vpack.c.b16 %v1345, %v1312
    %v1610 = vpack.c.b16 %v1346, %v1313
    %v1611 = vpack.c.b16 %v1347, %v1314
    %v1612 = vpack.c.b16 %v1348, %v1315
    %v1613 = vpack.c.b16 %v1349, %v1316
    %v1614 = vpack.c.b16 %v1350, %v1317
    %v1615 = vpack.c.b16 %v1351, %v1318
    %1880 = vmatprep.subr.bf16.mxu0 %v1584
    %1881 = vmatpush1.bf16.msra.mxu0 %v1583
    %1882 = vmatprep.subr.bf16.mxu0 %v1551
    %1883 = vmatpush1.bf16.msra.mxu0 %v1550
    %1884 = vmatprep.subr.bf16.mxu0 %v1518
    %1885 = vmatpush1.bf16.msra.mxu0 %v1517
    %1886 = vmatprep.subr.bf16.mxu0 %v1485
    %1887 = vmatpush1.bf16.msra.mxu0 %v1484
    %1888 = vmatprep.subr.bf16.mxu0 %v1452
    %1889 = vmatpush1.bf16.msra.mxu0 %v1451
    %1890 = vmatprep.subr.bf16.mxu0 %v1419
    %1891 = vmatpush1.bf16.msra.mxu0 %v1418
    %1892 = vmatprep.subr.bf16.mxu0 %v1386
    %1893 = vmatpush1.bf16.msra.mxu0 %v1385
    %1894 = vmatprep.subr.bf16.mxu0 %v1353
    %1895 = vmatpush1.bf16.msra.mxu0 %v1352
    %1896 = vmatprep.subr.bf16.mxu0 0
    %1897 = vmatpush2.bf16.msra.mxu0 0
    %1898 = vmatprep.subr.bf16.mxu0 0
    %1899 = vmatpush2.bf16.msra.mxu0 0
    %1900 = vmatprep.subr.bf16.mxu0 0
    %1901 = vmatpush2.bf16.msra.mxu0 0
    %1902 = vmatprep.subr.bf16.mxu0 0
    %1903 = vmatpush2.bf16.msra.mxu0 0
    %1904 = vmatprep.subr.bf16.mxu0 0
    %1905 = vmatpush2.bf16.msra.mxu0 0
    %1906 = vmatprep.subr.bf16.mxu0 0
    %1907 = vmatpush2.bf16.msra.mxu0 0
    %1908 = vmatprep.subr.bf16.mxu0 0
    %1909 = vmatpush2.bf16.msra.mxu0 0
    %1910 = vmatprep.subr.bf16.mxu0 0
    %1911 = vmatpush2.bf16.msra.mxu0 0
    %1912 = vmatprep.mubr.bf16.mxu0 0
    %1913 = vmatmul.mubr.bf16.gmra.mxu0 %v104
    %v1914 = vpop.f32.mrf.mxu0
    %v1915 = vadd.f32 %v390, %v1914
    %v1916 = vpop.f32.mrf.mxu0
    %v1917 = vadd.f32 %v394, %v1916
    %v1918 = vpop.f32.mrf.mxu0
    %v1919 = vpop.f32.mrf.mxu0
    %1920 = vdwg.mxu0
    %1921 = vmatprep.subr.bf16.mxu0 %v1586
    %1922 = vmatpush1.bf16.msra.mxu0 %v1585
    %1923 = vmatprep.subr.bf16.mxu0 %v1553
    %1924 = vmatpush1.bf16.msra.mxu0 %v1552
    %1925 = vmatprep.subr.bf16.mxu0 %v1520
    %1926 = vmatpush1.bf16.msra.mxu0 %v1519
    %1927 = vmatprep.subr.bf16.mxu0 %v1487
    %1928 = vmatpush1.bf16.msra.mxu0 %v1486
    %1929 = vmatprep.subr.bf16.mxu0 %v1454
    %1930 = vmatpush1.bf16.msra.mxu0 %v1453
    %1931 = vmatprep.subr.bf16.mxu0 %v1421
    %1932 = vmatpush1.bf16.msra.mxu0 %v1420
    %1933 = vmatprep.subr.bf16.mxu0 %v1388
    %1934 = vmatpush1.bf16.msra.mxu0 %v1387
    %1935 = vmatprep.subr.bf16.mxu0 %v1355
    %1936 = vmatpush1.bf16.msra.mxu0 %v1354
    %1937 = vmatprep.subr.bf16.mxu0 0
    %1938 = vmatpush2.bf16.msra.mxu0 0
    %1939 = vmatprep.subr.bf16.mxu0 0
    %1940 = vmatpush2.bf16.msra.mxu0 0
    %1941 = vmatprep.subr.bf16.mxu0 0
    %1942 = vmatpush2.bf16.msra.mxu0 0
    %1943 = vmatprep.subr.bf16.mxu0 0
    %1944 = vmatpush2.bf16.msra.mxu0 0
    %1945 = vmatprep.subr.bf16.mxu0 0
    %1946 = vmatpush2.bf16.msra.mxu0 0
    %1947 = vmatprep.subr.bf16.mxu0 0
    %1948 = vmatpush2.bf16.msra.mxu0 0
    %1949 = vmatprep.subr.bf16.mxu0 0
    %1950 = vmatpush2.bf16.msra.mxu0 0
    %1951 = vmatprep.subr.bf16.mxu0 0
    %1952 = vmatpush2.bf16.msra.mxu0 0
    %1953 = vmatprep.mubr.bf16.mxu0 0
    %1954 = vmatmul.mubr.bf16.gmra.mxu0 %v104
    %v1955 = vpop.f32.mrf.mxu0
    %v1956 = vadd.f32 %v398, %v1955
    %v1957 = vpop.f32.mrf.mxu0
    %v1958 = vadd.f32 %v402, %v1957
    %v1959 = vpop.f32.mrf.mxu0
    %v1960 = vpop.f32.mrf.mxu0
    %1961 = vdwg.mxu0
    %1962 = vmatprep.subr.bf16.mxu0 %v1588
    %1963 = vmatpush1.bf16.msra.mxu0 %v1587
    %1964 = vmatprep.subr.bf16.mxu0 %v1555
    %1965 = vmatpush1.bf16.msra.mxu0 %v1554
    %1966 = vmatprep.subr.bf16.mxu0 %v1522
    %1967 = vmatpush1.bf16.msra.mxu0 %v1521
    %1968 = vmatprep.subr.bf16.mxu0 %v1489
    %1969 = vmatpush1.bf16.msra.mxu0 %v1488
    %1970 = vmatprep.subr.bf16.mxu0 %v1456
    %1971 = vmatpush1.bf16.msra.mxu0 %v1455
    %1972 = vmatprep.subr.bf16.mxu0 %v1423
    %1973 = vmatpush1.bf16.msra.mxu0 %v1422
    %1974 = vmatprep.subr.bf16.mxu0 %v1390
    %1975 = vmatpush1.bf16.msra.mxu0 %v1389
    %1976 = vmatprep.subr.bf16.mxu0 %v1357
    %1977 = vmatpush1.bf16.msra.mxu0 %v1356
    %1978 = vmatprep.subr.bf16.mxu0 0
    %1979 = vmatpush2.bf16.msra.mxu0 0
    %1980 = vmatprep.subr.bf16.mxu0 0
    %1981 = vmatpush2.bf16.msra.mxu0 0
    %1982 = vmatprep.subr.bf16.mxu0 0
    %1983 = vmatpush2.bf16.msra.mxu0 0
    %1984 = vmatprep.subr.bf16.mxu0 0
    %1985 = vmatpush2.bf16.msra.mxu0 0
    %1986 = vmatprep.subr.bf16.mxu0 0
    %1987 = vmatpush2.bf16.msra.mxu0 0
    %1988 = vmatprep.subr.bf16.mxu0 0
    %1989 = vmatpush2.bf16.msra.mxu0 0
    %1990 = vmatprep.subr.bf16.mxu0 0
    %1991 = vmatpush2.bf16.msra.mxu0 0
    %1992 = vmatprep.subr.bf16.mxu0 0
    %1993 = vmatpush2.bf16.msra.mxu0 0
    %1994 = vmatprep.mubr.bf16.mxu0 0
    %1995 = vmatmul.mubr.bf16.gmra.mxu0 %v104
    %v1996 = vpop.f32.mrf.mxu0
    %v1997 = vadd.f32 %v406, %v1996
    %v1998 = vpop.f32.mrf.mxu0
    %v1999 = vadd.f32 %v410, %v1998
    %v2000 = vpop.f32.mrf.mxu0
    %v2001 = vpop.f32.mrf.mxu0
    %2002 = vdwg.mxu0
    %2003 = vmatprep.subr.bf16.mxu0 %v1590
    %2004 = vmatpush1.bf16.msra.mxu0 %v1589
    %2005 = vmatprep.subr.bf16.mxu0 %v1557
    %2006 = vmatpush1.bf16.msra.mxu0 %v1556
    %2007 = vmatprep.subr.bf16.mxu0 %v1524
    %2008 = vmatpush1.bf16.msra.mxu0 %v1523
    %2009 = vmatprep.subr.bf16.mxu0 %v1491
    %2010 = vmatpush1.bf16.msra.mxu0 %v1490
    %2011 = vmatprep.subr.bf16.mxu0 %v1458
    %2012 = vmatpush1.bf16.msra.mxu0 %v1457
    %2013 = vmatprep.subr.bf16.mxu0 %v1425
    %2014 = vmatpush1.bf16.msra.mxu0 %v1424
    %2015 = vmatprep.subr.bf16.mxu0 %v1392
    %2016 = vmatpush1.bf16.msra.mxu0 %v1391
    %2017 = vmatprep.subr.bf16.mxu0 %v1359
    %2018 = vmatpush1.bf16.msra.mxu0 %v1358
    %2019 = vmatprep.subr.bf16.mxu0 0
    %2020 = vmatpush2.bf16.msra.mxu0 0
    %2021 = vmatprep.subr.bf16.mxu0 0
    %2022 = vmatpush2.bf16.msra.mxu0 0
    %2023 = vmatprep.subr.bf16.mxu0 0
    %2024 = vmatpush2.bf16.msra.mxu0 0
    %2025 = vmatprep.subr.bf16.mxu0 0
    %2026 = vmatpush2.bf16.msra.mxu0 0
    %2027 = vmatprep.subr.bf16.mxu0 0
    %2028 = vmatpush2.bf16.msra.mxu0 0
    %2029 = vmatprep.subr.bf16.mxu0 0
    %2030 = vmatpush2.bf16.msra.mxu0 0
    %2031 = vmatprep.subr.bf16.mxu0 0
    %2032 = vmatpush2.bf16.msra.mxu0 0
    %2033 = vmatprep.subr.bf16.mxu0 0
    %2034 = vmatpush2.bf16.msra.mxu0 0
    %2035 = vmatprep.mubr.bf16.mxu0 0
    %2036 = vmatmul.mubr.bf16.gmra.mxu0 %v104
    %v2037 = vpop.f32.mrf.mxu0
    %v2038 = vadd.f32 %v414, %v2037
    %v2039 = vpop.f32.mrf.mxu0
    %v2040 = vadd.f32 %v418, %v2039
    %v2041 = vpop.f32.mrf.mxu0
    %v2042 = vpop.f32.mrf.mxu0
    %2043 = vdwg.mxu0
    %2044 = vmatprep.subr.bf16.mxu0 %v1592
    %2045 = vmatpush1.bf16.msra.mxu0 %v1591
    %2046 = vmatprep.subr.bf16.mxu0 %v1559
    %2047 = vmatpush1.bf16.msra.mxu0 %v1558
    %2048 = vmatprep.subr.bf16.mxu0 %v1526
    %2049 = vmatpush1.bf16.msra.mxu0 %v1525
    %2050 = vmatprep.subr.bf16.mxu0 %v1493
    %2051 = vmatpush1.bf16.msra.mxu0 %v1492
    %2052 = vmatprep.subr.bf16.mxu0 %v1460
    %2053 = vmatpush1.bf16.msra.mxu0 %v1459
    %2054 = vmatprep.subr.bf16.mxu0 %v1427
    %2055 = vmatpush1.bf16.msra.mxu0 %v1426
    %2056 = vmatprep.subr.bf16.mxu0 %v1394
    %2057 = vmatpush1.bf16.msra.mxu0 %v1393
    %2058 = vmatprep.subr.bf16.mxu0 %v1361
    %2059 = vmatpush1.bf16.msra.mxu0 %v1360
    %2060 = vmatprep.subr.bf16.mxu0 0
    %2061 = vmatpush2.bf16.msra.mxu0 0
    %2062 = vmatprep.subr.bf16.mxu0 0
    %2063 = vmatpush2.bf16.msra.mxu0 0
    %2064 = vmatprep.subr.bf16.mxu0 0
    %2065 = vmatpush2.bf16.msra.mxu0 0
    %2066 = vmatprep.subr.bf16.mxu0 0
    %2067 = vmatpush2.bf16.msra.mxu0 0
    %2068 = vmatprep.subr.bf16.mxu0 0
    %2069 = vmatpush2.bf16.msra.mxu0 0
    %2070 = vmatprep.subr.bf16.mxu0 0
    %2071 = vmatpush2.bf16.msra.mxu0 0
    %2072 = vmatprep.subr.bf16.mxu0 0
    %2073 = vmatpush2.bf16.msra.mxu0 0
    %2074 = vmatprep.subr.bf16.mxu0 0
    %2075 = vmatpush2.bf16.msra.mxu0 0
    %2076 = vmatprep.mubr.bf16.mxu0 0
    %2077 = vmatmul.mubr.bf16.gmra.mxu0 %v104
    %v2078 = vpop.f32.mrf.mxu0
    %v2079 = vadd.f32 %v422, %v2078
    %v2080 = vpop.f32.mrf.mxu0
    %v2081 = vadd.f32 %v426, %v2080
    %v2082 = vpop.f32.mrf.mxu0
    %v2083 = vpop.f32.mrf.mxu0
    %2084 = vdwg.mxu0
    %2085 = vmatprep.subr.bf16.mxu0 %v1594
    %2086 = vmatpush1.bf16.msra.mxu0 %v1593
    %2087 = vmatprep.subr.bf16.mxu0 %v1561
    %2088 = vmatpush1.bf16.msra.mxu0 %v1560
    %2089 = vmatprep.subr.bf16.mxu0 %v1528
    %2090 = vmatpush1.bf16.msra.mxu0 %v1527
    %2091 = vmatprep.subr.bf16.mxu0 %v1495
    %2092 = vmatpush1.bf16.msra.mxu0 %v1494
    %2093 = vmatprep.subr.bf16.mxu0 %v1462
    %2094 = vmatpush1.bf16.msra.mxu0 %v1461
    %2095 = vmatprep.subr.bf16.mxu0 %v1429
    %2096 = vmatpush1.bf16.msra.mxu0 %v1428
    %2097 = vmatprep.subr.bf16.mxu0 %v1396
    %2098 = vmatpush1.bf16.msra.mxu0 %v1395
    %2099 = vmatprep.subr.bf16.mxu0 %v1363
    %2100 = vmatpush1.bf16.msra.mxu0 %v1362
    %2101 = vmatprep.subr.bf16.mxu0 0
    %2102 = vmatpush2.bf16.msra.mxu0 0
    %2103 = vmatprep.subr.bf16.mxu0 0
    %2104 = vmatpush2.bf16.msra.mxu0 0
    %2105 = vmatprep.subr.bf16.mxu0 0
    %2106 = vmatpush2.bf16.msra.mxu0 0
    %2107 = vmatprep.subr.bf16.mxu0 0
    %2108 = vmatpush2.bf16.msra.mxu0 0
    %2109 = vmatprep.subr.bf16.mxu0 0
    %2110 = vmatpush2.bf16.msra.mxu0 0
    %2111 = vmatprep.subr.bf16.mxu0 0
    %2112 = vmatpush2.bf16.msra.mxu0 0
    %2113 = vmatprep.subr.bf16.mxu0 0
    %2114 = vmatpush2.bf16.msra.mxu0 0
    %2115 = vmatprep.subr.bf16.mxu0 0
    %2116 = vmatpush2.bf16.msra.mxu0 0
    %2117 = vmatprep.mubr.bf16.mxu0 0
    %2118 = vmatmul.mubr.bf16.gmra.mxu0 %v104
    %v2119 = vpop.f32.mrf.mxu0
    %v2120 = vadd.f32 %v430, %v2119
    %v2121 = vpop.f32.mrf.mxu0
    %v2122 = vadd.f32 %v434, %v2121
    %v2123 = vpop.f32.mrf.mxu0
    %v2124 = vpop.f32.mrf.mxu0
    %2125 = vdwg.mxu0
    %2126 = vmatprep.subr.bf16.mxu0 %v1596
    %2127 = vmatpush1.bf16.msra.mxu0 %v1595
    %2128 = vmatprep.subr.bf16.mxu0 %v1563
    %2129 = vmatpush1.bf16.msra.mxu0 %v1562
    %2130 = vmatprep.subr.bf16.mxu0 %v1530
    %2131 = vmatpush1.bf16.msra.mxu0 %v1529
    %2132 = vmatprep.subr.bf16.mxu0 %v1497
    %2133 = vmatpush1.bf16.msra.mxu0 %v1496
    %2134 = vmatprep.subr.bf16.mxu0 %v1464
    %2135 = vmatpush1.bf16.msra.mxu0 %v1463
    %2136 = vmatprep.subr.bf16.mxu0 %v1431
    %2137 = vmatpush1.bf16.msra.mxu0 %v1430
    %2138 = vmatprep.subr.bf16.mxu0 %v1398
    %2139 = vmatpush1.bf16.msra.mxu0 %v1397
    %2140 = vmatprep.subr.bf16.mxu0 %v1365
    %2141 = vmatpush1.bf16.msra.mxu0 %v1364
    %2142 = vmatprep.subr.bf16.mxu0 0
    %2143 = vmatpush2.bf16.msra.mxu0 0
    %2144 = vmatprep.subr.bf16.mxu0 0
    %2145 = vmatpush2.bf16.msra.mxu0 0
    %2146 = vmatprep.subr.bf16.mxu0 0
    %2147 = vmatpush2.bf16.msra.mxu0 0
    %2148 = vmatprep.subr.bf16.mxu0 0
    %2149 = vmatpush2.bf16.msra.mxu0 0
    %2150 = vmatprep.subr.bf16.mxu0 0
    %2151 = vmatpush2.bf16.msra.mxu0 0
    %2152 = vmatprep.subr.bf16.mxu0 0
    %2153 = vmatpush2.bf16.msra.mxu0 0
    %2154 = vmatprep.subr.bf16.mxu0 0
    %2155 = vmatpush2.bf16.msra.mxu0 0
    %2156 = vmatprep.subr.bf16.mxu0 0
    %2157 = vmatpush2.bf16.msra.mxu0 0
    %2158 = vmatprep.mubr.bf16.mxu0 0
    %2159 = vmatmul.mubr.bf16.gmra.mxu0 %v104
    %v2160 = vpop.f32.mrf.mxu0
    %v2161 = vadd.f32 %v438, %v2160
    %v2162 = vpop.f32.mrf.mxu0
    %v2163 = vadd.f32 %v442, %v2162
    %v2164 = vpop.f32.mrf.mxu0
    %v2165 = vpop.f32.mrf.mxu0
    %2166 = vdwg.mxu0
    %2167 = vmatprep.subr.bf16.mxu0 %v1598
    %2168 = vmatpush1.bf16.msra.mxu0 %v1597
    %2169 = vmatprep.subr.bf16.mxu0 %v1565
    %2170 = vmatpush1.bf16.msra.mxu0 %v1564
    %2171 = vmatprep.subr.bf16.mxu0 %v1532
    %2172 = vmatpush1.bf16.msra.mxu0 %v1531
    %2173 = vmatprep.subr.bf16.mxu0 %v1499
    %2174 = vmatpush1.bf16.msra.mxu0 %v1498
    %2175 = vmatprep.subr.bf16.mxu0 %v1466
    %2176 = vmatpush1.bf16.msra.mxu0 %v1465
    %2177 = vmatprep.subr.bf16.mxu0 %v1433
    %2178 = vmatpush1.bf16.msra.mxu0 %v1432
    %2179 = vmatprep.subr.bf16.mxu0 %v1400
    %2180 = vmatpush1.bf16.msra.mxu0 %v1399
    %2181 = vmatprep.subr.bf16.mxu0 %v1367
    %2182 = vmatpush1.bf16.msra.mxu0 %v1366
    %2183 = vmatprep.subr.bf16.mxu0 0
    %2184 = vmatpush2.bf16.msra.mxu0 0
    %2185 = vmatprep.subr.bf16.mxu0 0
    %2186 = vmatpush2.bf16.msra.mxu0 0
    %2187 = vmatprep.subr.bf16.mxu0 0
    %2188 = vmatpush2.bf16.msra.mxu0 0
    %2189 = vmatprep.subr.bf16.mxu0 0
    %2190 = vmatpush2.bf16.msra.mxu0 0
    %2191 = vmatprep.subr.bf16.mxu0 0
    %2192 = vmatpush2.bf16.msra.mxu0 0
    %2193 = vmatprep.subr.bf16.mxu0 0
    %2194 = vmatpush2.bf16.msra.mxu0 0
    %2195 = vmatprep.subr.bf16.mxu0 0
    %2196 = vmatpush2.bf16.msra.mxu0 0
    %2197 = vmatprep.subr.bf16.mxu0 0
    %2198 = vmatpush2.bf16.msra.mxu0 0
    %2199 = vmatprep.mubr.bf16.mxu0 0
    %2200 = vmatmul.mubr.bf16.gmra.mxu0 %v104
    %v2201 = vpop.f32.mrf.mxu0
    %v2202 = vadd.f32 %v446, %v2201
    %v2203 = vpop.f32.mrf.mxu0
    %v2204 = vadd.f32 %v450, %v2203
    %v2205 = vpop.f32.mrf.mxu0
    %v2206 = vpop.f32.mrf.mxu0
    %2207 = vdwg.mxu0
    %2208 = vmatprep.subr.bf16.mxu0 %v1600
    %2209 = vmatpush1.bf16.msra.mxu0 %v1599
    %2210 = vmatprep.subr.bf16.mxu0 %v1567
    %2211 = vmatpush1.bf16.msra.mxu0 %v1566
    %2212 = vmatprep.subr.bf16.mxu0 %v1534
    %2213 = vmatpush1.bf16.msra.mxu0 %v1533
    %2214 = vmatprep.subr.bf16.mxu0 %v1501
    %2215 = vmatpush1.bf16.msra.mxu0 %v1500
    %2216 = vmatprep.subr.bf16.mxu0 %v1468
    %2217 = vmatpush1.bf16.msra.mxu0 %v1467
    %2218 = vmatprep.subr.bf16.mxu0 %v1435
    %2219 = vmatpush1.bf16.msra.mxu0 %v1434
    %2220 = vmatprep.subr.bf16.mxu0 %v1402
    %2221 = vmatpush1.bf16.msra.mxu0 %v1401
    %2222 = vmatprep.subr.bf16.mxu0 %v1369
    %2223 = vmatpush1.bf16.msra.mxu0 %v1368
    %2224 = vmatprep.subr.bf16.mxu0 0
    %2225 = vmatpush2.bf16.msra.mxu0 0
    %2226 = vmatprep.subr.bf16.mxu0 0
    %2227 = vmatpush2.bf16.msra.mxu0 0
    %2228 = vmatprep.subr.bf16.mxu0 0
    %2229 = vmatpush2.bf16.msra.mxu0 0
    %2230 = vmatprep.subr.bf16.mxu0 0
    %2231 = vmatpush2.bf16.msra.mxu0 0
    %2232 = vmatprep.subr.bf16.mxu0 0
    %2233 = vmatpush2.bf16.msra.mxu0 0
    %2234 = vmatprep.subr.bf16.mxu0 0
    %2235 = vmatpush2.bf16.msra.mxu0 0
    %2236 = vmatprep.subr.bf16.mxu0 0
    %2237 = vmatpush2.bf16.msra.mxu0 0
    %2238 = vmatprep.subr.bf16.mxu0 0
    %2239 = vmatpush2.bf16.msra.mxu0 0
    %2240 = vmatprep.mubr.bf16.mxu0 0
    %2241 = vmatmul.mubr.bf16.gmra.mxu0 %v104
    %v2242 = vpop.f32.mrf.mxu0
    %v2243 = vadd.f32 %v454, %v2242
    %v2244 = vpop.f32.mrf.mxu0
    %v2245 = vadd.f32 %v458, %v2244
    %v2246 = vpop.f32.mrf.mxu0
    %v2247 = vpop.f32.mrf.mxu0
    %2248 = vdwg.mxu0
    %2249 = vmatprep.subr.bf16.mxu0 %v1602
    %2250 = vmatpush1.bf16.msra.mxu0 %v1601
    %2251 = vmatprep.subr.bf16.mxu0 %v1569
    %2252 = vmatpush1.bf16.msra.mxu0 %v1568
    %2253 = vmatprep.subr.bf16.mxu0 %v1536
    %2254 = vmatpush1.bf16.msra.mxu0 %v1535
    %2255 = vmatprep.subr.bf16.mxu0 %v1503
    %2256 = vmatpush1.bf16.msra.mxu0 %v1502
    %2257 = vmatprep.subr.bf16.mxu0 %v1470
    %2258 = vmatpush1.bf16.msra.mxu0 %v1469
    %2259 = vmatprep.subr.bf16.mxu0 %v1437
    %2260 = vmatpush1.bf16.msra.mxu0 %v1436
    %2261 = vmatprep.subr.bf16.mxu0 %v1404
    %2262 = vmatpush1.bf16.msra.mxu0 %v1403
    %2263 = vmatprep.subr.bf16.mxu0 %v1371
    %2264 = vmatpush1.bf16.msra.mxu0 %v1370
    %2265 = vmatprep.subr.bf16.mxu0 0
    %2266 = vmatpush2.bf16.msra.mxu0 0
    %2267 = vmatprep.subr.bf16.mxu0 0
    %2268 = vmatpush2.bf16.msra.mxu0 0
    %2269 = vmatprep.subr.bf16.mxu0 0
    %2270 = vmatpush2.bf16.msra.mxu0 0
    %2271 = vmatprep.subr.bf16.mxu0 0
    %2272 = vmatpush2.bf16.msra.mxu0 0
    %2273 = vmatprep.subr.bf16.mxu0 0
    %2274 = vmatpush2.bf16.msra.mxu0 0
    %2275 = vmatprep.subr.bf16.mxu0 0
    %2276 = vmatpush2.bf16.msra.mxu0 0
    %2277 = vmatprep.subr.bf16.mxu0 0
    %2278 = vmatpush2.bf16.msra.mxu0 0
    %2279 = vmatprep.subr.bf16.mxu0 0
    %2280 = vmatpush2.bf16.msra.mxu0 0
    %2281 = vmatprep.mubr.bf16.mxu0 0
    %2282 = vmatmul.mubr.bf16.gmra.mxu0 %v104
    %v2283 = vpop.f32.mrf.mxu0
    %v2284 = vadd.f32 %v462, %v2283
    %v2285 = vpop.f32.mrf.mxu0
    %v2286 = vadd.f32 %v466, %v2285
    %v2287 = vpop.f32.mrf.mxu0
    %v2288 = vpop.f32.mrf.mxu0
    %2289 = vdwg.mxu0
    %2290 = vmatprep.subr.bf16.mxu0 %v1604
    %2291 = vmatpush1.bf16.msra.mxu0 %v1603
    %2292 = vmatprep.subr.bf16.mxu0 %v1571
    %2293 = vmatpush1.bf16.msra.mxu0 %v1570
    %2294 = vmatprep.subr.bf16.mxu0 %v1538
    %2295 = vmatpush1.bf16.msra.mxu0 %v1537
    %2296 = vmatprep.subr.bf16.mxu0 %v1505
    %2297 = vmatpush1.bf16.msra.mxu0 %v1504
    %2298 = vmatprep.subr.bf16.mxu0 %v1472
    %2299 = vmatpush1.bf16.msra.mxu0 %v1471
    %2300 = vmatprep.subr.bf16.mxu0 %v1439
    %2301 = vmatpush1.bf16.msra.mxu0 %v1438
    %2302 = vmatprep.subr.bf16.mxu0 %v1406
    %2303 = vmatpush1.bf16.msra.mxu0 %v1405
    %2304 = vmatprep.subr.bf16.mxu0 %v1373
    %2305 = vmatpush1.bf16.msra.mxu0 %v1372
    %2306 = vmatprep.subr.bf16.mxu0 0
    %2307 = vmatpush2.bf16.msra.mxu0 0
    %2308 = vmatprep.subr.bf16.mxu0 0
    %2309 = vmatpush2.bf16.msra.mxu0 0
    %2310 = vmatprep.subr.bf16.mxu0 0
    %2311 = vmatpush2.bf16.msra.mxu0 0
    %2312 = vmatprep.subr.bf16.mxu0 0
    %2313 = vmatpush2.bf16.msra.mxu0 0
    %2314 = vmatprep.subr.bf16.mxu0 0
    %2315 = vmatpush2.bf16.msra.mxu0 0
    %2316 = vmatprep.subr.bf16.mxu0 0
    %2317 = vmatpush2.bf16.msra.mxu0 0
    %2318 = vmatprep.subr.bf16.mxu0 0
    %2319 = vmatpush2.bf16.msra.mxu0 0
    %2320 = vmatprep.subr.bf16.mxu0 0
    %2321 = vmatpush2.bf16.msra.mxu0 0
    %2322 = vmatprep.mubr.bf16.mxu0 0
    %2323 = vmatmul.mubr.bf16.gmra.mxu0 %v104
    %v2324 = vpop.f32.mrf.mxu0
    %v2325 = vadd.f32 %v470, %v2324
    %v2326 = vpop.f32.mrf.mxu0
    %v2327 = vadd.f32 %v474, %v2326
    %v2328 = vpop.f32.mrf.mxu0
    %v2329 = vpop.f32.mrf.mxu0
    %2330 = vdwg.mxu0
    %2331 = vmatprep.subr.bf16.mxu0 %v1606
    %2332 = vmatpush1.bf16.msra.mxu0 %v1605
    %2333 = vmatprep.subr.bf16.mxu0 %v1573
    %2334 = vmatpush1.bf16.msra.mxu0 %v1572
    %2335 = vmatprep.subr.bf16.mxu0 %v1540
    %2336 = vmatpush1.bf16.msra.mxu0 %v1539
    %2337 = vmatprep.subr.bf16.mxu0 %v1507
    %2338 = vmatpush1.bf16.msra.mxu0 %v1506
    %2339 = vmatprep.subr.bf16.mxu0 %v1474
    %2340 = vmatpush1.bf16.msra.mxu0 %v1473
    %2341 = vmatprep.subr.bf16.mxu0 %v1441
    %2342 = vmatpush1.bf16.msra.mxu0 %v1440
    %2343 = vmatprep.subr.bf16.mxu0 %v1408
    %2344 = vmatpush1.bf16.msra.mxu0 %v1407
    %2345 = vmatprep.subr.bf16.mxu0 %v1375
    %2346 = vmatpush1.bf16.msra.mxu0 %v1374
    %2347 = vmatprep.subr.bf16.mxu0 0
    %2348 = vmatpush2.bf16.msra.mxu0 0
    %2349 = vmatprep.subr.bf16.mxu0 0
    %2350 = vmatpush2.bf16.msra.mxu0 0
    %2351 = vmatprep.subr.bf16.mxu0 0
    %2352 = vmatpush2.bf16.msra.mxu0 0
    %2353 = vmatprep.subr.bf16.mxu0 0
    %2354 = vmatpush2.bf16.msra.mxu0 0
    %2355 = vmatprep.subr.bf16.mxu0 0
    %2356 = vmatpush2.bf16.msra.mxu0 0
    %2357 = vmatprep.subr.bf16.mxu0 0
    %2358 = vmatpush2.bf16.msra.mxu0 0
    %2359 = vmatprep.subr.bf16.mxu0 0
    %2360 = vmatpush2.bf16.msra.mxu0 0
    %2361 = vmatprep.subr.bf16.mxu0 0
    %2362 = vmatpush2.bf16.msra.mxu0 0
    %2363 = vmatprep.mubr.bf16.mxu0 0
    %2364 = vmatmul.mubr.bf16.gmra.mxu0 %v104
    %v2365 = vpop.f32.mrf.mxu0
    %v2366 = vadd.f32 %v478, %v2365
    %v2367 = vpop.f32.mrf.mxu0
    %v2368 = vadd.f32 %v482, %v2367
    %v2369 = vpop.f32.mrf.mxu0
    %v2370 = vpop.f32.mrf.mxu0
    %2371 = vdwg.mxu0
    %2372 = vmatprep.subr.bf16.mxu0 %v1608
    %2373 = vmatpush1.bf16.msra.mxu0 %v1607
    %2374 = vmatprep.subr.bf16.mxu0 %v1575
    %2375 = vmatpush1.bf16.msra.mxu0 %v1574
    %2376 = vmatprep.subr.bf16.mxu0 %v1542
    %2377 = vmatpush1.bf16.msra.mxu0 %v1541
    %2378 = vmatprep.subr.bf16.mxu0 %v1509
    %2379 = vmatpush1.bf16.msra.mxu0 %v1508
    %2380 = vmatprep.subr.bf16.mxu0 %v1476
    %2381 = vmatpush1.bf16.msra.mxu0 %v1475
    %2382 = vmatprep.subr.bf16.mxu0 %v1443
    %2383 = vmatpush1.bf16.msra.mxu0 %v1442
    %2384 = vmatprep.subr.bf16.mxu0 %v1410
    %2385 = vmatpush1.bf16.msra.mxu0 %v1409
    %2386 = vmatprep.subr.bf16.mxu0 %v1377
    %2387 = vmatpush1.bf16.msra.mxu0 %v1376
    %2388 = vmatprep.subr.bf16.mxu0 0
    %2389 = vmatpush2.bf16.msra.mxu0 0
    %2390 = vmatprep.subr.bf16.mxu0 0
    %2391 = vmatpush2.bf16.msra.mxu0 0
    %2392 = vmatprep.subr.bf16.mxu0 0
    %2393 = vmatpush2.bf16.msra.mxu0 0
    %2394 = vmatprep.subr.bf16.mxu0 0
    %2395 = vmatpush2.bf16.msra.mxu0 0
    %2396 = vmatprep.subr.bf16.mxu0 0
    %2397 = vmatpush2.bf16.msra.mxu0 0
    %2398 = vmatprep.subr.bf16.mxu0 0
    %2399 = vmatpush2.bf16.msra.mxu0 0
    %2400 = vmatprep.subr.bf16.mxu0 0
    %2401 = vmatpush2.bf16.msra.mxu0 0
    %2402 = vmatprep.subr.bf16.mxu0 0
    %2403 = vmatpush2.bf16.msra.mxu0 0
    %2404 = vmatprep.mubr.bf16.mxu0 0
    %2405 = vmatmul.mubr.bf16.gmra.mxu0 %v104
    %v2406 = vpop.f32.mrf.mxu0
    %v2407 = vadd.f32 %v486, %v2406
    %v2408 = vpop.f32.mrf.mxu0
    %v2409 = vadd.f32 %v490, %v2408
    %v2410 = vpop.f32.mrf.mxu0
    %v2411 = vpop.f32.mrf.mxu0
    %2412 = vdwg.mxu0
    %2413 = vmatprep.subr.bf16.mxu0 %v1610
    %2414 = vmatpush1.bf16.msra.mxu0 %v1609
    %2415 = vmatprep.subr.bf16.mxu0 %v1577
    %2416 = vmatpush1.bf16.msra.mxu0 %v1576
    %2417 = vmatprep.subr.bf16.mxu0 %v1544
    %2418 = vmatpush1.bf16.msra.mxu0 %v1543
    %2419 = vmatprep.subr.bf16.mxu0 %v1511
    %2420 = vmatpush1.bf16.msra.mxu0 %v1510
    %2421 = vmatprep.subr.bf16.mxu0 %v1478
    %2422 = vmatpush1.bf16.msra.mxu0 %v1477
    %2423 = vmatprep.subr.bf16.mxu0 %v1445
    %2424 = vmatpush1.bf16.msra.mxu0 %v1444
    %2425 = vmatprep.subr.bf16.mxu0 %v1412
    %2426 = vmatpush1.bf16.msra.mxu0 %v1411
    %2427 = vmatprep.subr.bf16.mxu0 %v1379
    %2428 = vmatpush1.bf16.msra.mxu0 %v1378
    %2429 = vmatprep.subr.bf16.mxu0 0
    %2430 = vmatpush2.bf16.msra.mxu0 0
    %2431 = vmatprep.subr.bf16.mxu0 0
    %2432 = vmatpush2.bf16.msra.mxu0 0
    %2433 = vmatprep.subr.bf16.mxu0 0
    %2434 = vmatpush2.bf16.msra.mxu0 0
    %2435 = vmatprep.subr.bf16.mxu0 0
    %2436 = vmatpush2.bf16.msra.mxu0 0
    %2437 = vmatprep.subr.bf16.mxu0 0
    %2438 = vmatpush2.bf16.msra.mxu0 0
    %2439 = vmatprep.subr.bf16.mxu0 0
    %2440 = vmatpush2.bf16.msra.mxu0 0
    %2441 = vmatprep.subr.bf16.mxu0 0
    %2442 = vmatpush2.bf16.msra.mxu0 0
    %2443 = vmatprep.subr.bf16.mxu0 0
    %2444 = vmatpush2.bf16.msra.mxu0 0
    %2445 = vmatprep.mubr.bf16.mxu0 0
    %2446 = vmatmul.mubr.bf16.gmra.mxu0 %v104
    %v2447 = vpop.f32.mrf.mxu0
    %v2448 = vadd.f32 %v494, %v2447
    %v2449 = vpop.f32.mrf.mxu0
    %v2450 = vadd.f32 %v498, %v2449
    %v2451 = vpop.f32.mrf.mxu0
    %v2452 = vpop.f32.mrf.mxu0
    %2453 = vdwg.mxu0
    %2454 = vmatprep.subr.bf16.mxu0 %v1612
    %2455 = vmatpush1.bf16.msra.mxu0 %v1611
    %2456 = vmatprep.subr.bf16.mxu0 %v1579
    %2457 = vmatpush1.bf16.msra.mxu0 %v1578
    %2458 = vmatprep.subr.bf16.mxu0 %v1546
    %2459 = vmatpush1.bf16.msra.mxu0 %v1545
    %2460 = vmatprep.subr.bf16.mxu0 %v1513
    %2461 = vmatpush1.bf16.msra.mxu0 %v1512
    %2462 = vmatprep.subr.bf16.mxu0 %v1480
    %2463 = vmatpush1.bf16.msra.mxu0 %v1479
    %2464 = vmatprep.subr.bf16.mxu0 %v1447
    %2465 = vmatpush1.bf16.msra.mxu0 %v1446
    %2466 = vmatprep.subr.bf16.mxu0 %v1414
    %2467 = vmatpush1.bf16.msra.mxu0 %v1413
    %2468 = vmatprep.subr.bf16.mxu0 %v1381
    %2469 = vmatpush1.bf16.msra.mxu0 %v1380
    %2470 = vmatprep.subr.bf16.mxu0 0
    %2471 = vmatpush2.bf16.msra.mxu0 0
    %2472 = vmatprep.subr.bf16.mxu0 0
    %2473 = vmatpush2.bf16.msra.mxu0 0
    %2474 = vmatprep.subr.bf16.mxu0 0
    %2475 = vmatpush2.bf16.msra.mxu0 0
    %2476 = vmatprep.subr.bf16.mxu0 0
    %2477 = vmatpush2.bf16.msra.mxu0 0
    %2478 = vmatprep.subr.bf16.mxu0 0
    %2479 = vmatpush2.bf16.msra.mxu0 0
    %2480 = vmatprep.subr.bf16.mxu0 0
    %2481 = vmatpush2.bf16.msra.mxu0 0
    %2482 = vmatprep.subr.bf16.mxu0 0
    %2483 = vmatpush2.bf16.msra.mxu0 0
    %2484 = vmatprep.subr.bf16.mxu0 0
    %2485 = vmatpush2.bf16.msra.mxu0 0
    %2486 = vmatprep.mubr.bf16.mxu0 0
    %2487 = vmatmul.mubr.bf16.gmra.mxu0 %v104
    %v2488 = vpop.f32.mrf.mxu0
    %v2489 = vadd.f32 %v502, %v2488
    %v2490 = vpop.f32.mrf.mxu0
    %v2491 = vadd.f32 %v506, %v2490
    %v2492 = vpop.f32.mrf.mxu0
    %v2493 = vpop.f32.mrf.mxu0
    %2494 = vdwg.mxu0
    %2495 = vmatprep.subr.bf16.mxu0 %v1614
    %2496 = vmatpush1.bf16.msra.mxu0 %v1613
    %2497 = vmatprep.subr.bf16.mxu0 %v1581
    %2498 = vmatpush1.bf16.msra.mxu0 %v1580
    %2499 = vmatprep.subr.bf16.mxu0 %v1548
    %2500 = vmatpush1.bf16.msra.mxu0 %v1547
    %2501 = vmatprep.subr.bf16.mxu0 %v1515
    %2502 = vmatpush1.bf16.msra.mxu0 %v1514
    %2503 = vmatprep.subr.bf16.mxu0 %v1482
    %2504 = vmatpush1.bf16.msra.mxu0 %v1481
    %2505 = vmatprep.subr.bf16.mxu0 %v1449
    %2506 = vmatpush1.bf16.msra.mxu0 %v1448
    %2507 = vmatprep.subr.bf16.mxu0 %v1416
    %2508 = vmatpush1.bf16.msra.mxu0 %v1415
    %2509 = vmatprep.subr.bf16.mxu0 %v1383
    %2510 = vmatpush1.bf16.msra.mxu0 %v1382
    %2511 = vmatprep.subr.bf16.mxu0 0
    %2512 = vmatpush2.bf16.msra.mxu0 0
    %2513 = vmatprep.subr.bf16.mxu0 0
    %2514 = vmatpush2.bf16.msra.mxu0 0
    %2515 = vmatprep.subr.bf16.mxu0 0
    %2516 = vmatpush2.bf16.msra.mxu0 0
    %2517 = vmatprep.subr.bf16.mxu0 0
    %2518 = vmatpush2.bf16.msra.mxu0 0
    %2519 = vmatprep.subr.bf16.mxu0 0
    %2520 = vmatpush2.bf16.msra.mxu0 0
    %2521 = vmatprep.subr.bf16.mxu0 0
    %2522 = vmatpush2.bf16.msra.mxu0 0
    %2523 = vmatprep.subr.bf16.mxu0 0
    %2524 = vmatpush2.bf16.msra.mxu0 0
    %2525 = vmatprep.subr.bf16.mxu0 0
    %2526 = vmatpush2.bf16.msra.mxu0 0
    %2527 = vmatprep.mubr.bf16.mxu0 0
    %2528 = vmatmul.mubr.bf16.gmra.mxu0 %v104
    %v2529 = vpop.f32.mrf.mxu0
    %v2530 = vadd.f32 %v510, %v2529
    %v2531 = vpop.f32.mrf.mxu0
    %v2532 = vadd.f32 %v514, %v2531
    %v2533 = vpop.f32.mrf.mxu0
    %v2534 = vpop.f32.mrf.mxu0
    %2535 = vdwg.mxu0
    %2536 = vmatprep.subr.bf16.mxu0 0
    %2537 = vmatpush1.bf16.msra.mxu0 %v1615
    %2538 = vmatprep.subr.bf16.mxu0 0
    %2539 = vmatpush1.bf16.msra.mxu0 %v1582
    %2540 = vmatprep.subr.bf16.mxu0 0
    %2541 = vmatpush1.bf16.msra.mxu0 %v1549
    %2542 = vmatprep.subr.bf16.mxu0 0
    %2543 = vmatpush1.bf16.msra.mxu0 %v1516
    %2544 = vmatprep.subr.bf16.mxu0 0
    %2545 = vmatpush1.bf16.msra.mxu0 %v1483
    %2546 = vmatprep.subr.bf16.mxu0 0
    %2547 = vmatpush1.bf16.msra.mxu0 %v1450
    %2548 = vmatprep.subr.bf16.mxu0 0
    %2549 = vmatpush1.bf16.msra.mxu0 %v1417
    %2550 = vmatprep.subr.bf16.mxu0 0
    %2551 = vmatpush1.bf16.msra.mxu0 %v1384
    %2552 = vmatprep.subr.bf16.mxu0 0
    %2553 = vmatpush2.bf16.msra.mxu0 0
    %2554 = vmatprep.subr.bf16.mxu0 0
    %2555 = vmatpush2.bf16.msra.mxu0 0
    %2556 = vmatprep.subr.bf16.mxu0 0
    %2557 = vmatpush2.bf16.msra.mxu0 0
    %2558 = vmatprep.subr.bf16.mxu0 0
    %2559 = vmatpush2.bf16.msra.mxu0 0
    %2560 = vmatprep.subr.bf16.mxu0 0
    %2561 = vmatpush2.bf16.msra.mxu0 0
    %2562 = vmatprep.subr.bf16.mxu0 0
    %2563 = vmatpush2.bf16.msra.mxu0 0
    %2564 = vmatprep.subr.bf16.mxu0 0
    %2565 = vmatpush2.bf16.msra.mxu0 0
    %2566 = vmatprep.subr.bf16.mxu0 0
    %2567 = vmatpush2.bf16.msra.mxu0 0
    %2568 = vmatprep.mubr.bf16.mxu0 0
    %2569 = vmatmul.mubr.bf16.gmra.mxu0 %v104
    %v2570 = vpop.f32.mrf.mxu0
    %v2571 = vadd.f32 %v518, %v2570
    %v2572 = vpop.f32.mrf.mxu0
    %v2573 = vpop.f32.mrf.mxu0
    %v2574 = vpop.f32.mrf.mxu0
    %2575 = vdwg.mxu0
    %v2576 = vmax.f32 %v1915, 0.0
    %v2577 = vmax.f32 %v1917, 0.0
    %v2578 = vmax.f32 %v1956, 0.0
    %v2579 = vmax.f32 %v1958, 0.0
    %v2580 = vmax.f32 %v1997, 0.0
    %v2581 = vmax.f32 %v1999, 0.0
    %v2582 = vmax.f32 %v2038, 0.0
    %v2583 = vmax.f32 %v2040, 0.0
    %v2584 = vmax.f32 %v2079, 0.0
    %v2585 = vmax.f32 %v2081, 0.0
    %v2586 = vmax.f32 %v2120, 0.0
    %v2587 = vmax.f32 %v2122, 0.0
    %v2588 = vmax.f32 %v2161, 0.0
    %v2589 = vmax.f32 %v2163, 0.0
    %v2590 = vmax.f32 %v2202, 0.0
    %v2591 = vmax.f32 %v2204, 0.0
    %v2592 = vmax.f32 %v2243, 0.0
    %v2593 = vmax.f32 %v2245, 0.0
    %v2594 = vmax.f32 %v2284, 0.0
    %v2595 = vmax.f32 %v2286, 0.0
    %v2596 = vmax.f32 %v2325, 0.0
    %v2597 = vmax.f32 %v2327, 0.0
    %v2598 = vmax.f32 %v2366, 0.0
    %v2599 = vmax.f32 %v2368, 0.0
    %v2600 = vmax.f32 %v2407, 0.0
    %v2601 = vmax.f32 %v2409, 0.0
    %v2602 = vmax.f32 %v2448, 0.0
    %v2603 = vmax.f32 %v2450, 0.0
    %v2604 = vmax.f32 %v2489, 0.0
    %v2605 = vmax.f32 %v2491, 0.0
    %v2606 = vmax.f32 %v2530, 0.0
    %v2607 = vmax.f32 %v2532, 0.0
    %v2608 = vmax.f32 %v2571, 0.0
    %v2609 = vmul.f32 %v2576, %v2576
    %v2610 = vmul.f32 %v2577, %v2577
    %v2611 = vmul.f32 %v2578, %v2578
    %v2612 = vmul.f32 %v2579, %v2579
    %v2613 = vmul.f32 %v2580, %v2580
    %v2614 = vmul.f32 %v2581, %v2581
    %v2615 = vmul.f32 %v2582, %v2582
    %v2616 = vmul.f32 %v2583, %v2583
    %v2617 = vmul.f32 %v2584, %v2584
    %v2618 = vmul.f32 %v2585, %v2585
    %v2619 = vmul.f32 %v2586, %v2586
    %v2620 = vmul.f32 %v2587, %v2587
    %v2621 = vmul.f32 %v2588, %v2588
    %v2622 = vmul.f32 %v2589, %v2589
    %v2623 = vmul.f32 %v2590, %v2590
    %v2624 = vmul.f32 %v2591, %v2591
    %v2625 = vmul.f32 %v2592, %v2592
    %v2626 = vmul.f32 %v2593, %v2593
    %v2627 = vmul.f32 %v2594, %v2594
    %v2628 = vmul.f32 %v2595, %v2595
    %v2629 = vmul.f32 %v2596, %v2596
    %v2630 = vmul.f32 %v2597, %v2597
    %v2631 = vmul.f32 %v2598, %v2598
    %v2632 = vmul.f32 %v2599, %v2599
    %v2633 = vmul.f32 %v2600, %v2600
    %v2634 = vmul.f32 %v2601, %v2601
    %v2635 = vmul.f32 %v2602, %v2602
    %v2636 = vmul.f32 %v2603, %v2603
    %v2637 = vmul.f32 %v2604, %v2604
    %v2638 = vmul.f32 %v2605, %v2605
    %v2639 = vmul.f32 %v2606, %v2606
    %v2640 = vmul.f32 %v2607, %v2607
    %v2641 = vmul.f32 %v2608, %v2608
    %2642 = vrot.lane.b32.xlu0 %v2609, 2
    %v2643 = vpop.permute.xlu0 %2642
    %2644 = vrot.lane.b32.xlu0 %v2610, 2
    %v2645 = vpop.permute.xlu0 %2644
    %2646 = vrot.lane.b32.xlu0 %v2611, 2
    %v2647 = vpop.permute.xlu0 %2646
    %2648 = vrot.lane.b32.xlu0 %v2612, 2
    %v2649 = vpop.permute.xlu0 %2648
    %2650 = vrot.lane.b32.xlu0 %v2613, 2
    %v2651 = vpop.permute.xlu0 %2650
    %2652 = vrot.lane.b32.xlu0 %v2614, 2
    %v2653 = vpop.permute.xlu0 %2652
    %2654 = vrot.lane.b32.xlu0 %v2615, 2
    %v2655 = vpop.permute.xlu0 %2654
    %2656 = vrot.lane.b32.xlu0 %v2616, 2
    %v2657 = vpop.permute.xlu0 %2656
    %2658 = vrot.lane.b32.xlu0 %v2617, 2
    %v2659 = vpop.permute.xlu0 %2658
    %2660 = vrot.lane.b32.xlu0 %v2618, 2
    %v2661 = vpop.permute.xlu0 %2660
    %2662 = vrot.lane.b32.xlu0 %v2619, 2
    %v2663 = vpop.permute.xlu0 %2662
    %2664 = vrot.lane.b32.xlu0 %v2620, 2
    %v2665 = vpop.permute.xlu0 %2664
    %2666 = vrot.lane.b32.xlu0 %v2621, 2
    %v2667 = vpop.permute.xlu0 %2666
    %2668 = vrot.lane.b32.xlu0 %v2622, 2
    %v2669 = vpop.permute.xlu0 %2668
    %2670 = vrot.lane.b32.xlu0 %v2623, 2
    %v2671 = vpop.permute.xlu0 %2670
    %2672 = vrot.lane.b32.xlu0 %v2624, 2
    %v2673 = vpop.permute.xlu0 %2672
    %2674 = vrot.lane.b32.xlu0 %v2625, 2
    %v2675 = vpop.permute.xlu0 %2674
    %2676 = vrot.lane.b32.xlu0 %v2626, 2
    %v2677 = vpop.permute.xlu0 %2676
    %2678 = vrot.lane.b32.xlu0 %v2627, 2
    %v2679 = vpop.permute.xlu0 %2678
    %2680 = vrot.lane.b32.xlu0 %v2628, 2
    %v2681 = vpop.permute.xlu0 %2680
    %2682 = vrot.lane.b32.xlu0 %v2629, 2
    %v2683 = vpop.permute.xlu0 %2682
    %2684 = vrot.lane.b32.xlu0 %v2630, 2
    %v2685 = vpop.permute.xlu0 %2684
    %2686 = vrot.lane.b32.xlu0 %v2631, 2
    %v2687 = vpop.permute.xlu0 %2686
    %2688 = vrot.lane.b32.xlu0 %v2632, 2
    %v2689 = vpop.permute.xlu0 %2688
    %2690 = vrot.lane.b32.xlu0 %v2633, 2
    %v2691 = vpop.permute.xlu0 %2690
    %2692 = vrot.lane.b32.xlu0 %v2634, 2
    %v2693 = vpop.permute.xlu0 %2692
    %2694 = vrot.lane.b32.xlu0 %v2635, 2
    %v2695 = vpop.permute.xlu0 %2694
    %2696 = vrot.lane.b32.xlu0 %v2636, 2
    %v2697 = vpop.permute.xlu0 %2696
    %2698 = vrot.lane.b32.xlu0 %v2637, 2
    %v2699 = vpop.permute.xlu0 %2698
    %2700 = vrot.lane.b32.xlu0 %v2638, 2
    %v2701 = vpop.permute.xlu0 %2700
    %2702 = vrot.lane.b32.xlu0 %v2639, 2
    %v2703 = vpop.permute.xlu0 %2702
    %2704 = vrot.lane.b32.xlu0 %v2640, 2
    %v2705 = vpop.permute.xlu0 %2704
    %2706 = vrot.lane.b32.xlu0 %v2641, 2
    %v2707 = vpop.permute.xlu0 %2706
    %v2708 = vlaneseq
    %v2709 = vand.u32 %v2708, 127
    %vm2710 = vcmp.lt.s32.totalorder %v2709, 2
    %v2711 = vsel %vm2710, %v2705, %v2707
    %v2712 = vsel %vm2710, %v2703, %v2705
    %v2713 = vsel %vm2710, %v2701, %v2703
    %v2714 = vsel %vm2710, %v2699, %v2701
    %v2715 = vsel %vm2710, %v2697, %v2699
    %v2716 = vsel %vm2710, %v2695, %v2697
    %v2717 = vsel %vm2710, %v2693, %v2695
    %v2718 = vsel %vm2710, %v2691, %v2693
    %v2719 = vsel %vm2710, %v2689, %v2691
    %v2720 = vsel %vm2710, %v2687, %v2689
    %v2721 = vsel %vm2710, %v2685, %v2687
    %v2722 = vsel %vm2710, %v2683, %v2685
    %v2723 = vsel %vm2710, %v2681, %v2683
    %v2724 = vsel %vm2710, %v2679, %v2681
    %v2725 = vsel %vm2710, %v2677, %v2679
    %v2726 = vsel %vm2710, %v2675, %v2677
    %v2727 = vsel %vm2710, %v2673, %v2675
    %v2728 = vsel %vm2710, %v2671, %v2673
    %v2729 = vsel %vm2710, %v2669, %v2671
    %v2730 = vsel %vm2710, %v2667, %v2669
    %v2731 = vsel %vm2710, %v2665, %v2667
    %v2732 = vsel %vm2710, %v2663, %v2665
    %v2733 = vsel %vm2710, %v2661, %v2663
    %v2734 = vsel %vm2710, %v2659, %v2661
    %v2735 = vsel %vm2710, %v2657, %v2659
    %v2736 = vsel %vm2710, %v2655, %v2657
    %v2737 = vsel %vm2710, %v2653, %v2655
    %v2738 = vsel %vm2710, %v2651, %v2653
    %v2739 = vsel %vm2710, %v2649, %v2651
    %v2740 = vsel %vm2710, %v2647, %v2649
    %v2741 = vsel %vm2710, %v2645, %v2647
    %v2742 = vsel %vm2710, %v2643, %v2645
    %v2743 = vsel %vm2710, %v2707, %v2643
    %v2744 = vadd.f32 %v2609, %v2743
    %v2745 = vadd.f32 %v2610, %v2742
    %v2746 = vadd.f32 %v2611, %v2741
    %v2747 = vadd.f32 %v2612, %v2740
    %v2748 = vadd.f32 %v2613, %v2739
    %v2749 = vadd.f32 %v2614, %v2738
    %v2750 = vadd.f32 %v2615, %v2737
    %v2751 = vadd.f32 %v2616, %v2736
    %v2752 = vadd.f32 %v2617, %v2735
    %v2753 = vadd.f32 %v2618, %v2734
    %v2754 = vadd.f32 %v2619, %v2733
    %v2755 = vadd.f32 %v2620, %v2732
    %v2756 = vadd.f32 %v2621, %v2731
    %v2757 = vadd.f32 %v2622, %v2730
    %v2758 = vadd.f32 %v2623, %v2729
    %v2759 = vadd.f32 %v2624, %v2728
    %v2760 = vadd.f32 %v2625, %v2727
    %v2761 = vadd.f32 %v2626, %v2726
    %v2762 = vadd.f32 %v2627, %v2725
    %v2763 = vadd.f32 %v2628, %v2724
    %v2764 = vadd.f32 %v2629, %v2723
    %v2765 = vadd.f32 %v2630, %v2722
    %v2766 = vadd.f32 %v2631, %v2721
    %v2767 = vadd.f32 %v2632, %v2720
    %v2768 = vadd.f32 %v2633, %v2719
    %v2769 = vadd.f32 %v2634, %v2718
    %v2770 = vadd.f32 %v2635, %v2717
    %v2771 = vadd.f32 %v2636, %v2716
    %v2772 = vadd.f32 %v2637, %v2715
    %v2773 = vadd.f32 %v2638, %v2714
    %v2774 = vadd.f32 %v2639, %v2713
    %v2775 = vadd.f32 %v2640, %v2712
    %v2776 = vadd.f32 %v2641, %v2711
    %2777 = vrot.lane.b32.xlu0 %v2609, 1
    %v2778 = vpop.permute.xlu0 %2777
    %2779 = vrot.lane.b32.xlu0 %v2610, 1
    %v2780 = vpop.permute.xlu0 %2779
    %2781 = vrot.lane.b32.xlu0 %v2611, 1
    %v2782 = vpop.permute.xlu0 %2781
    %2783 = vrot.lane.b32.xlu0 %v2612, 1
    %v2784 = vpop.permute.xlu0 %2783
    %2785 = vrot.lane.b32.xlu0 %v2613, 1
    %v2786 = vpop.permute.xlu0 %2785
    %2787 = vrot.lane.b32.xlu0 %v2614, 1
    %v2788 = vpop.permute.xlu0 %2787
    %2789 = vrot.lane.b32.xlu0 %v2615, 1
    %v2790 = vpop.permute.xlu0 %2789
    %2791 = vrot.lane.b32.xlu0 %v2616, 1
    %v2792 = vpop.permute.xlu0 %2791
    %2793 = vrot.lane.b32.xlu0 %v2617, 1
    %v2794 = vpop.permute.xlu0 %2793
    %2795 = vrot.lane.b32.xlu0 %v2618, 1
    %v2796 = vpop.permute.xlu0 %2795
    %2797 = vrot.lane.b32.xlu0 %v2619, 1
    %v2798 = vpop.permute.xlu0 %2797
    %2799 = vrot.lane.b32.xlu0 %v2620, 1
    %v2800 = vpop.permute.xlu0 %2799
    %2801 = vrot.lane.b32.xlu0 %v2621, 1
    %v2802 = vpop.permute.xlu0 %2801
    %2803 = vrot.lane.b32.xlu0 %v2622, 1
    %v2804 = vpop.permute.xlu0 %2803
    %2805 = vrot.lane.b32.xlu0 %v2623, 1
    %v2806 = vpop.permute.xlu0 %2805
    %2807 = vrot.lane.b32.xlu0 %v2624, 1
    %v2808 = vpop.permute.xlu0 %2807
    %2809 = vrot.lane.b32.xlu0 %v2625, 1
    %v2810 = vpop.permute.xlu0 %2809
    %2811 = vrot.lane.b32.xlu0 %v2626, 1
    %v2812 = vpop.permute.xlu0 %2811
    %2813 = vrot.lane.b32.xlu0 %v2627, 1
    %v2814 = vpop.permute.xlu0 %2813
    %2815 = vrot.lane.b32.xlu0 %v2628, 1
    %v2816 = vpop.permute.xlu0 %2815
    %2817 = vrot.lane.b32.xlu0 %v2629, 1
    %v2818 = vpop.permute.xlu0 %2817
    %2819 = vrot.lane.b32.xlu0 %v2630, 1
    %v2820 = vpop.permute.xlu0 %2819
    %2821 = vrot.lane.b32.xlu0 %v2631, 1
    %v2822 = vpop.permute.xlu0 %2821
    %2823 = vrot.lane.b32.xlu0 %v2632, 1
    %v2824 = vpop.permute.xlu0 %2823
    %2825 = vrot.lane.b32.xlu0 %v2633, 1
    %v2826 = vpop.permute.xlu0 %2825
    %2827 = vrot.lane.b32.xlu0 %v2634, 1
    %v2828 = vpop.permute.xlu0 %2827
    %2829 = vrot.lane.b32.xlu0 %v2635, 1
    %v2830 = vpop.permute.xlu0 %2829
    %2831 = vrot.lane.b32.xlu0 %v2636, 1
    %v2832 = vpop.permute.xlu0 %2831
    %2833 = vrot.lane.b32.xlu0 %v2637, 1
    %v2834 = vpop.permute.xlu0 %2833
    %2835 = vrot.lane.b32.xlu0 %v2638, 1
    %v2836 = vpop.permute.xlu0 %2835
    %2837 = vrot.lane.b32.xlu0 %v2639, 1
    %v2838 = vpop.permute.xlu0 %2837
    %2839 = vrot.lane.b32.xlu0 %v2640, 1
    %v2840 = vpop.permute.xlu0 %2839
    %2841 = vrot.lane.b32.xlu0 %v2641, 1
    %v2842 = vpop.permute.xlu0 %2841
    %vm2843 = vcmp.lt.s32.totalorder %v2709, 1
    %v2844 = vsel %vm2843, %v2840, %v2842
    %v2845 = vsel %vm2843, %v2838, %v2840
    %v2846 = vsel %vm2843, %v2836, %v2838
    %v2847 = vsel %vm2843, %v2834, %v2836
    %v2848 = vsel %vm2843, %v2832, %v2834
    %v2849 = vsel %vm2843, %v2830, %v2832
    %v2850 = vsel %vm2843, %v2828, %v2830
    %v2851 = vsel %vm2843, %v2826, %v2828
    %v2852 = vsel %vm2843, %v2824, %v2826
    %v2853 = vsel %vm2843, %v2822, %v2824
    %v2854 = vsel %vm2843, %v2820, %v2822
    %v2855 = vsel %vm2843, %v2818, %v2820
    %v2856 = vsel %vm2843, %v2816, %v2818
    %v2857 = vsel %vm2843, %v2814, %v2816
    %v2858 = vsel %vm2843, %v2812, %v2814
    %v2859 = vsel %vm2843, %v2810, %v2812
    %v2860 = vsel %vm2843, %v2808, %v2810
    %v2861 = vsel %vm2843, %v2806, %v2808
    %v2862 = vsel %vm2843, %v2804, %v2806
    %v2863 = vsel %vm2843, %v2802, %v2804
    %v2864 = vsel %vm2843, %v2800, %v2802
    %v2865 = vsel %vm2843, %v2798, %v2800
    %v2866 = vsel %vm2843, %v2796, %v2798
    %v2867 = vsel %vm2843, %v2794, %v2796
    %v2868 = vsel %vm2843, %v2792, %v2794
    %v2869 = vsel %vm2843, %v2790, %v2792
    %v2870 = vsel %vm2843, %v2788, %v2790
    %v2871 = vsel %vm2843, %v2786, %v2788
    %v2872 = vsel %vm2843, %v2784, %v2786
    %v2873 = vsel %vm2843, %v2782, %v2784
    %v2874 = vsel %vm2843, %v2780, %v2782
    %v2875 = vsel %vm2843, %v2778, %v2780
    %v2876 = vsel %vm2843, %v2842, %v2778
    %v2877 = vadd.f32 %v2744, %v2876
    %v2878 = vadd.f32 %v2745, %v2875
    %v2879 = vadd.f32 %v2746, %v2874
    %v2880 = vadd.f32 %v2747, %v2873
    %v2881 = vadd.f32 %v2748, %v2872
    %v2882 = vadd.f32 %v2749, %v2871
    %v2883 = vadd.f32 %v2750, %v2870
    %v2884 = vadd.f32 %v2751, %v2869
    %v2885 = vadd.f32 %v2752, %v2868
    %v2886 = vadd.f32 %v2753, %v2867
    %v2887 = vadd.f32 %v2754, %v2866
    %v2888 = vadd.f32 %v2755, %v2865
    %v2889 = vadd.f32 %v2756, %v2864
    %v2890 = vadd.f32 %v2757, %v2863
    %v2891 = vadd.f32 %v2758, %v2862
    %v2892 = vadd.f32 %v2759, %v2861
    %v2893 = vadd.f32 %v2760, %v2860
    %v2894 = vadd.f32 %v2761, %v2859
    %v2895 = vadd.f32 %v2762, %v2858
    %v2896 = vadd.f32 %v2763, %v2857
    %v2897 = vadd.f32 %v2764, %v2856
    %v2898 = vadd.f32 %v2765, %v2855
    %v2899 = vadd.f32 %v2766, %v2854
    %v2900 = vadd.f32 %v2767, %v2853
    %v2901 = vadd.f32 %v2768, %v2852
    %v2902 = vadd.f32 %v2769, %v2851
    %v2903 = vadd.f32 %v2770, %v2850
    %v2904 = vadd.f32 %v2771, %v2849
    %v2905 = vadd.f32 %v2772, %v2848
    %v2906 = vadd.f32 %v2773, %v2847
    %v2907 = vadd.f32 %v2774, %v2846
    %v2908 = vadd.f32 %v2775, %v2845
    %v2909 = vadd.f32 %v2776, %v2844
    %2910 = vrot.lane.b32.xlu0 %v2609, 127
    %v2911 = vpop.permute.xlu0 %2910
    %2912 = vrot.lane.b32.xlu0 %v2610, 127
    %v2913 = vpop.permute.xlu0 %2912
    %2914 = vrot.lane.b32.xlu0 %v2611, 127
    %v2915 = vpop.permute.xlu0 %2914
    %2916 = vrot.lane.b32.xlu0 %v2612, 127
    %v2917 = vpop.permute.xlu0 %2916
    %2918 = vrot.lane.b32.xlu0 %v2613, 127
    %v2919 = vpop.permute.xlu0 %2918
    %2920 = vrot.lane.b32.xlu0 %v2614, 127
    %v2921 = vpop.permute.xlu0 %2920
    %2922 = vrot.lane.b32.xlu0 %v2615, 127
    %v2923 = vpop.permute.xlu0 %2922
    %2924 = vrot.lane.b32.xlu0 %v2616, 127
    %v2925 = vpop.permute.xlu0 %2924
    %2926 = vrot.lane.b32.xlu0 %v2617, 127
    %v2927 = vpop.permute.xlu0 %2926
    %2928 = vrot.lane.b32.xlu0 %v2618, 127
    %v2929 = vpop.permute.xlu0 %2928
    %2930 = vrot.lane.b32.xlu0 %v2619, 127
    %v2931 = vpop.permute.xlu0 %2930
    %2932 = vrot.lane.b32.xlu0 %v2620, 127
    %v2933 = vpop.permute.xlu0 %2932
    %2934 = vrot.lane.b32.xlu0 %v2621, 127
    %v2935 = vpop.permute.xlu0 %2934
    %2936 = vrot.lane.b32.xlu0 %v2622, 127
    %v2937 = vpop.permute.xlu0 %2936
    %2938 = vrot.lane.b32.xlu0 %v2623, 127
    %v2939 = vpop.permute.xlu0 %2938
    %2940 = vrot.lane.b32.xlu0 %v2624, 127
    %v2941 = vpop.permute.xlu0 %2940
    %2942 = vrot.lane.b32.xlu0 %v2625, 127
    %v2943 = vpop.permute.xlu0 %2942
    %2944 = vrot.lane.b32.xlu0 %v2626, 127
    %v2945 = vpop.permute.xlu0 %2944
    %2946 = vrot.lane.b32.xlu0 %v2627, 127
    %v2947 = vpop.permute.xlu0 %2946
    %2948 = vrot.lane.b32.xlu0 %v2628, 127
    %v2949 = vpop.permute.xlu0 %2948
    %2950 = vrot.lane.b32.xlu0 %v2629, 127
    %v2951 = vpop.permute.xlu0 %2950
    %2952 = vrot.lane.b32.xlu0 %v2630, 127
    %v2953 = vpop.permute.xlu0 %2952
    %2954 = vrot.lane.b32.xlu0 %v2631, 127
    %v2955 = vpop.permute.xlu0 %2954
    %2956 = vrot.lane.b32.xlu0 %v2632, 127
    %v2957 = vpop.permute.xlu0 %2956
    %2958 = vrot.lane.b32.xlu0 %v2633, 127
    %v2959 = vpop.permute.xlu0 %2958
    %2960 = vrot.lane.b32.xlu0 %v2634, 127
    %v2961 = vpop.permute.xlu0 %2960
    %2962 = vrot.lane.b32.xlu0 %v2635, 127
    %v2963 = vpop.permute.xlu0 %2962
    %2964 = vrot.lane.b32.xlu0 %v2636, 127
    %v2965 = vpop.permute.xlu0 %2964
    %2966 = vrot.lane.b32.xlu0 %v2637, 127
    %v2967 = vpop.permute.xlu0 %2966
    %2968 = vrot.lane.b32.xlu0 %v2638, 127
    %v2969 = vpop.permute.xlu0 %2968
    %2970 = vrot.lane.b32.xlu0 %v2639, 127
    %v2971 = vpop.permute.xlu0 %2970
    %2972 = vrot.lane.b32.xlu0 %v2640, 127
    %v2973 = vpop.permute.xlu0 %2972
    %2974 = vrot.lane.b32.xlu0 %v2641, 127
    %v2975 = vpop.permute.xlu0 %2974
    %vm2976 = vcmp.lt.s32.totalorder %v2709, 127
    %v2977 = vsel %vm2976, %v2973, %v2975
    %v2978 = vsel %vm2976, %v2971, %v2973
    %v2979 = vsel %vm2976, %v2969, %v2971
    %v2980 = vsel %vm2976, %v2967, %v2969
    %v2981 = vsel %vm2976, %v2965, %v2967
    %v2982 = vsel %vm2976, %v2963, %v2965
    %v2983 = vsel %vm2976, %v2961, %v2963
    %v2984 = vsel %vm2976, %v2959, %v2961
    %v2985 = vsel %vm2976, %v2957, %v2959
    %v2986 = vsel %vm2976, %v2955, %v2957
    %v2987 = vsel %vm2976, %v2953, %v2955
    %v2988 = vsel %vm2976, %v2951, %v2953
    %v2989 = vsel %vm2976, %v2949, %v2951
    %v2990 = vsel %vm2976, %v2947, %v2949
    %v2991 = vsel %vm2976, %v2945, %v2947
    %v2992 = vsel %vm2976, %v2943, %v2945
    %v2993 = vsel %vm2976, %v2941, %v2943
    %v2994 = vsel %vm2976, %v2939, %v2941
    %v2995 = vsel %vm2976, %v2937, %v2939
    %v2996 = vsel %vm2976, %v2935, %v2937
    %v2997 = vsel %vm2976, %v2933, %v2935
    %v2998 = vsel %vm2976, %v2931, %v2933
    %v2999 = vsel %vm2976, %v2929, %v2931
    %v3000 = vsel %vm2976, %v2927, %v2929
    %v3001 = vsel %vm2976, %v2925, %v2927
    %v3002 = vsel %vm2976, %v2923, %v2925
    %v3003 = vsel %vm2976, %v2921, %v2923
    %v3004 = vsel %vm2976, %v2919, %v2921
    %v3005 = vsel %vm2976, %v2917, %v2919
    %v3006 = vsel %vm2976, %v2915, %v2917
    %v3007 = vsel %vm2976, %v2913, %v2915
    %v3008 = vsel %vm2976, %v2911, %v2913
    %v3009 = vsel %vm2976, %v2975, %v2911
    %v3010 = vadd.f32 %v2877, %v3008
    %v3011 = vadd.f32 %v2878, %v3007
    %v3012 = vadd.f32 %v2879, %v3006
    %v3013 = vadd.f32 %v2880, %v3005
    %v3014 = vadd.f32 %v2881, %v3004
    %v3015 = vadd.f32 %v2882, %v3003
    %v3016 = vadd.f32 %v2883, %v3002
    %v3017 = vadd.f32 %v2884, %v3001
    %v3018 = vadd.f32 %v2885, %v3000
    %v3019 = vadd.f32 %v2886, %v2999
    %v3020 = vadd.f32 %v2887, %v2998
    %v3021 = vadd.f32 %v2888, %v2997
    %v3022 = vadd.f32 %v2889, %v2996
    %v3023 = vadd.f32 %v2890, %v2995
    %v3024 = vadd.f32 %v2891, %v2994
    %v3025 = vadd.f32 %v2892, %v2993
    %v3026 = vadd.f32 %v2893, %v2992
    %v3027 = vadd.f32 %v2894, %v2991
    %v3028 = vadd.f32 %v2895, %v2990
    %v3029 = vadd.f32 %v2896, %v2989
    %v3030 = vadd.f32 %v2897, %v2988
    %v3031 = vadd.f32 %v2898, %v2987
    %v3032 = vadd.f32 %v2899, %v2986
    %v3033 = vadd.f32 %v2900, %v2985
    %v3034 = vadd.f32 %v2901, %v2984
    %v3035 = vadd.f32 %v2902, %v2983
    %v3036 = vadd.f32 %v2903, %v2982
    %v3037 = vadd.f32 %v2904, %v2981
    %v3038 = vadd.f32 %v2905, %v2980
    %v3039 = vadd.f32 %v2906, %v2979
    %v3040 = vadd.f32 %v2907, %v2978
    %v3041 = vadd.f32 %v2908, %v2977
    %v3042 = vadd.f32 %v2909, %v3009
    %v3043 = vmul.f32 %v3010, 2.5e-05
    %v3044 = vmul.f32 %v3011, 2.5e-05
    %v3045 = vmul.f32 %v3012, 2.5e-05
    %v3046 = vmul.f32 %v3013, 2.5e-05
    %v3047 = vmul.f32 %v3014, 2.5e-05
    %v3048 = vmul.f32 %v3015, 2.5e-05
    %v3049 = vmul.f32 %v3016, 2.5e-05
    %v3050 = vmul.f32 %v3017, 2.5e-05
    %v3051 = vmul.f32 %v3018, 2.5e-05
    %v3052 = vmul.f32 %v3019, 2.5e-05
    %v3053 = vmul.f32 %v3020, 2.5e-05
    %v3054 = vmul.f32 %v3021, 2.5e-05
    %v3055 = vmul.f32 %v3022, 2.5e-05
    %v3056 = vmul.f32 %v3023, 2.5e-05
    %v3057 = vmul.f32 %v3024, 2.5e-05
    %v3058 = vmul.f32 %v3025, 2.5e-05
    %v3059 = vmul.f32 %v3026, 2.5e-05
    %v3060 = vmul.f32 %v3027, 2.5e-05
    %v3061 = vmul.f32 %v3028, 2.5e-05
    %v3062 = vmul.f32 %v3029, 2.5e-05
    %v3063 = vmul.f32 %v3030, 2.5e-05
    %v3064 = vmul.f32 %v3031, 2.5e-05
    %v3065 = vmul.f32 %v3032, 2.5e-05
    %v3066 = vmul.f32 %v3033, 2.5e-05
    %v3067 = vmul.f32 %v3034, 2.5e-05
    %v3068 = vmul.f32 %v3035, 2.5e-05
    %v3069 = vmul.f32 %v3036, 2.5e-05
    %v3070 = vmul.f32 %v3037, 2.5e-05
    %v3071 = vmul.f32 %v3038, 2.5e-05
    %v3072 = vmul.f32 %v3039, 2.5e-05
    %v3073 = vmul.f32 %v3040, 2.5e-05
    %v3074 = vmul.f32 %v3041, 2.5e-05
    %v3075 = vmul.f32 %v3042, 2.5e-05
    %v3076 = vadd.f32 %v3043, 2.0
    %v3077 = vadd.f32 %v3044, 2.0
    %v3078 = vadd.f32 %v3045, 2.0
    %v3079 = vadd.f32 %v3046, 2.0
    %v3080 = vadd.f32 %v3047, 2.0
    %v3081 = vadd.f32 %v3048, 2.0
    %v3082 = vadd.f32 %v3049, 2.0
    %v3083 = vadd.f32 %v3050, 2.0
    %v3084 = vadd.f32 %v3051, 2.0
    %v3085 = vadd.f32 %v3052, 2.0
    %v3086 = vadd.f32 %v3053, 2.0
    %v3087 = vadd.f32 %v3054, 2.0
    %v3088 = vadd.f32 %v3055, 2.0
    %v3089 = vadd.f32 %v3056, 2.0
    %v3090 = vadd.f32 %v3057, 2.0
    %v3091 = vadd.f32 %v3058, 2.0
    %v3092 = vadd.f32 %v3059, 2.0
    %v3093 = vadd.f32 %v3060, 2.0
    %v3094 = vadd.f32 %v3061, 2.0
    %v3095 = vadd.f32 %v3062, 2.0
    %v3096 = vadd.f32 %v3063, 2.0
    %v3097 = vadd.f32 %v3064, 2.0
    %v3098 = vadd.f32 %v3065, 2.0
    %v3099 = vadd.f32 %v3066, 2.0
    %v3100 = vadd.f32 %v3067, 2.0
    %v3101 = vadd.f32 %v3068, 2.0
    %v3102 = vadd.f32 %v3069, 2.0
    %v3103 = vadd.f32 %v3070, 2.0
    %v3104 = vadd.f32 %v3071, 2.0
    %v3105 = vadd.f32 %v3072, 2.0
    %v3106 = vadd.f32 %v3073, 2.0
    %v3107 = vadd.f32 %v3074, 2.0
    %v3108 = vadd.f32 %v3075, 2.0
    %v3109 = vrsqrt.pop %v3076
    %v3110 = vrsqrt.pop %v3077
    %v3111 = vrsqrt.pop %v3078
    %v3112 = vrsqrt.pop %v3079
    %v3113 = vrsqrt.pop %v3080
    %v3114 = vrsqrt.pop %v3081
    %v3115 = vrsqrt.pop %v3082
    %v3116 = vrsqrt.pop %v3083
    %v3117 = vrsqrt.pop %v3084
    %v3118 = vrsqrt.pop %v3085
    %v3119 = vrsqrt.pop %v3086
    %v3120 = vrsqrt.pop %v3087
    %v3121 = vrsqrt.pop %v3088
    %v3122 = vrsqrt.pop %v3089
    %v3123 = vrsqrt.pop %v3090
    %v3124 = vrsqrt.pop %v3091
    %v3125 = vrsqrt.pop %v3092
    %v3126 = vrsqrt.pop %v3093
    %v3127 = vrsqrt.pop %v3094
    %v3128 = vrsqrt.pop %v3095
    %v3129 = vrsqrt.pop %v3096
    %v3130 = vrsqrt.pop %v3097
    %v3131 = vrsqrt.pop %v3098
    %v3132 = vrsqrt.pop %v3099
    %v3133 = vrsqrt.pop %v3100
    %v3134 = vrsqrt.pop %v3101
    %v3135 = vrsqrt.pop %v3102
    %v3136 = vrsqrt.pop %v3103
    %v3137 = vrsqrt.pop %v3104
    %v3138 = vrsqrt.pop %v3105
    %v3139 = vrsqrt.pop %v3106
    %v3140 = vrsqrt.pop %v3107
    %v3141 = vrsqrt.pop %v3108
    %v3142 = vrsqrt.pop %v3109
    %v3143 = vmul.f32 %v3109, %v3142
    %vm3144 = vcmp.eq.f32.partialorder %v3109, inf
    %v3145 = vsel %vm3144, %v3109, %v3143
    %vm3146 = vcmp.eq.f32.partialorder %v3109, 0.0
    %v3147 = vand.u32 %v3109, 2147483648
    %v3148 = vsel %vm3146, %v3147, %v3145
    %v3149 = vrsqrt.pop %v3110
    %v3150 = vmul.f32 %v3110, %v3149
    %vm3151 = vcmp.eq.f32.partialorder %v3110, inf
    %v3152 = vsel %vm3151, %v3110, %v3150
    %vm3153 = vcmp.eq.f32.partialorder %v3110, 0.0
    %v3154 = vand.u32 %v3110, 2147483648
    %v3155 = vsel %vm3153, %v3154, %v3152
    %v3156 = vrsqrt.pop %v3111
    %v3157 = vmul.f32 %v3111, %v3156
    %vm3158 = vcmp.eq.f32.partialorder %v3111, inf
    %v3159 = vsel %vm3158, %v3111, %v3157
    %vm3160 = vcmp.eq.f32.partialorder %v3111, 0.0
    %v3161 = vand.u32 %v3111, 2147483648
    %v3162 = vsel %vm3160, %v3161, %v3159
    %v3163 = vrsqrt.pop %v3112
    %v3164 = vmul.f32 %v3112, %v3163
    %vm3165 = vcmp.eq.f32.partialorder %v3112, inf
    %v3166 = vsel %vm3165, %v3112, %v3164
    %vm3167 = vcmp.eq.f32.partialorder %v3112, 0.0
    %v3168 = vand.u32 %v3112, 2147483648
    %v3169 = vsel %vm3167, %v3168, %v3166
    %v3170 = vrsqrt.pop %v3113
    %v3171 = vmul.f32 %v3113, %v3170
    %vm3172 = vcmp.eq.f32.partialorder %v3113, inf
    %v3173 = vsel %vm3172, %v3113, %v3171
    %vm3174 = vcmp.eq.f32.partialorder %v3113, 0.0
    %v3175 = vand.u32 %v3113, 2147483648
    %v3176 = vsel %vm3174, %v3175, %v3173
    %v3177 = vrsqrt.pop %v3114
    %v3178 = vmul.f32 %v3114, %v3177
    %vm3179 = vcmp.eq.f32.partialorder %v3114, inf
    %v3180 = vsel %vm3179, %v3114, %v3178
    %vm3181 = vcmp.eq.f32.partialorder %v3114, 0.0
    %v3182 = vand.u32 %v3114, 2147483648
    %v3183 = vsel %vm3181, %v3182, %v3180
    %v3184 = vrsqrt.pop %v3115
    %v3185 = vmul.f32 %v3115, %v3184
    %vm3186 = vcmp.eq.f32.partialorder %v3115, inf
    %v3187 = vsel %vm3186, %v3115, %v3185
    %vm3188 = vcmp.eq.f32.partialorder %v3115, 0.0
    %v3189 = vand.u32 %v3115, 2147483648
    %v3190 = vsel %vm3188, %v3189, %v3187
    %v3191 = vrsqrt.pop %v3116
    %v3192 = vmul.f32 %v3116, %v3191
    %vm3193 = vcmp.eq.f32.partialorder %v3116, inf
    %v3194 = vsel %vm3193, %v3116, %v3192
    %vm3195 = vcmp.eq.f32.partialorder %v3116, 0.0
    %v3196 = vand.u32 %v3116, 2147483648
    %v3197 = vsel %vm3195, %v3196, %v3194
    %v3198 = vrsqrt.pop %v3117
    %v3199 = vmul.f32 %v3117, %v3198
    %vm3200 = vcmp.eq.f32.partialorder %v3117, inf
    %v3201 = vsel %vm3200, %v3117, %v3199
    %vm3202 = vcmp.eq.f32.partialorder %v3117, 0.0
    %v3203 = vand.u32 %v3117, 2147483648
    %v3204 = vsel %vm3202, %v3203, %v3201
    %v3205 = vrsqrt.pop %v3118
    %v3206 = vmul.f32 %v3118, %v3205
    %vm3207 = vcmp.eq.f32.partialorder %v3118, inf
    %v3208 = vsel %vm3207, %v3118, %v3206
    %vm3209 = vcmp.eq.f32.partialorder %v3118, 0.0
    %v3210 = vand.u32 %v3118, 2147483648
    %v3211 = vsel %vm3209, %v3210, %v3208
    %v3212 = vrsqrt.pop %v3119
    %v3213 = vmul.f32 %v3119, %v3212
    %vm3214 = vcmp.eq.f32.partialorder %v3119, inf
    %v3215 = vsel %vm3214, %v3119, %v3213
    %vm3216 = vcmp.eq.f32.partialorder %v3119, 0.0
    %v3217 = vand.u32 %v3119, 2147483648
    %v3218 = vsel %vm3216, %v3217, %v3215
    %v3219 = vrsqrt.pop %v3120
    %v3220 = vmul.f32 %v3120, %v3219
    %vm3221 = vcmp.eq.f32.partialorder %v3120, inf
    %v3222 = vsel %vm3221, %v3120, %v3220
    %vm3223 = vcmp.eq.f32.partialorder %v3120, 0.0
    %v3224 = vand.u32 %v3120, 2147483648
    %v3225 = vsel %vm3223, %v3224, %v3222
    %v3226 = vrsqrt.pop %v3121
    %v3227 = vmul.f32 %v3121, %v3226
    %vm3228 = vcmp.eq.f32.partialorder %v3121, inf
    %v3229 = vsel %vm3228, %v3121, %v3227
    %vm3230 = vcmp.eq.f32.partialorder %v3121, 0.0
    %v3231 = vand.u32 %v3121, 2147483648
    %v3232 = vsel %vm3230, %v3231, %v3229
    %v3233 = vrsqrt.pop %v3122
    %v3234 = vmul.f32 %v3122, %v3233
    %vm3235 = vcmp.eq.f32.partialorder %v3122, inf
    %v3236 = vsel %vm3235, %v3122, %v3234
    %vm3237 = vcmp.eq.f32.partialorder %v3122, 0.0
    %v3238 = vand.u32 %v3122, 2147483648
    %v3239 = vsel %vm3237, %v3238, %v3236
    %v3240 = vrsqrt.pop %v3123
    %v3241 = vmul.f32 %v3123, %v3240
    %vm3242 = vcmp.eq.f32.partialorder %v3123, inf
    %v3243 = vsel %vm3242, %v3123, %v3241
    %vm3244 = vcmp.eq.f32.partialorder %v3123, 0.0
    %v3245 = vand.u32 %v3123, 2147483648
    %v3246 = vsel %vm3244, %v3245, %v3243
    %v3247 = vrsqrt.pop %v3124
    %v3248 = vmul.f32 %v3124, %v3247
    %vm3249 = vcmp.eq.f32.partialorder %v3124, inf
    %v3250 = vsel %vm3249, %v3124, %v3248
    %vm3251 = vcmp.eq.f32.partialorder %v3124, 0.0
    %v3252 = vand.u32 %v3124, 2147483648
    %v3253 = vsel %vm3251, %v3252, %v3250
    %v3254 = vrsqrt.pop %v3125
    %v3255 = vmul.f32 %v3125, %v3254
    %vm3256 = vcmp.eq.f32.partialorder %v3125, inf
    %v3257 = vsel %vm3256, %v3125, %v3255
    %vm3258 = vcmp.eq.f32.partialorder %v3125, 0.0
    %v3259 = vand.u32 %v3125, 2147483648
    %v3260 = vsel %vm3258, %v3259, %v3257
    %v3261 = vrsqrt.pop %v3126
    %v3262 = vmul.f32 %v3126, %v3261
    %vm3263 = vcmp.eq.f32.partialorder %v3126, inf
    %v3264 = vsel %vm3263, %v3126, %v3262
    %vm3265 = vcmp.eq.f32.partialorder %v3126, 0.0
    %v3266 = vand.u32 %v3126, 2147483648
    %v3267 = vsel %vm3265, %v3266, %v3264
    %v3268 = vrsqrt.pop %v3127
    %v3269 = vmul.f32 %v3127, %v3268
    %vm3270 = vcmp.eq.f32.partialorder %v3127, inf
    %v3271 = vsel %vm3270, %v3127, %v3269
    %vm3272 = vcmp.eq.f32.partialorder %v3127, 0.0
    %v3273 = vand.u32 %v3127, 2147483648
    %v3274 = vsel %vm3272, %v3273, %v3271
    %v3275 = vrsqrt.pop %v3128
    %v3276 = vmul.f32 %v3128, %v3275
    %vm3277 = vcmp.eq.f32.partialorder %v3128, inf
    %v3278 = vsel %vm3277, %v3128, %v3276
    %vm3279 = vcmp.eq.f32.partialorder %v3128, 0.0
    %v3280 = vand.u32 %v3128, 2147483648
    %v3281 = vsel %vm3279, %v3280, %v3278
    %v3282 = vrsqrt.pop %v3129
    %v3283 = vmul.f32 %v3129, %v3282
    %vm3284 = vcmp.eq.f32.partialorder %v3129, inf
    %v3285 = vsel %vm3284, %v3129, %v3283
    %vm3286 = vcmp.eq.f32.partialorder %v3129, 0.0
    %v3287 = vand.u32 %v3129, 2147483648
    %v3288 = vsel %vm3286, %v3287, %v3285
    %v3289 = vrsqrt.pop %v3130
    %v3290 = vmul.f32 %v3130, %v3289
    %vm3291 = vcmp.eq.f32.partialorder %v3130, inf
    %v3292 = vsel %vm3291, %v3130, %v3290
    %vm3293 = vcmp.eq.f32.partialorder %v3130, 0.0
    %v3294 = vand.u32 %v3130, 2147483648
    %v3295 = vsel %vm3293, %v3294, %v3292
    %v3296 = vrsqrt.pop %v3131
    %v3297 = vmul.f32 %v3131, %v3296
    %vm3298 = vcmp.eq.f32.partialorder %v3131, inf
    %v3299 = vsel %vm3298, %v3131, %v3297
    %vm3300 = vcmp.eq.f32.partialorder %v3131, 0.0
    %v3301 = vand.u32 %v3131, 2147483648
    %v3302 = vsel %vm3300, %v3301, %v3299
    %v3303 = vrsqrt.pop %v3132
    %v3304 = vmul.f32 %v3132, %v3303
    %vm3305 = vcmp.eq.f32.partialorder %v3132, inf
    %v3306 = vsel %vm3305, %v3132, %v3304
    %vm3307 = vcmp.eq.f32.partialorder %v3132, 0.0
    %v3308 = vand.u32 %v3132, 2147483648
    %v3309 = vsel %vm3307, %v3308, %v3306
    %v3310 = vrsqrt.pop %v3133
    %v3311 = vmul.f32 %v3133, %v3310
    %vm3312 = vcmp.eq.f32.partialorder %v3133, inf
    %v3313 = vsel %vm3312, %v3133, %v3311
    %vm3314 = vcmp.eq.f32.partialorder %v3133, 0.0
    %v3315 = vand.u32 %v3133, 2147483648
    %v3316 = vsel %vm3314, %v3315, %v3313
    %v3317 = vrsqrt.pop %v3134
    %v3318 = vmul.f32 %v3134, %v3317
    %vm3319 = vcmp.eq.f32.partialorder %v3134, inf
    %v3320 = vsel %vm3319, %v3134, %v3318
    %vm3321 = vcmp.eq.f32.partialorder %v3134, 0.0
    %v3322 = vand.u32 %v3134, 2147483648
    %v3323 = vsel %vm3321, %v3322, %v3320
    %v3324 = vrsqrt.pop %v3135
    %v3325 = vmul.f32 %v3135, %v3324
    %vm3326 = vcmp.eq.f32.partialorder %v3135, inf
    %v3327 = vsel %vm3326, %v3135, %v3325
    %vm3328 = vcmp.eq.f32.partialorder %v3135, 0.0
    %v3329 = vand.u32 %v3135, 2147483648
    %v3330 = vsel %vm3328, %v3329, %v3327
    %v3331 = vrsqrt.pop %v3136
    %v3332 = vmul.f32 %v3136, %v3331
    %vm3333 = vcmp.eq.f32.partialorder %v3136, inf
    %v3334 = vsel %vm3333, %v3136, %v3332
    %vm3335 = vcmp.eq.f32.partialorder %v3136, 0.0
    %v3336 = vand.u32 %v3136, 2147483648
    %v3337 = vsel %vm3335, %v3336, %v3334
    %v3338 = vrsqrt.pop %v3137
    %v3339 = vmul.f32 %v3137, %v3338
    %vm3340 = vcmp.eq.f32.partialorder %v3137, inf
    %v3341 = vsel %vm3340, %v3137, %v3339
    %vm3342 = vcmp.eq.f32.partialorder %v3137, 0.0
    %v3343 = vand.u32 %v3137, 2147483648
    %v3344 = vsel %vm3342, %v3343, %v3341
    %v3345 = vrsqrt.pop %v3138
    %v3346 = vmul.f32 %v3138, %v3345
    %vm3347 = vcmp.eq.f32.partialorder %v3138, inf
    %v3348 = vsel %vm3347, %v3138, %v3346
    %vm3349 = vcmp.eq.f32.partialorder %v3138, 0.0
    %v3350 = vand.u32 %v3138, 2147483648
    %v3351 = vsel %vm3349, %v3350, %v3348
    %v3352 = vrsqrt.pop %v3139
    %v3353 = vmul.f32 %v3139, %v3352
    %vm3354 = vcmp.eq.f32.partialorder %v3139, inf
    %v3355 = vsel %vm3354, %v3139, %v3353
    %vm3356 = vcmp.eq.f32.partialorder %v3139, 0.0
    %v3357 = vand.u32 %v3139, 2147483648
    %v3358 = vsel %vm3356, %v3357, %v3355
    %v3359 = vrsqrt.pop %v3140
    %v3360 = vmul.f32 %v3140, %v3359
    %vm3361 = vcmp.eq.f32.partialorder %v3140, inf
    %v3362 = vsel %vm3361, %v3140, %v3360
    %vm3363 = vcmp.eq.f32.partialorder %v3140, 0.0
    %v3364 = vand.u32 %v3140, 2147483648
    %v3365 = vsel %vm3363, %v3364, %v3362
    %v3366 = vrsqrt.pop %v3141
    %v3367 = vmul.f32 %v3141, %v3366
    %vm3368 = vcmp.eq.f32.partialorder %v3141, inf
    %v3369 = vsel %vm3368, %v3141, %v3367
    %vm3370 = vcmp.eq.f32.partialorder %v3141, 0.0
    %v3371 = vand.u32 %v3141, 2147483648
    %v3372 = vsel %vm3370, %v3371, %v3369
    %v3373 = vmul.f32 %v3109, %v3148
    %v3374 = vmul.f32 %v3110, %v3155
    %v3375 = vmul.f32 %v3111, %v3162
    %v3376 = vmul.f32 %v3112, %v3169
    %v3377 = vmul.f32 %v3113, %v3176
    %v3378 = vmul.f32 %v3114, %v3183
    %v3379 = vmul.f32 %v3115, %v3190
    %v3380 = vmul.f32 %v3116, %v3197
    %v3381 = vmul.f32 %v3117, %v3204
    %v3382 = vmul.f32 %v3118, %v3211
    %v3383 = vmul.f32 %v3119, %v3218
    %v3384 = vmul.f32 %v3120, %v3225
    %v3385 = vmul.f32 %v3121, %v3232
    %v3386 = vmul.f32 %v3122, %v3239
    %v3387 = vmul.f32 %v3123, %v3246
    %v3388 = vmul.f32 %v3124, %v3253
    %v3389 = vmul.f32 %v3125, %v3260
    %v3390 = vmul.f32 %v3126, %v3267
    %v3391 = vmul.f32 %v3127, %v3274
    %v3392 = vmul.f32 %v3128, %v3281
    %v3393 = vmul.f32 %v3129, %v3288
    %v3394 = vmul.f32 %v3130, %v3295
    %v3395 = vmul.f32 %v3131, %v3302
    %v3396 = vmul.f32 %v3132, %v3309
    %v3397 = vmul.f32 %v3133, %v3316
    %v3398 = vmul.f32 %v3134, %v3323
    %v3399 = vmul.f32 %v3135, %v3330
    %v3400 = vmul.f32 %v3136, %v3337
    %v3401 = vmul.f32 %v3137, %v3344
    %v3402 = vmul.f32 %v3138, %v3351
    %v3403 = vmul.f32 %v3139, %v3358
    %v3404 = vmul.f32 %v3140, %v3365
    %v3405 = vmul.f32 %v3141, %v3372
    %v3406 = vmul.f32 %v2576, %v3373
    %v3407 = vmul.f32 %v2577, %v3374
    %v3408 = vmul.f32 %v2578, %v3375
    %v3409 = vmul.f32 %v2579, %v3376
    %v3410 = vmul.f32 %v2580, %v3377
    %v3411 = vmul.f32 %v2581, %v3378
    %v3412 = vmul.f32 %v2582, %v3379
    %v3413 = vmul.f32 %v2583, %v3380
    %v3414 = vmul.f32 %v2584, %v3381
    %v3415 = vmul.f32 %v2585, %v3382
    %v3416 = vmul.f32 %v2586, %v3383
    %v3417 = vmul.f32 %v2587, %v3384
    %v3418 = vmul.f32 %v2588, %v3385
    %v3419 = vmul.f32 %v2589, %v3386
    %v3420 = vmul.f32 %v2590, %v3387
    %v3421 = vmul.f32 %v2591, %v3388
    %v3422 = vmul.f32 %v2592, %v3389
    %v3423 = vmul.f32 %v2593, %v3390
    %v3424 = vmul.f32 %v2594, %v3391
    %v3425 = vmul.f32 %v2595, %v3392
    %v3426 = vmul.f32 %v2596, %v3393
    %v3427 = vmul.f32 %v2597, %v3394
    %v3428 = vmul.f32 %v2598, %v3395
    %v3429 = vmul.f32 %v2599, %v3396
    %v3430 = vmul.f32 %v2600, %v3397
    %v3431 = vmul.f32 %v2601, %v3398
    %v3432 = vmul.f32 %v2602, %v3399
    %v3433 = vmul.f32 %v2603, %v3400
    %v3434 = vmul.f32 %v2604, %v3401
    %v3435 = vmul.f32 %v2605, %v3402
    %v3436 = vmul.f32 %v2606, %v3403
    %v3437 = vmul.f32 %v2607, %v3404
    %v3438 = vmul.f32 %v2608, %v3405
    %v3439 = vpack.c.bf16 %v3406, %v3406
    %v3440 = vpack.c.bf16 %v3407, %v3407
    %v3441 = vpack.c.bf16 %v3408, %v3408
    %v3442 = vpack.c.bf16 %v3409, %v3409
    %v3443 = vpack.c.bf16 %v3410, %v3410
    %v3444 = vpack.c.bf16 %v3411, %v3411
    %v3445 = vpack.c.bf16 %v3412, %v3412
    %v3446 = vpack.c.bf16 %v3413, %v3413
    %v3447 = vpack.c.bf16 %v3414, %v3414
    %v3448 = vpack.c.bf16 %v3415, %v3415
    %v3449 = vpack.c.bf16 %v3416, %v3416
    %v3450 = vpack.c.bf16 %v3417, %v3417
    %v3451 = vpack.c.bf16 %v3418, %v3418
    %v3452 = vpack.c.bf16 %v3419, %v3419
    %v3453 = vpack.c.bf16 %v3420, %v3420
    %v3454 = vpack.c.bf16 %v3421, %v3421
    %v3455 = vpack.c.bf16 %v3422, %v3422
    %v3456 = vpack.c.bf16 %v3423, %v3423
    %v3457 = vpack.c.bf16 %v3424, %v3424
    %v3458 = vpack.c.bf16 %v3425, %v3425
    %v3459 = vpack.c.bf16 %v3426, %v3426
    %v3460 = vpack.c.bf16 %v3427, %v3427
    %v3461 = vpack.c.bf16 %v3428, %v3428
    %v3462 = vpack.c.bf16 %v3429, %v3429
    %v3463 = vpack.c.bf16 %v3430, %v3430
    %v3464 = vpack.c.bf16 %v3431, %v3431
    %v3465 = vpack.c.bf16 %v3432, %v3432
    %v3466 = vpack.c.bf16 %v3433, %v3433
    %v3467 = vpack.c.bf16 %v3434, %v3434
    %v3468 = vpack.c.bf16 %v3435, %v3435
    %v3469 = vpack.c.bf16 %v3436, %v3436
    %v3470 = vpack.c.bf16 %v3437, %v3437
    %v3471 = vpack.c.bf16 %v3438, %v3438
    %v3472 = vld [vmem:[#allocation6] sm:$0xf]
    %v3473 = vld [vmem:[#allocation6 + $0x4] sm:$0xf]
    %v3474 = vld [vmem:[#allocation6 + $0x8] sm:$0xf]
    %v3475 = vld [vmem:[#allocation6 + $0xc] sm:$0xf]
    %v3476 = vld [vmem:[#allocation6 + $0x10] sm:$0xf]
    %v3477 = vld [vmem:[#allocation6 + $0x14] sm:$0xf]
    %v3478 = vld [vmem:[#allocation6 + $0x18] sm:$0xf]
    %v3479 = vld [vmem:[#allocation6 + $0x1c] sm:$0xf]
    %v3480 = vld [vmem:[#allocation6 + $0x20] sm:$0xf]
    %v3481 = vld [vmem:[#allocation6 + $0x24] sm:$0xf]
    %v3482 = vld [vmem:[#allocation6 + $0x28] sm:$0xf]
    %v3483 = vld [vmem:[#allocation6 + $0x2c] sm:$0xf]
    %v3484 = vld [vmem:[#allocation6 + $0x30] sm:$0xf]
    %v3485 = vld [vmem:[#allocation6 + $0x34] sm:$0xf]
    %v3486 = vld [vmem:[#allocation6 + $0x38] sm:$0xf]
    %v3487 = vld [vmem:[#allocation6 + $0x3c] sm:$0xf]
    %v3488 = vld [vmem:[#allocation6 + $0x40] sm:$0xf]
    %v3489 = vld [vmem:[#allocation6 + $0x44] sm:$0xf]
    %v3490 = vld [vmem:[#allocation6 + $0x48] sm:$0xf]
    %v3491 = vld [vmem:[#allocation6 + $0x4c] sm:$0xf]
    %v3492 = vld [vmem:[#allocation6 + $0x50] sm:$0xf]
    %v3493 = vld [vmem:[#allocation6 + $0x54] sm:$0xf]
    %v3494 = vld [vmem:[#allocation6 + $0x58] sm:$0xf]
    %v3495 = vld [vmem:[#allocation6 + $0x5c] sm:$0xf]
    %v3496 = vld [vmem:[#allocation6 + $0x60] sm:$0xf]
    %v3497 = vld [vmem:[#allocation6 + $0x64] sm:$0xf]
    %v3498 = vld [vmem:[#allocation6 + $0x68] sm:$0xf]
    %v3499 = vld [vmem:[#allocation6 + $0x6c] sm:$0xf]
    %v3500 = vld [vmem:[#allocation6 + $0x70] sm:$0xf]
    %v3501 = vld [vmem:[#allocation6 + $0x74] sm:$0xf]
    %v3502 = vld [vmem:[#allocation6 + $0x78] sm:$0xf]
    %v3503 = vld [vmem:[#allocation6 + $0x7c] sm:$0xf]
    %v3504 = vld [vmem:[#allocation6 + $0x80] sm:$0xf]
    %v3505 = vld [vmem:[#allocation6 + $0x84] sm:$0xf]
    %v3506 = vld [vmem:[#allocation6 + $0x88] sm:$0xf]
    %v3507 = vld [vmem:[#allocation6 + $0x8c] sm:$0xf]
    %v3508 = vld [vmem:[#allocation6 + $0x90] sm:$0xf]
    %v3509 = vld [vmem:[#allocation6 + $0x94] sm:$0xf]
    %v3510 = vld [vmem:[#allocation6 + $0x98] sm:$0xf]
    %v3511 = vld [vmem:[#allocation6 + $0x9c] sm:$0xf]
    %v3512 = vld [vmem:[#allocation6 + $0xa0] sm:$0xf]
    %v3513 = vld [vmem:[#allocation6 + $0xa4] sm:$0xf]
    %v3514 = vld [vmem:[#allocation6 + $0xa8] sm:$0xf]
    %v3515 = vld [vmem:[#allocation6 + $0xac] sm:$0xf]
    %v3516 = vld [vmem:[#allocation6 + $0xb0] sm:$0xf]
    %v3517 = vld [vmem:[#allocation6 + $0xb4] sm:$0xf]
    %v3518 = vld [vmem:[#allocation6 + $0xb8] sm:$0xf]
    %v3519 = vld [vmem:[#allocation6 + $0xbc] sm:$0xf]
    %v3520 = vld [vmem:[#allocation6 + $0xc0] sm:$0xf]
    %v3521 = vld [vmem:[#allocation6 + $0xc4] sm:$0xf]
    %v3522 = vld [vmem:[#allocation6 + $0xc8] sm:$0xf]
    %v3523 = vld [vmem:[#allocation6 + $0xcc] sm:$0xf]
    %v3524 = vld [vmem:[#allocation6 + $0xd0] sm:$0xf]
    %v3525 = vld [vmem:[#allocation6 + $0xd4] sm:$0xf]
    %v3526 = vld [vmem:[#allocation6 + $0xd8] sm:$0xf]
    %v3527 = vld [vmem:[#allocation6 + $0xdc] sm:$0xf]
    %v3528 = vld [vmem:[#allocation6 + $0xe0] sm:$0xf]
    %v3529 = vld [vmem:[#allocation6 + $0xe4] sm:$0xf]
    %v3530 = vld [vmem:[#allocation6 + $0xe8] sm:$0xf]
    %v3531 = vld [vmem:[#allocation6 + $0xec] sm:$0xf]
    %v3532 = vld [vmem:[#allocation6 + $0xf0] sm:$0xf]
    %v3533 = vld [vmem:[#allocation6 + $0xf4] sm:$0xf]
    %v3534 = vld [vmem:[#allocation6 + $0xf8] sm:$0xf]
    %v3535 = vld [vmem:[#allocation6 + $0xfc] sm:$0xf]
    %v3536 = vld [vmem:[#allocation6 + $0x100] sm:$0xf]
    %v3537 = vld [vmem:[#allocation6 + $0x104] sm:$0xf]
    %v3538 = vld [vmem:[#allocation6 + $0x108] sm:$0xf]
    %v3539 = vld [vmem:[#allocation6 + $0x10c] sm:$0xf]
    %v3540 = vld [vmem:[#allocation6 + $0x110] sm:$0xf]
    %v3541 = vld [vmem:[#allocation6 + $0x114] sm:$0xf]
    %v3542 = vld [vmem:[#allocation6 + $0x118] sm:$0xf]
    %v3543 = vld [vmem:[#allocation6 + $0x11c] sm:$0xf]
    %v3544 = vld [vmem:[#allocation6 + $0x120] sm:$0xf]
    %v3545 = vld [vmem:[#allocation6 + $0x124] sm:$0xf]
    %v3546 = vld [vmem:[#allocation6 + $0x128] sm:$0xf]
    %v3547 = vld [vmem:[#allocation6 + $0x12c] sm:$0xf]
    %v3548 = vld [vmem:[#allocation6 + $0x130] sm:$0xf]
    %v3549 = vld [vmem:[#allocation6 + $0x134] sm:$0xf]
    %v3550 = vld [vmem:[#allocation6 + $0x138] sm:$0xf]
    %v3551 = vld [vmem:[#allocation6 + $0x13c] sm:$0xf]
    %v3552 = vld [vmem:[#allocation6 + $0x140] sm:$0xf]
    %v3553 = vld [vmem:[#allocation6 + $0x144] sm:$0xf]
    %v3554 = vld [vmem:[#allocation6 + $0x148] sm:$0xf]
    %v3555 = vld [vmem:[#allocation6 + $0x14c] sm:$0xf]
    %v3556 = vld [vmem:[#allocation6 + $0x150] sm:$0xf]
    %v3557 = vld [vmem:[#allocation6 + $0x154] sm:$0xf]
    %v3558 = vld [vmem:[#allocation6 + $0x158] sm:$0xf]
    %v3559 = vld [vmem:[#allocation6 + $0x15c] sm:$0xf]
    %v3560 = vld [vmem:[#allocation6 + $0x160] sm:$0xf]
    %v3561 = vld [vmem:[#allocation6 + $0x164] sm:$0xf]
    %v3562 = vld [vmem:[#allocation6 + $0x168] sm:$0xf]
    %v3563 = vld [vmem:[#allocation6 + $0x16c] sm:$0xf]
    %v3564 = vld [vmem:[#allocation6 + $0x170] sm:$0xf]
    %v3565 = vld [vmem:[#allocation6 + $0x174] sm:$0xf]
    %v3566 = vld [vmem:[#allocation6 + $0x178] sm:$0xf]
    %v3567 = vld [vmem:[#allocation6 + $0x17c] sm:$0xf]
    %v3568 = vld [vmem:[#allocation6 + $0x180] sm:$0xf]
    %v3569 = vld [vmem:[#allocation6 + $0x184] sm:$0xf]
    %v3570 = vld [vmem:[#allocation6 + $0x188] sm:$0xf]
    %v3571 = vld [vmem:[#allocation6 + $0x18c] sm:$0xf]
    %v3572 = vld [vmem:[#allocation6 + $0x190] sm:$0xf]
    %v3573 = vld [vmem:[#allocation6 + $0x194] sm:$0xf]
    %v3574 = vld [vmem:[#allocation6 + $0x198] sm:$0xf]
    %v3575 = vld [vmem:[#allocation6 + $0x19c] sm:$0xf]
    %v3576 = vld [vmem:[#allocation6 + $0x1a0] sm:$0xf]
    %v3577 = vld [vmem:[#allocation6 + $0x1a4] sm:$0xf]
    %v3578 = vld [vmem:[#allocation6 + $0x1a8] sm:$0xf]
    %v3579 = vld [vmem:[#allocation6 + $0x1ac] sm:$0xf]
    %v3580 = vld [vmem:[#allocation6 + $0x1b0] sm:$0xf]
    %v3581 = vld [vmem:[#allocation6 + $0x1b4] sm:$0xf]
    %v3582 = vld [vmem:[#allocation6 + $0x1b8] sm:$0xf]
    %v3583 = vld [vmem:[#allocation6 + $0x1bc] sm:$0xf]
    %v3584 = vld [vmem:[#allocation6 + $0x1c0] sm:$0xf]
    %v3585 = vld [vmem:[#allocation6 + $0x1c4] sm:$0xf]
    %v3586 = vld [vmem:[#allocation6 + $0x1c8] sm:$0xf]
    %v3587 = vld [vmem:[#allocation6 + $0x1cc] sm:$0xf]
    %v3588 = vld [vmem:[#allocation6 + $0x1d0] sm:$0xf]
    %v3589 = vld [vmem:[#allocation6 + $0x1d4] sm:$0xf]
    %v3590 = vld [vmem:[#allocation6 + $0x1d8] sm:$0xf]
    %v3591 = vld [vmem:[#allocation6 + $0x1dc] sm:$0xf]
    %v3592 = vld [vmem:[#allocation6 + $0x1e0] sm:$0xf]
    %v3593 = vld [vmem:[#allocation6 + $0x1e4] sm:$0xf]
    %v3594 = vld [vmem:[#allocation6 + $0x1e8] sm:$0xf]
    %v3595 = vld [vmem:[#allocation6 + $0x1ec] sm:$0xf]
    %v3596 = vld [vmem:[#allocation6 + $0x1f0] sm:$0xf]
    %v3597 = vld [vmem:[#allocation6 + $0x1f4] sm:$0xf]
    %v3598 = vld [vmem:[#allocation6 + $0x1f8] sm:$0xf]
    %v3599 = vld [vmem:[#allocation6 + $0x1fc] sm:$0xf]
    %v3600 = vld [vmem:[#allocation6 + $0x200] sm:$0xf]
    %v3601 = vld [vmem:[#allocation6 + $0x204] sm:$0xf]
    %v3602 = vld [vmem:[#allocation6 + $0x208] sm:$0xf]
    %v3603 = vld [vmem:[#allocation6 + $0x20c] sm:$0xf]
    %v3604 = vld [vmem:[#allocation6 + $0x210] sm:$0xf]
    %v3605 = vld [vmem:[#allocation6 + $0x214] sm:$0xf]
    %v3606 = vld [vmem:[#allocation6 + $0x218] sm:$0xf]
    %v3607 = vld [vmem:[#allocation6 + $0x21c] sm:$0xf]
    %v3608 = vld [vmem:[#allocation6 + $0x220] sm:$0xf]
    %v3609 = vld [vmem:[#allocation6 + $0x224] sm:$0xf]
    %v3610 = vld [vmem:[#allocation6 + $0x228] sm:$0xf]
    %v3611 = vld [vmem:[#allocation6 + $0x22c] sm:$0xf]
    %v3612 = vld [vmem:[#allocation6 + $0x230] sm:$0xf]
    %v3613 = vld [vmem:[#allocation6 + $0x234] sm:$0xf]
    %v3614 = vld [vmem:[#allocation6 + $0x238] sm:$0xf]
    %v3615 = vld [vmem:[#allocation6 + $0x23c] sm:$0xf]
    %v3616 = vld [vmem:[#allocation6 + $0x240] sm:$0xf]
    %v3617 = vld [vmem:[#allocation6 + $0x244] sm:$0xf]
    %v3618 = vld [vmem:[#allocation6 + $0x248] sm:$0xf]
    %v3619 = vld [vmem:[#allocation6 + $0x24c] sm:$0xf]
    %v3620 = vld [vmem:[#allocation6 + $0x250] sm:$0xf]
    %v3621 = vld [vmem:[#allocation6 + $0x254] sm:$0xf]
    %v3622 = vld [vmem:[#allocation6 + $0x258] sm:$0xf]
    %v3623 = vld [vmem:[#allocation6 + $0x25c] sm:$0xf]
    %v3624 = vld [vmem:[#allocation6 + $0x260] sm:$0xf]
    %v3625 = vld [vmem:[#allocation6 + $0x264] sm:$0xf]
    %v3626 = vld [vmem:[#allocation6 + $0x268] sm:$0xf]
    %v3627 = vld [vmem:[#allocation6 + $0x26c] sm:$0xf]
    %v3628 = vld [vmem:[#allocation6 + $0x270] sm:$0xf]
    %v3629 = vld [vmem:[#allocation6 + $0x274] sm:$0xf]
    %v3630 = vld [vmem:[#allocation6 + $0x278] sm:$0xf]
    %v3631 = vld [vmem:[#allocation6 + $0x27c] sm:$0xf]
    %v3632 = vld [vmem:[#allocation6 + $0x280] sm:$0xf]
    %v3633 = vld [vmem:[#allocation6 + $0x284] sm:$0xf]
    %v3634 = vld [vmem:[#allocation6 + $0x288] sm:$0xf]
    %v3635 = vld [vmem:[#allocation6 + $0x28c] sm:$0xf]
    %v3636 = vld [vmem:[#allocation6 + $0x290] sm:$0xf]
    %v3637 = vld [vmem:[#allocation6 + $0x294] sm:$0xf]
    %v3638 = vld [vmem:[#allocation6 + $0x298] sm:$0xf]
    %v3639 = vld [vmem:[#allocation6 + $0x29c] sm:$0xf]
    %v3640 = vld [vmem:[#allocation6 + $0x2a0] sm:$0xf]
    %v3641 = vld [vmem:[#allocation6 + $0x2a4] sm:$0xf]
    %v3642 = vld [vmem:[#allocation6 + $0x2a8] sm:$0xf]
    %v3643 = vld [vmem:[#allocation6 + $0x2ac] sm:$0xf]
    %v3644 = vld [vmem:[#allocation6 + $0x2b0] sm:$0xf]
    %v3645 = vld [vmem:[#allocation6 + $0x2b4] sm:$0xf]
    %v3646 = vld [vmem:[#allocation6 + $0x2b8] sm:$0xf]
    %v3647 = vld [vmem:[#allocation6 + $0x2bc] sm:$0xf]
    %v3648 = vld [vmem:[#allocation6 + $0x2c0] sm:$0xf]
    %v3649 = vld [vmem:[#allocation6 + $0x2c4] sm:$0xf]
    %v3650 = vld [vmem:[#allocation6 + $0x2c8] sm:$0xf]
    %v3651 = vld [vmem:[#allocation6 + $0x2cc] sm:$0xf]
    %v3652 = vld [vmem:[#allocation6 + $0x2d0] sm:$0xf]
    %v3653 = vld [vmem:[#allocation6 + $0x2d4] sm:$0xf]
    %v3654 = vld [vmem:[#allocation6 + $0x2d8] sm:$0xf]
    %v3655 = vld [vmem:[#allocation6 + $0x2dc] sm:$0xf]
    %v3656 = vld [vmem:[#allocation6 + $0x2e0] sm:$0xf]
    %v3657 = vld [vmem:[#allocation6 + $0x2e4] sm:$0xf]
    %v3658 = vld [vmem:[#allocation6 + $0x2e8] sm:$0xf]
    %v3659 = vld [vmem:[#allocation6 + $0x2ec] sm:$0xf]
    %v3660 = vld [vmem:[#allocation6 + $0x2f0] sm:$0xf]
    %v3661 = vld [vmem:[#allocation6 + $0x2f4] sm:$0xf]
    %v3662 = vld [vmem:[#allocation6 + $0x2f8] sm:$0xf]
    %v3663 = vld [vmem:[#allocation6 + $0x2fc] sm:$0xf]
    %v3664 = vld [vmem:[#allocation6 + $0x300] sm:$0xf]
    %v3665 = vld [vmem:[#allocation6 + $0x304] sm:$0xf]
    %v3666 = vld [vmem:[#allocation6 + $0x308] sm:$0xf]
    %v3667 = vld [vmem:[#allocation6 + $0x30c] sm:$0xf]
    %v3668 = vld [vmem:[#allocation6 + $0x310] sm:$0xf]
    %v3669 = vld [vmem:[#allocation6 + $0x314] sm:$0xf]
    %v3670 = vld [vmem:[#allocation6 + $0x318] sm:$0xf]
    %v3671 = vld [vmem:[#allocation6 + $0x31c] sm:$0xf]
    %v3672 = vld [vmem:[#allocation6 + $0x320] sm:$0xf]
    %v3673 = vld [vmem:[#allocation6 + $0x324] sm:$0xf]
    %v3674 = vld [vmem:[#allocation6 + $0x328] sm:$0xf]
    %v3675 = vld [vmem:[#allocation6 + $0x32c] sm:$0xf]
    %v3676 = vld [vmem:[#allocation6 + $0x330] sm:$0xf]
    %v3677 = vld [vmem:[#allocation6 + $0x334] sm:$0xf]
    %v3678 = vld [vmem:[#allocation6 + $0x338] sm:$0xf]
    %v3679 = vld [vmem:[#allocation6 + $0x33c] sm:$0xf]
    %v3680 = vld [vmem:[#allocation6 + $0x340] sm:$0xf]
    %v3681 = vld [vmem:[#allocation6 + $0x344] sm:$0xf]
    %v3682 = vld [vmem:[#allocation6 + $0x348] sm:$0xf]
    %v3683 = vld [vmem:[#allocation6 + $0x34c] sm:$0xf]
    %v3684 = vld [vmem:[#allocation6 + $0x350] sm:$0xf]
    %v3685 = vld [vmem:[#allocation6 + $0x354] sm:$0xf]
    %v3686 = vld [vmem:[#allocation6 + $0x358] sm:$0xf]
    %v3687 = vld [vmem:[#allocation6 + $0x35c] sm:$0xf]
    %v3688 = vld [vmem:[#allocation6 + $0x360] sm:$0xf]
    %v3689 = vld [vmem:[#allocation6 + $0x364] sm:$0xf]
    %v3690 = vld [vmem:[#allocation6 + $0x368] sm:$0xf]
    %v3691 = vld [vmem:[#allocation6 + $0x36c] sm:$0xf]
    %v3692 = vld [vmem:[#allocation6 + $0x370] sm:$0xf]
    %v3693 = vld [vmem:[#allocation6 + $0x374] sm:$0xf]
    %v3694 = vld [vmem:[#allocation6 + $0x378] sm:$0xf]
    %v3695 = vld [vmem:[#allocation6 + $0x37c] sm:$0xf]
    %v3696 = vld [vmem:[#allocation6 + $0x380] sm:$0xf]
    %v3697 = vld [vmem:[#allocation6 + $0x384] sm:$0xf]
    %v3698 = vld [vmem:[#allocation6 + $0x388] sm:$0xf]
    %v3699 = vld [vmem:[#allocation6 + $0x38c] sm:$0xf]
    %v3700 = vld [vmem:[#allocation6 + $0x390] sm:$0xf]
    %v3701 = vld [vmem:[#allocation6 + $0x394] sm:$0xf]
    %v3702 = vld [vmem:[#allocation6 + $0x398] sm:$0xf]
    %v3703 = vld [vmem:[#allocation6 + $0x39c] sm:$0xf]
    %v3704 = vld [vmem:[#allocation6 + $0x3a0] sm:$0xf]
    %v3705 = vld [vmem:[#allocation6 + $0x3a4] sm:$0xf]
    %v3706 = vld [vmem:[#allocation6 + $0x3a8] sm:$0xf]
    %v3707 = vld [vmem:[#allocation6 + $0x3ac] sm:$0xf]
    %v3708 = vld [vmem:[#allocation6 + $0x3b0] sm:$0xf]
    %v3709 = vld [vmem:[#allocation6 + $0x3b4] sm:$0xf]
    %v3710 = vld [vmem:[#allocation6 + $0x3b8] sm:$0xf]
    %v3711 = vld [vmem:[#allocation6 + $0x3bc] sm:$0xf]
    %v3712 = vld [vmem:[#allocation6 + $0x3c0] sm:$0xf]
    %v3713 = vld [vmem:[#allocation6 + $0x3c4] sm:$0xf]
    %v3714 = vld [vmem:[#allocation6 + $0x3c8] sm:$0xf]
    %v3715 = vld [vmem:[#allocation6 + $0x3cc] sm:$0xf]
    %v3716 = vld [vmem:[#allocation6 + $0x3d0] sm:$0xf]
    %v3717 = vld [vmem:[#allocation6 + $0x3d4] sm:$0xf]
    %v3718 = vld [vmem:[#allocation6 + $0x3d8] sm:$0xf]
    %v3719 = vld [vmem:[#allocation6 + $0x3dc] sm:$0xf]
    %v3720 = vld [vmem:[#allocation6 + $0x3e0] sm:$0xf]
    %v3721 = vld [vmem:[#allocation6 + $0x3e4] sm:$0xf]
    %v3722 = vld [vmem:[#allocation6 + $0x3e8] sm:$0xf]
    %v3723 = vld [vmem:[#allocation6 + $0x3ec] sm:$0xf]
    %v3724 = vld [vmem:[#allocation6 + $0x3f0] sm:$0xf]
    %v3725 = vld [vmem:[#allocation6 + $0x3f4] sm:$0xf]
    %v3726 = vld [vmem:[#allocation6 + $0x3f8] sm:$0xf]
    %v3727 = vld [vmem:[#allocation6 + $0x3fc] sm:$0xf]
    %v3728 = vld [vmem:[#allocation6 + $0x400] sm:$0xf]
    %v3729 = vld [vmem:[#allocation6 + $0x404] sm:$0xf]
    %v3730 = vld [vmem:[#allocation6 + $0x408] sm:$0xf]
    %v3731 = vld [vmem:[#allocation6 + $0x40c] sm:$0xf]
    %v3732 = vld [vmem:[#allocation6 + $0x410] sm:$0xf]
    %v3733 = vld [vmem:[#allocation6 + $0x414] sm:$0xf]
    %v3734 = vld [vmem:[#allocation6 + $0x418] sm:$0xf]
    %v3735 = vld [vmem:[#allocation6 + $0x41c] sm:$0xf]
    %v3736 = vld [vmem:[#allocation6 + $0x420] sm:$0xf]
    %v3737 = vld [vmem:[#allocation6 + $0x424] sm:$0xf]
    %v3738 = vld [vmem:[#allocation6 + $0x428] sm:$0xf]
    %v3739 = vld [vmem:[#allocation6 + $0x42c] sm:$0xf]
    %v3740 = vld [vmem:[#allocation6 + $0x430] sm:$0xf]
    %v3741 = vld [vmem:[#allocation6 + $0x434] sm:$0xf]
    %v3742 = vld [vmem:[#allocation6 + $0x438] sm:$0xf]
    %v3743 = vld [vmem:[#allocation6 + $0x43c] sm:$0xf]
    %v3744 = vld [vmem:[#allocation6 + $0x440] sm:$0xf]
    %v3745 = vld [vmem:[#allocation6 + $0x444] sm:$0xf]
    %v3746 = vld [vmem:[#allocation6 + $0x448] sm:$0xf]
    %v3747 = vld [vmem:[#allocation6 + $0x44c] sm:$0xf]
    %v3748 = vld [vmem:[#allocation6 + $0x450] sm:$0xf]
    %v3749 = vld [vmem:[#allocation6 + $0x454] sm:$0xf]
    %v3750 = vld [vmem:[#allocation6 + $0x458] sm:$0xf]
    %v3751 = vld [vmem:[#allocation6 + $0x45c] sm:$0xf]
    %v3752 = vld [vmem:[#allocation6 + $0x460] sm:$0xf]
    %v3753 = vld [vmem:[#allocation6 + $0x464] sm:$0xf]
    %v3754 = vld [vmem:[#allocation6 + $0x468] sm:$0xf]
    %v3755 = vld [vmem:[#allocation6 + $0x46c] sm:$0xf]
    %v3756 = vld [vmem:[#allocation6 + $0x470] sm:$0xf]
    %v3757 = vld [vmem:[#allocation6 + $0x474] sm:$0xf]
    %v3758 = vld [vmem:[#allocation6 + $0x478] sm:$0xf]
    %v3759 = vld [vmem:[#allocation6 + $0x47c] sm:$0xf]
    %v3760 = vld [vmem:[#allocation6 + $0x480] sm:$0xf]
    %v3761 = vld [vmem:[#allocation6 + $0x484] sm:$0xf]
    %v3762 = vld [vmem:[#allocation6 + $0x488] sm:$0xf]
    %v3763 = vld [vmem:[#allocation6 + $0x48c] sm:$0xf]
    %v3764 = vld [vmem:[#allocation6 + $0x490] sm:$0xf]
    %v3765 = vld [vmem:[#allocation6 + $0x494] sm:$0xf]
    %v3766 = vld [vmem:[#allocation6 + $0x498] sm:$0xf]
    %v3767 = vld [vmem:[#allocation6 + $0x49c] sm:$0xf]
    %v3768 = vld [vmem:[#allocation6 + $0x4a0] sm:$0xf]
    %v3769 = vld [vmem:[#allocation6 + $0x4a4] sm:$0xf]
    %v3770 = vld [vmem:[#allocation6 + $0x4a8] sm:$0xf]
    %v3771 = vld [vmem:[#allocation6 + $0x4ac] sm:$0xf]
    %v3772 = vld [vmem:[#allocation6 + $0x4b0] sm:$0xf]
    %v3773 = vld [vmem:[#allocation6 + $0x4b4] sm:$0xf]
    %v3774 = vld [vmem:[#allocation6 + $0x4b8] sm:$0xf]
    %v3775 = vld [vmem:[#allocation6 + $0x4bc] sm:$0xf]
    %v3776 = vld [vmem:[#allocation6 + $0x4c0] sm:$0xf]
    %v3777 = vld [vmem:[#allocation6 + $0x4c4] sm:$0xf]
    %v3778 = vld [vmem:[#allocation6 + $0x4c8] sm:$0xf]
    %v3779 = vld [vmem:[#allocation6 + $0x4cc] sm:$0xf]
    %v3780 = vld [vmem:[#allocation6 + $0x4d0] sm:$0xf]
    %v3781 = vld [vmem:[#allocation6 + $0x4d4] sm:$0xf]
    %v3782 = vld [vmem:[#allocation6 + $0x4d8] sm:$0xf]
    %v3783 = vld [vmem:[#allocation6 + $0x4dc] sm:$0xf]
    %v3784 = vld [vmem:[#allocation6 + $0x4e0] sm:$0xf]
    %v3785 = vld [vmem:[#allocation6 + $0x4e4] sm:$0xf]
    %v3786 = vld [vmem:[#allocation6 + $0x4e8] sm:$0xf]
    %v3787 = vld [vmem:[#allocation6 + $0x4ec] sm:$0xf]
    %v3788 = vld [vmem:[#allocation6 + $0x4f0] sm:$0xf]
    %v3789 = vld [vmem:[#allocation6 + $0x4f4] sm:$0xf]
    %v3790 = vld [vmem:[#allocation6 + $0x4f8] sm:$0xf]
    %v3791 = vld [vmem:[#allocation6 + $0x4fc] sm:$0xf]
    %v3792 = vld [vmem:[#allocation6 + $0x500] sm:$0xf]
    %v3793 = vld [vmem:[#allocation6 + $0x504] sm:$0xf]
    %v3794 = vld [vmem:[#allocation6 + $0x508] sm:$0xf]
    %v3795 = vld [vmem:[#allocation6 + $0x50c] sm:$0xf]
    %v3796 = vld [vmem:[#allocation6 + $0x510] sm:$0xf]
    %v3797 = vld [vmem:[#allocation6 + $0x514] sm:$0xf]
    %v3798 = vld [vmem:[#allocation6 + $0x518] sm:$0xf]
    %v3799 = vld [vmem:[#allocation6 + $0x51c] sm:$0xf]
    %v3800 = vld [vmem:[#allocation6 + $0x520] sm:$0xf]
    %v3801 = vld [vmem:[#allocation6 + $0x524] sm:$0xf]
    %v3802 = vld [vmem:[#allocation6 + $0x528] sm:$0xf]
    %v3803 = vld [vmem:[#allocation6 + $0x52c] sm:$0xf]
    %v3804 = vld [vmem:[#allocation6 + $0x530] sm:$0xf]
    %v3805 = vld [vmem:[#allocation6 + $0x534] sm:$0xf]
    %v3806 = vld [vmem:[#allocation6 + $0x538] sm:$0xf]
    %v3807 = vld [vmem:[#allocation6 + $0x53c] sm:$0xf]
    %v3808 = vld [vmem:[#allocation6 + $0x540] sm:$0xf]
    %v3809 = vld [vmem:[#allocation6 + $0x544] sm:$0xf]
    %v3810 = vld [vmem:[#allocation6 + $0x548] sm:$0xf]
    %v3811 = vld [vmem:[#allocation6 + $0x54c] sm:$0xf]
    %v3812 = vld [vmem:[#allocation6 + $0x550] sm:$0xf]
    %v3813 = vld [vmem:[#allocation6 + $0x554] sm:$0xf]
    %v3814 = vld [vmem:[#allocation6 + $0x558] sm:$0xf]
    %v3815 = vld [vmem:[#allocation6 + $0x55c] sm:$0xf]
    %v3816 = vld [vmem:[#allocation6 + $0x560] sm:$0xf]
    %v3817 = vld [vmem:[#allocation6 + $0x564] sm:$0xf]
    %v3818 = vld [vmem:[#allocation6 + $0x568] sm:$0xf]
    %v3819 = vld [vmem:[#allocation6 + $0x56c] sm:$0xf]
    %v3820 = vld [vmem:[#allocation6 + $0x570] sm:$0xf]
    %v3821 = vld [vmem:[#allocation6 + $0x574] sm:$0xf]
    %v3822 = vld [vmem:[#allocation6 + $0x578] sm:$0xf]
    %v3823 = vld [vmem:[#allocation6 + $0x57c] sm:$0xf]
    %v3824 = vld [vmem:[#allocation6 + $0x580] sm:$0xf]
    %v3825 = vld [vmem:[#allocation6 + $0x584] sm:$0xf]
    %v3826 = vld [vmem:[#allocation6 + $0x588] sm:$0xf]
    %v3827 = vld [vmem:[#allocation6 + $0x58c] sm:$0xf]
    %v3828 = vld [vmem:[#allocation6 + $0x590] sm:$0xf]
    %v3829 = vld [vmem:[#allocation6 + $0x594] sm:$0xf]
    %v3830 = vld [vmem:[#allocation6 + $0x598] sm:$0xf]
    %v3831 = vld [vmem:[#allocation6 + $0x59c] sm:$0xf]
    %v3832 = vld [vmem:[#allocation6 + $0x5a0] sm:$0xf]
    %v3833 = vld [vmem:[#allocation6 + $0x5a4] sm:$0xf]
    %v3834 = vld [vmem:[#allocation6 + $0x5a8] sm:$0xf]
    %v3835 = vld [vmem:[#allocation6 + $0x5ac] sm:$0xf]
    %v3836 = vld [vmem:[#allocation6 + $0x5b0] sm:$0xf]
    %v3837 = vld [vmem:[#allocation6 + $0x5b4] sm:$0xf]
    %v3838 = vld [vmem:[#allocation6 + $0x5b8] sm:$0xf]
    %v3839 = vld [vmem:[#allocation6 + $0x5bc] sm:$0xf]
    %v3840 = vld [vmem:[#allocation6 + $0x5c0] sm:$0xf]
    %v3841 = vld [vmem:[#allocation6 + $0x5c4] sm:$0xf]
    %v3842 = vld [vmem:[#allocation6 + $0x5c8] sm:$0xf]
    %v3843 = vld [vmem:[#allocation6 + $0x5cc] sm:$0xf]
    %v3844 = vld [vmem:[#allocation6 + $0x5d0] sm:$0xf]
    %v3845 = vld [vmem:[#allocation6 + $0x5d4] sm:$0xf]
    %v3846 = vld [vmem:[#allocation6 + $0x5d8] sm:$0xf]
    %v3847 = vld [vmem:[#allocation6 + $0x5dc] sm:$0xf]
    %v3848 = vld [vmem:[#allocation6 + $0x5e0] sm:$0xf]
    %v3849 = vld [vmem:[#allocation6 + $0x5e4] sm:$0xf]
    %v3850 = vld [vmem:[#allocation6 + $0x5e8] sm:$0xf]
    %v3851 = vld [vmem:[#allocation6 + $0x5ec] sm:$0xf]
    %v3852 = vld [vmem:[#allocation6 + $0x5f0] sm:$0xf]
    %v3853 = vld [vmem:[#allocation6 + $0x5f4] sm:$0xf]
    %v3854 = vld [vmem:[#allocation6 + $0x5f8] sm:$0xf]
    %v3855 = vld [vmem:[#allocation6 + $0x5fc] sm:$0xf]
    %v3856 = vld [vmem:[#allocation6 + $0x600] sm:$0xf]
    %v3857 = vld [vmem:[#allocation6 + $0x604] sm:$0xf]
    %v3858 = vld [vmem:[#allocation6 + $0x608] sm:$0xf]
    %v3859 = vld [vmem:[#allocation6 + $0x60c] sm:$0xf]
    %v3860 = vld [vmem:[#allocation6 + $0x610] sm:$0xf]
    %v3861 = vld [vmem:[#allocation6 + $0x614] sm:$0xf]
    %v3862 = vld [vmem:[#allocation6 + $0x618] sm:$0xf]
    %v3863 = vld [vmem:[#allocation6 + $0x61c] sm:$0xf]
    %v3864 = vld [vmem:[#allocation6 + $0x620] sm:$0xf]
    %v3865 = vld [vmem:[#allocation6 + $0x624] sm:$0xf]
    %v3866 = vld [vmem:[#allocation6 + $0x628] sm:$0xf]
    %v3867 = vld [vmem:[#allocation6 + $0x62c] sm:$0xf]
    %v3868 = vld [vmem:[#allocation6 + $0x630] sm:$0xf]
    %v3869 = vld [vmem:[#allocation6 + $0x634] sm:$0xf]
    %v3870 = vld [vmem:[#allocation6 + $0x638] sm:$0xf]
    %v3871 = vld [vmem:[#allocation6 + $0x63c] sm:$0xf]
    %v3872 = vld [vmem:[#allocation6 + $0x640] sm:$0xf]
    %v3873 = vld [vmem:[#allocation6 + $0x644] sm:$0xf]
    %v3874 = vld [vmem:[#allocation6 + $0x648] sm:$0xf]
    %v3875 = vld [vmem:[#allocation6 + $0x64c] sm:$0xf]
    %v3876 = vld [vmem:[#allocation6 + $0x650] sm:$0xf]
    %v3877 = vld [vmem:[#allocation6 + $0x654] sm:$0xf]
    %v3878 = vld [vmem:[#allocation6 + $0x658] sm:$0xf]
    %v3879 = vld [vmem:[#allocation6 + $0x65c] sm:$0xf]
    %v3880 = vld [vmem:[#allocation6 + $0x660] sm:$0xf]
    %v3881 = vld [vmem:[#allocation6 + $0x664] sm:$0xf]
    %v3882 = vld [vmem:[#allocation6 + $0x668] sm:$0xf]
    %v3883 = vld [vmem:[#allocation6 + $0x66c] sm:$0xf]
    %v3884 = vld [vmem:[#allocation6 + $0x670] sm:$0xf]
    %v3885 = vld [vmem:[#allocation6 + $0x674] sm:$0xf]
    %v3886 = vld [vmem:[#allocation6 + $0x678] sm:$0xf]
    %v3887 = vld [vmem:[#allocation6 + $0x67c] sm:$0xf]
    %v3888 = vld [vmem:[#allocation6 + $0x680] sm:$0xf]
    %v3889 = vld [vmem:[#allocation6 + $0x684] sm:$0xf]
    %v3890 = vld [vmem:[#allocation6 + $0x688] sm:$0xf]
    %v3891 = vld [vmem:[#allocation6 + $0x68c] sm:$0xf]
    %v3892 = vld [vmem:[#allocation6 + $0x690] sm:$0xf]
    %v3893 = vld [vmem:[#allocation6 + $0x694] sm:$0xf]
    %v3894 = vld [vmem:[#allocation6 + $0x698] sm:$0xf]
    %v3895 = vld [vmem:[#allocation6 + $0x69c] sm:$0xf]
    %v3896 = vld [vmem:[#allocation6 + $0x6a0] sm:$0xf]
    %v3897 = vld [vmem:[#allocation6 + $0x6a4] sm:$0xf]
    %v3898 = vld [vmem:[#allocation6 + $0x6a8] sm:$0xf]
    %v3899 = vld [vmem:[#allocation6 + $0x6ac] sm:$0xf]
    %v3900 = vld [vmem:[#allocation6 + $0x6b0] sm:$0xf]
    %v3901 = vld [vmem:[#allocation6 + $0x6b4] sm:$0xf]
    %v3902 = vld [vmem:[#allocation6 + $0x6b8] sm:$0xf]
    %v3903 = vld [vmem:[#allocation6 + $0x6bc] sm:$0xf]
    %v3904 = vld [vmem:[#allocation6 + $0x6c0] sm:$0xf]
    %v3905 = vld [vmem:[#allocation6 + $0x6c4] sm:$0xf]
    %v3906 = vld [vmem:[#allocation6 + $0x6c8] sm:$0xf]
    %v3907 = vld [vmem:[#allocation6 + $0x6cc] sm:$0xf]
    %v3908 = vld [vmem:[#allocation6 + $0x6d0] sm:$0xf]
    %v3909 = vld [vmem:[#allocation6 + $0x6d4] sm:$0xf]
    %v3910 = vld [vmem:[#allocation6 + $0x6d8] sm:$0xf]
    %v3911 = vld [vmem:[#allocation6 + $0x6dc] sm:$0xf]
    %v3912 = vld [vmem:[#allocation6 + $0x6e0] sm:$0xf]
    %v3913 = vld [vmem:[#allocation6 + $0x6e4] sm:$0xf]
    %v3914 = vld [vmem:[#allocation6 + $0x6e8] sm:$0xf]
    %v3915 = vld [vmem:[#allocation6 + $0x6ec] sm:$0xf]
    %v3916 = vld [vmem:[#allocation6 + $0x6f0] sm:$0xf]
    %v3917 = vld [vmem:[#allocation6 + $0x6f4] sm:$0xf]
    %v3918 = vld [vmem:[#allocation6 + $0x6f8] sm:$0xf]
    %v3919 = vld [vmem:[#allocation6 + $0x6fc] sm:$0xf]
    %v3920 = vld [vmem:[#allocation6 + $0x700] sm:$0xf]
    %v3921 = vld [vmem:[#allocation6 + $0x704] sm:$0xf]
    %v3922 = vld [vmem:[#allocation6 + $0x708] sm:$0xf]
    %v3923 = vld [vmem:[#allocation6 + $0x70c] sm:$0xf]
    %v3924 = vld [vmem:[#allocation6 + $0x710] sm:$0xf]
    %v3925 = vld [vmem:[#allocation6 + $0x714] sm:$0xf]
    %v3926 = vld [vmem:[#allocation6 + $0x718] sm:$0xf]
    %v3927 = vld [vmem:[#allocation6 + $0x71c] sm:$0xf]
    %v3928 = vld [vmem:[#allocation6 + $0x720] sm:$0xf]
    %v3929 = vld [vmem:[#allocation6 + $0x724] sm:$0xf]
    %v3930 = vld [vmem:[#allocation6 + $0x728] sm:$0xf]
    %v3931 = vld [vmem:[#allocation6 + $0x72c] sm:$0xf]
    %v3932 = vld [vmem:[#allocation6 + $0x730] sm:$0xf]
    %v3933 = vld [vmem:[#allocation6 + $0x734] sm:$0xf]
    %v3934 = vld [vmem:[#allocation6 + $0x738] sm:$0xf]
    %v3935 = vld [vmem:[#allocation6 + $0x73c] sm:$0xf]
    %v3936 = vld [vmem:[#allocation6 + $0x740] sm:$0xf]
    %v3937 = vld [vmem:[#allocation6 + $0x744] sm:$0xf]
    %v3938 = vld [vmem:[#allocation6 + $0x748] sm:$0xf]
    %v3939 = vld [vmem:[#allocation6 + $0x74c] sm:$0xf]
    %v3940 = vld [vmem:[#allocation6 + $0x750] sm:$0xf]
    %v3941 = vld [vmem:[#allocation6 + $0x754] sm:$0xf]
    %v3942 = vld [vmem:[#allocation6 + $0x758] sm:$0xf]
    %v3943 = vld [vmem:[#allocation6 + $0x75c] sm:$0xf]
    %v3944 = vld [vmem:[#allocation6 + $0x760] sm:$0xf]
    %v3945 = vld [vmem:[#allocation6 + $0x764] sm:$0xf]
    %v3946 = vld [vmem:[#allocation6 + $0x768] sm:$0xf]
    %v3947 = vld [vmem:[#allocation6 + $0x76c] sm:$0xf]
    %v3948 = vld [vmem:[#allocation6 + $0x770] sm:$0xf]
    %v3949 = vld [vmem:[#allocation6 + $0x774] sm:$0xf]
    %v3950 = vld [vmem:[#allocation6 + $0x778] sm:$0xf]
    %v3951 = vld [vmem:[#allocation6 + $0x77c] sm:$0xf]
    %v3952 = vld [vmem:[#allocation6 + $0x780] sm:$0xf]
    %v3953 = vld [vmem:[#allocation6 + $0x784] sm:$0xf]
    %v3954 = vld [vmem:[#allocation6 + $0x788] sm:$0xf]
    %v3955 = vld [vmem:[#allocation6 + $0x78c] sm:$0xf]
    %v3956 = vld [vmem:[#allocation6 + $0x790] sm:$0xf]
    %v3957 = vld [vmem:[#allocation6 + $0x794] sm:$0xf]
    %v3958 = vld [vmem:[#allocation6 + $0x798] sm:$0xf]
    %v3959 = vld [vmem:[#allocation6 + $0x79c] sm:$0xf]
    %v3960 = vld [vmem:[#allocation6 + $0x7a0] sm:$0xf]
    %v3961 = vld [vmem:[#allocation6 + $0x7a4] sm:$0xf]
    %v3962 = vld [vmem:[#allocation6 + $0x7a8] sm:$0xf]
    %v3963 = vld [vmem:[#allocation6 + $0x7ac] sm:$0xf]
    %v3964 = vld [vmem:[#allocation6 + $0x7b0] sm:$0xf]
    %v3965 = vld [vmem:[#allocation6 + $0x7b4] sm:$0xf]
    %v3966 = vld [vmem:[#allocation6 + $0x7b8] sm:$0xf]
    %v3967 = vld [vmem:[#allocation6 + $0x7bc] sm:$0xf]
    %v3968 = vld [vmem:[#allocation6 + $0x7c0] sm:$0xf]
    %v3969 = vld [vmem:[#allocation6 + $0x7c4] sm:$0xf]
    %v3970 = vld [vmem:[#allocation6 + $0x7c8] sm:$0xf]
    %v3971 = vld [vmem:[#allocation6 + $0x7cc] sm:$0xf]
    %v3972 = vld [vmem:[#allocation6 + $0x7d0] sm:$0xf]
    %v3973 = vld [vmem:[#allocation6 + $0x7d4] sm:$0xf]
    %v3974 = vld [vmem:[#allocation6 + $0x7d8] sm:$0xf]
    %v3975 = vld [vmem:[#allocation6 + $0x7dc] sm:$0xf]
    %v3976 = vld [vmem:[#allocation6 + $0x7e0] sm:$0xf]
    %v3977 = vld [vmem:[#allocation6 + $0x7e4] sm:$0xf]
    %v3978 = vld [vmem:[#allocation6 + $0x7e8] sm:$0xf]
    %v3979 = vld [vmem:[#allocation6 + $0x7ec] sm:$0xf]
    %v3980 = vld [vmem:[#allocation6 + $0x7f0] sm:$0xf]
    %v3981 = vld [vmem:[#allocation6 + $0x7f4] sm:$0xf]
    %v3982 = vld [vmem:[#allocation6 + $0x7f8] sm:$0xf]
    %v3983 = vld [vmem:[#allocation6 + $0x7fc] sm:$0xf]
    %v3984 = vld [vmem:[#allocation6 + $0x800] sm:$0xf]
    %v3985 = vld [vmem:[#allocation6 + $0x804] sm:$0xf]
    %v3986 = vld [vmem:[#allocation6 + $0x808] sm:$0xf]
    %v3987 = vld [vmem:[#allocation6 + $0x80c] sm:$0xf]
    %v3988 = vld [vmem:[#allocation6 + $0x810] sm:$0xf]
    %v3989 = vld [vmem:[#allocation6 + $0x814] sm:$0xf]
    %v3990 = vld [vmem:[#allocation6 + $0x818] sm:$0xf]
    %v3991 = vld [vmem:[#allocation6 + $0x81c] sm:$0xf]
    %v3992 = vld [vmem:[#allocation6 + $0x820] sm:$0xf]
    %v3993 = vld [vmem:[#allocation6 + $0x824] sm:$0xf]
    %v3994 = vld [vmem:[#allocation6 + $0x828] sm:$0xf]
    %v3995 = vld [vmem:[#allocation6 + $0x82c] sm:$0xf]
    %v3996 = vld [vmem:[#allocation6 + $0x830] sm:$0xf]
    %v3997 = vld [vmem:[#allocation6 + $0x834] sm:$0xf]
    %v3998 = vld [vmem:[#allocation6 + $0x838] sm:$0xf]
    %v3999 = vld [vmem:[#allocation6 + $0x83c] sm:$0xf]
    %v4000 = vld [vmem:[#allocation7] sm:$0x1]
    %v4002 = vlaneseq
    %v4003 = vshrl.u32 %v4002, 7
    %v4004 = vsub.s32 0, %v4003
    %v4005 = vrot.slane %v4000, %v4004
    %v4535 = vunpack.c.l.b16 %v3472
    %v4536 = vunpack.c.l.b16 %v3473
    %v4537 = vunpack.c.l.b16 %v3474
    %v4538 = vunpack.c.l.b16 %v3475
    %v4539 = vunpack.c.l.b16 %v3476
    %v4540 = vunpack.c.l.b16 %v3477
    %v4541 = vunpack.c.l.b16 %v3478
    %v4542 = vunpack.c.l.b16 %v3479
    %v4543 = vunpack.c.l.b16 %v3480
    %v4544 = vunpack.c.l.b16 %v3481
    %v4545 = vunpack.c.l.b16 %v3482
    %v4546 = vunpack.c.l.b16 %v3483
    %v4547 = vunpack.c.l.b16 %v3484
    %v4548 = vunpack.c.l.b16 %v3485
    %v4549 = vunpack.c.l.b16 %v3486
    %v4550 = vunpack.c.l.b16 %v3487
    %v4551 = vunpack.c.l.b16 %v3488
    %v4552 = vunpack.c.l.b16 %v3489
    %v4553 = vunpack.c.l.b16 %v3490
    %v4554 = vunpack.c.l.b16 %v3491
    %v4555 = vunpack.c.l.b16 %v3492
    %v4556 = vunpack.c.l.b16 %v3493
    %v4557 = vunpack.c.l.b16 %v3494
    %v4558 = vunpack.c.l.b16 %v3495
    %v4559 = vunpack.c.l.b16 %v3496
    %v4560 = vunpack.c.l.b16 %v3497
    %v4561 = vunpack.c.l.b16 %v3498
    %v4562 = vunpack.c.l.b16 %v3499
    %v4563 = vunpack.c.l.b16 %v3500
    %v4564 = vunpack.c.l.b16 %v3501
    %v4565 = vunpack.c.l.b16 %v3502
    %v4566 = vunpack.c.l.b16 %v3503
    %v4567 = vunpack.c.l.b16 %v3504
    %v4568 = vunpack.c.l.b16 %v3505
    %v4569 = vunpack.c.l.b16 %v3506
    %v4570 = vunpack.c.l.b16 %v3507
    %v4571 = vunpack.c.l.b16 %v3508
    %v4572 = vunpack.c.l.b16 %v3509
    %v4573 = vunpack.c.l.b16 %v3510
    %v4574 = vunpack.c.l.b16 %v3511
    %v4575 = vunpack.c.l.b16 %v3512
    %v4576 = vunpack.c.l.b16 %v3513
    %v4577 = vunpack.c.l.b16 %v3514
    %v4578 = vunpack.c.l.b16 %v3515
    %v4579 = vunpack.c.l.b16 %v3516
    %v4580 = vunpack.c.l.b16 %v3517
    %v4581 = vunpack.c.l.b16 %v3518
    %v4582 = vunpack.c.l.b16 %v3519
    %v4583 = vunpack.c.l.b16 %v3520
    %v4584 = vunpack.c.l.b16 %v3521
    %v4585 = vunpack.c.l.b16 %v3522
    %v4586 = vunpack.c.l.b16 %v3523
    %v4587 = vunpack.c.l.b16 %v3524
    %v4588 = vunpack.c.l.b16 %v3525
    %v4589 = vunpack.c.l.b16 %v3526
    %v4590 = vunpack.c.l.b16 %v3527
    %v4591 = vunpack.c.l.b16 %v3528
    %v4592 = vunpack.c.l.b16 %v3529
    %v4593 = vunpack.c.l.b16 %v3530
    %v4594 = vunpack.c.l.b16 %v3531
    %v4595 = vunpack.c.l.b16 %v3532
    %v4596 = vunpack.c.l.b16 %v3533
    %v4597 = vunpack.c.l.b16 %v3534
    %v4598 = vunpack.c.l.b16 %v3535
    %v4599 = vunpack.c.l.b16 %v3536
    %v4600 = vunpack.c.l.b16 %v3537
    %v4601 = vunpack.c.l.b16 %v3538
    %v4602 = vunpack.c.l.b16 %v3539
    %v4603 = vunpack.c.l.b16 %v3540
    %v4604 = vunpack.c.l.b16 %v3541
    %v4605 = vunpack.c.l.b16 %v3542
    %v4606 = vunpack.c.l.b16 %v3543
    %v4607 = vunpack.c.l.b16 %v3544
    %v4608 = vunpack.c.l.b16 %v3545
    %v4609 = vunpack.c.l.b16 %v3546
    %v4610 = vunpack.c.l.b16 %v3547
    %v4611 = vunpack.c.l.b16 %v3548
    %v4612 = vunpack.c.l.b16 %v3549
    %v4613 = vunpack.c.l.b16 %v3550
    %v4614 = vunpack.c.l.b16 %v3551
    %v4615 = vunpack.c.l.b16 %v3552
    %v4616 = vunpack.c.l.b16 %v3553
    %v4617 = vunpack.c.l.b16 %v3554
    %v4618 = vunpack.c.l.b16 %v3555
    %v4619 = vunpack.c.l.b16 %v3556
    %v4620 = vunpack.c.l.b16 %v3557
    %v4621 = vunpack.c.l.b16 %v3558
    %v4622 = vunpack.c.l.b16 %v3559
    %v4623 = vunpack.c.l.b16 %v3560
    %v4624 = vunpack.c.l.b16 %v3561
    %v4625 = vunpack.c.l.b16 %v3562
    %v4626 = vunpack.c.l.b16 %v3563
    %v4627 = vunpack.c.l.b16 %v3564
    %v4628 = vunpack.c.l.b16 %v3565
    %v4629 = vunpack.c.l.b16 %v3566
    %v4630 = vunpack.c.l.b16 %v3567
    %v4631 = vunpack.c.l.b16 %v3568
    %v4632 = vunpack.c.l.b16 %v3569
    %v4633 = vunpack.c.l.b16 %v3570
    %v4634 = vunpack.c.l.b16 %v3571
    %v4635 = vunpack.c.l.b16 %v3572
    %v4636 = vunpack.c.l.b16 %v3573
    %v4637 = vunpack.c.l.b16 %v3574
    %v4638 = vunpack.c.l.b16 %v3575
    %v4639 = vunpack.c.l.b16 %v3576
    %v4640 = vunpack.c.l.b16 %v3577
    %v4641 = vunpack.c.l.b16 %v3578
    %v4642 = vunpack.c.l.b16 %v3579
    %v4643 = vunpack.c.l.b16 %v3580
    %v4644 = vunpack.c.l.b16 %v3581
    %v4645 = vunpack.c.l.b16 %v3582
    %v4646 = vunpack.c.l.b16 %v3583
    %v4647 = vunpack.c.l.b16 %v3584
    %v4648 = vunpack.c.l.b16 %v3585
    %v4649 = vunpack.c.l.b16 %v3586
    %v4650 = vunpack.c.l.b16 %v3587
    %v4651 = vunpack.c.l.b16 %v3588
    %v4652 = vunpack.c.l.b16 %v3589
    %v4653 = vunpack.c.l.b16 %v3590
    %v4654 = vunpack.c.l.b16 %v3591
    %v4655 = vunpack.c.l.b16 %v3592
    %v4656 = vunpack.c.l.b16 %v3593
    %v4657 = vunpack.c.l.b16 %v3594
    %v4658 = vunpack.c.l.b16 %v3595
    %v4659 = vunpack.c.l.b16 %v3596
    %v4660 = vunpack.c.l.b16 %v3597
    %v4661 = vunpack.c.l.b16 %v3598
    %v4662 = vunpack.c.l.b16 %v3599
    %v4663 = vunpack.c.l.b16 %v3600
    %v4664 = vunpack.c.l.b16 %v3601
    %v4665 = vunpack.c.l.b16 %v3602
    %v4666 = vunpack.c.l.b16 %v3603
    %v4667 = vunpack.c.l.b16 %v3604
    %v4668 = vunpack.c.l.b16 %v3605
    %v4669 = vunpack.c.l.b16 %v3606
    %v4670 = vunpack.c.l.b16 %v3607
    %v4671 = vunpack.c.l.b16 %v3608
    %v4672 = vunpack.c.l.b16 %v3609
    %v4673 = vunpack.c.l.b16 %v3610
    %v4674 = vunpack.c.l.b16 %v3611
    %v4675 = vunpack.c.l.b16 %v3612
    %v4676 = vunpack.c.l.b16 %v3613
    %v4677 = vunpack.c.l.b16 %v3614
    %v4678 = vunpack.c.l.b16 %v3615
    %v4679 = vunpack.c.l.b16 %v3616
    %v4680 = vunpack.c.l.b16 %v3617
    %v4681 = vunpack.c.l.b16 %v3618
    %v4682 = vunpack.c.l.b16 %v3619
    %v4683 = vunpack.c.l.b16 %v3620
    %v4684 = vunpack.c.l.b16 %v3621
    %v4685 = vunpack.c.l.b16 %v3622
    %v4686 = vunpack.c.l.b16 %v3623
    %v4687 = vunpack.c.l.b16 %v3624
    %v4688 = vunpack.c.l.b16 %v3625
    %v4689 = vunpack.c.l.b16 %v3626
    %v4690 = vunpack.c.l.b16 %v3627
    %v4691 = vunpack.c.l.b16 %v3628
    %v4692 = vunpack.c.l.b16 %v3629
    %v4693 = vunpack.c.l.b16 %v3630
    %v4694 = vunpack.c.l.b16 %v3631
    %v4695 = vunpack.c.l.b16 %v3632
    %v4696 = vunpack.c.l.b16 %v3633
    %v4697 = vunpack.c.l.b16 %v3634
    %v4698 = vunpack.c.l.b16 %v3635
    %v4699 = vunpack.c.l.b16 %v3636
    %v4700 = vunpack.c.l.b16 %v3637
    %v4701 = vunpack.c.l.b16 %v3638
    %v4702 = vunpack.c.l.b16 %v3639
    %v4703 = vunpack.c.l.b16 %v3640
    %v4704 = vunpack.c.l.b16 %v3641
    %v4705 = vunpack.c.l.b16 %v3642
    %v4706 = vunpack.c.l.b16 %v3643
    %v4707 = vunpack.c.l.b16 %v3644
    %v4708 = vunpack.c.l.b16 %v3645
    %v4709 = vunpack.c.l.b16 %v3646
    %v4710 = vunpack.c.l.b16 %v3647
    %v4711 = vunpack.c.l.b16 %v3648
    %v4712 = vunpack.c.l.b16 %v3649
    %v4713 = vunpack.c.l.b16 %v3650
    %v4714 = vunpack.c.l.b16 %v3651
    %v4715 = vunpack.c.l.b16 %v3652
    %v4716 = vunpack.c.l.b16 %v3653
    %v4717 = vunpack.c.l.b16 %v3654
    %v4718 = vunpack.c.l.b16 %v3655
    %v4719 = vunpack.c.l.b16 %v3656
    %v4720 = vunpack.c.l.b16 %v3657
    %v4721 = vunpack.c.l.b16 %v3658
    %v4722 = vunpack.c.l.b16 %v3659
    %v4723 = vunpack.c.l.b16 %v3660
    %v4724 = vunpack.c.l.b16 %v3661
    %v4725 = vunpack.c.l.b16 %v3662
    %v4726 = vunpack.c.l.b16 %v3663
    %v4727 = vunpack.c.l.b16 %v3664
    %v4728 = vunpack.c.l.b16 %v3665
    %v4729 = vunpack.c.l.b16 %v3666
    %v4730 = vunpack.c.l.b16 %v3667
    %v4731 = vunpack.c.l.b16 %v3668
    %v4732 = vunpack.c.l.b16 %v3669
    %v4733 = vunpack.c.l.b16 %v3670
    %v4734 = vunpack.c.l.b16 %v3671
    %v4735 = vunpack.c.l.b16 %v3672
    %v4736 = vunpack.c.l.b16 %v3673
    %v4737 = vunpack.c.l.b16 %v3674
    %v4738 = vunpack.c.l.b16 %v3675
    %v4739 = vunpack.c.l.b16 %v3676
    %v4740 = vunpack.c.l.b16 %v3677
    %v4741 = vunpack.c.l.b16 %v3678
    %v4742 = vunpack.c.l.b16 %v3679
    %v4743 = vunpack.c.l.b16 %v3680
    %v4744 = vunpack.c.l.b16 %v3681
    %v4745 = vunpack.c.l.b16 %v3682
    %v4746 = vunpack.c.l.b16 %v3683
    %v4747 = vunpack.c.l.b16 %v3684
    %v4748 = vunpack.c.l.b16 %v3685
    %v4749 = vunpack.c.l.b16 %v3686
    %v4750 = vunpack.c.l.b16 %v3687
    %v4751 = vunpack.c.l.b16 %v3688
    %v4752 = vunpack.c.l.b16 %v3689
    %v4753 = vunpack.c.l.b16 %v3690
    %v4754 = vunpack.c.l.b16 %v3691
    %v4755 = vunpack.c.l.b16 %v3692
    %v4756 = vunpack.c.l.b16 %v3693
    %v4757 = vunpack.c.l.b16 %v3694
    %v4758 = vunpack.c.l.b16 %v3695
    %v4759 = vunpack.c.l.b16 %v3696
    %v4760 = vunpack.c.l.b16 %v3697
    %v4761 = vunpack.c.l.b16 %v3698
    %v4762 = vunpack.c.l.b16 %v3699
    %v4763 = vunpack.c.l.b16 %v3700
    %v4764 = vunpack.c.l.b16 %v3701
    %v4765 = vunpack.c.l.b16 %v3702
    %v4766 = vunpack.c.l.b16 %v3703
    %v4767 = vunpack.c.l.b16 %v3704
    %v4768 = vunpack.c.l.b16 %v3705
    %v4769 = vunpack.c.l.b16 %v3706
    %v4770 = vunpack.c.l.b16 %v3707
    %v4771 = vunpack.c.l.b16 %v3708
    %v4772 = vunpack.c.l.b16 %v3709
    %v4773 = vunpack.c.l.b16 %v3710
    %v4774 = vunpack.c.l.b16 %v3711
    %v4775 = vunpack.c.l.b16 %v3712
    %v4776 = vunpack.c.l.b16 %v3713
    %v4777 = vunpack.c.l.b16 %v3714
    %v4778 = vunpack.c.l.b16 %v3715
    %v4779 = vunpack.c.l.b16 %v3716
    %v4780 = vunpack.c.l.b16 %v3717
    %v4781 = vunpack.c.l.b16 %v3718
    %v4782 = vunpack.c.l.b16 %v3719
    %v4783 = vunpack.c.l.b16 %v3720
    %v4784 = vunpack.c.l.b16 %v3721
    %v4785 = vunpack.c.l.b16 %v3722
    %v4786 = vunpack.c.l.b16 %v3723
    %v4787 = vunpack.c.l.b16 %v3724
    %v4788 = vunpack.c.l.b16 %v3725
    %v4789 = vunpack.c.l.b16 %v3726
    %v4790 = vunpack.c.l.b16 %v3727
    %v4791 = vunpack.c.l.b16 %v3728
    %v4792 = vunpack.c.l.b16 %v3729
    %v4793 = vunpack.c.l.b16 %v3730
    %v4794 = vunpack.c.l.b16 %v3731
    %v4795 = vunpack.c.l.b16 %v3732
    %v4796 = vunpack.c.l.b16 %v3733
    %v4797 = vunpack.c.l.b16 %v3734
    %v4798 = vunpack.c.l.b16 %v3735
    %v4799 = vunpack.c.l.b16 %v3736
    %v4800 = vunpack.c.l.b16 %v3737
    %v4801 = vunpack.c.l.b16 %v3738
    %v4802 = vunpack.c.l.b16 %v3739
    %v4803 = vunpack.c.l.b16 %v3740
    %v4804 = vunpack.c.l.b16 %v3741
    %v4805 = vunpack.c.l.b16 %v3742
    %v4806 = vunpack.c.l.b16 %v3743
    %v4807 = vunpack.c.l.b16 %v3744
    %v4808 = vunpack.c.l.b16 %v3745
    %v4809 = vunpack.c.l.b16 %v3746
    %v4810 = vunpack.c.l.b16 %v3747
    %v4811 = vunpack.c.l.b16 %v3748
    %v4812 = vunpack.c.l.b16 %v3749
    %v4813 = vunpack.c.l.b16 %v3750
    %v4814 = vunpack.c.l.b16 %v3751
    %v4815 = vunpack.c.l.b16 %v3752
    %v4816 = vunpack.c.l.b16 %v3753
    %v4817 = vunpack.c.l.b16 %v3754
    %v4818 = vunpack.c.l.b16 %v3755
    %v4819 = vunpack.c.l.b16 %v3756
    %v4820 = vunpack.c.l.b16 %v3757
    %v4821 = vunpack.c.l.b16 %v3758
    %v4822 = vunpack.c.l.b16 %v3759
    %v4823 = vunpack.c.l.b16 %v3760
    %v4824 = vunpack.c.l.b16 %v3761
    %v4825 = vunpack.c.l.b16 %v3762
    %v4826 = vunpack.c.l.b16 %v3763
    %v4827 = vunpack.c.l.b16 %v3764
    %v4828 = vunpack.c.l.b16 %v3765
    %v4829 = vunpack.c.l.b16 %v3766
    %v4830 = vunpack.c.l.b16 %v3767
    %v4831 = vunpack.c.l.b16 %v3768
    %v4832 = vunpack.c.l.b16 %v3769
    %v4833 = vunpack.c.l.b16 %v3770
    %v4834 = vunpack.c.l.b16 %v3771
    %v4835 = vunpack.c.l.b16 %v3772
    %v4836 = vunpack.c.l.b16 %v3773
    %v4837 = vunpack.c.l.b16 %v3774
    %v4838 = vunpack.c.l.b16 %v3775
    %v4839 = vunpack.c.l.b16 %v3776
    %v4840 = vunpack.c.l.b16 %v3777
    %v4841 = vunpack.c.l.b16 %v3778
    %v4842 = vunpack.c.l.b16 %v3779
    %v4843 = vunpack.c.l.b16 %v3780
    %v4844 = vunpack.c.l.b16 %v3781
    %v4845 = vunpack.c.l.b16 %v3782
    %v4846 = vunpack.c.l.b16 %v3783
    %v4847 = vunpack.c.l.b16 %v3784
    %v4848 = vunpack.c.l.b16 %v3785
    %v4849 = vunpack.c.l.b16 %v3786
    %v4850 = vunpack.c.l.b16 %v3787
    %v4851 = vunpack.c.l.b16 %v3788
    %v4852 = vunpack.c.l.b16 %v3789
    %v4853 = vunpack.c.l.b16 %v3790
    %v4854 = vunpack.c.l.b16 %v3791
    %v4855 = vunpack.c.l.b16 %v3792
    %v4856 = vunpack.c.l.b16 %v3793
    %v4857 = vunpack.c.l.b16 %v3794
    %v4858 = vunpack.c.l.b16 %v3795
    %v4859 = vunpack.c.l.b16 %v3796
    %v4860 = vunpack.c.l.b16 %v3797
    %v4861 = vunpack.c.l.b16 %v3798
    %v4862 = vunpack.c.l.b16 %v3799
    %v4863 = vunpack.c.l.b16 %v3800
    %v4864 = vunpack.c.l.b16 %v3801
    %v4865 = vunpack.c.l.b16 %v3802
    %v4866 = vunpack.c.l.b16 %v3803
    %v4867 = vunpack.c.l.b16 %v3804
    %v4868 = vunpack.c.l.b16 %v3805
    %v4869 = vunpack.c.l.b16 %v3806
    %v4870 = vunpack.c.l.b16 %v3807
    %v4871 = vunpack.c.l.b16 %v3808
    %v4872 = vunpack.c.l.b16 %v3809
    %v4873 = vunpack.c.l.b16 %v3810
    %v4874 = vunpack.c.l.b16 %v3811
    %v4875 = vunpack.c.l.b16 %v3812
    %v4876 = vunpack.c.l.b16 %v3813
    %v4877 = vunpack.c.l.b16 %v3814
    %v4878 = vunpack.c.l.b16 %v3815
    %v4879 = vunpack.c.l.b16 %v3816
    %v4880 = vunpack.c.l.b16 %v3817
    %v4881 = vunpack.c.l.b16 %v3818
    %v4882 = vunpack.c.l.b16 %v3819
    %v4883 = vunpack.c.l.b16 %v3820
    %v4884 = vunpack.c.l.b16 %v3821
    %v4885 = vunpack.c.l.b16 %v3822
    %v4886 = vunpack.c.l.b16 %v3823
    %v4887 = vunpack.c.l.b16 %v3824
    %v4888 = vunpack.c.l.b16 %v3825
    %v4889 = vunpack.c.l.b16 %v3826
    %v4890 = vunpack.c.l.b16 %v3827
    %v4891 = vunpack.c.l.b16 %v3828
    %v4892 = vunpack.c.l.b16 %v3829
    %v4893 = vunpack.c.l.b16 %v3830
    %v4894 = vunpack.c.l.b16 %v3831
    %v4895 = vunpack.c.l.b16 %v3832
    %v4896 = vunpack.c.l.b16 %v3833
    %v4897 = vunpack.c.l.b16 %v3834
    %v4898 = vunpack.c.l.b16 %v3835
    %v4899 = vunpack.c.l.b16 %v3836
    %v4900 = vunpack.c.l.b16 %v3837
    %v4901 = vunpack.c.l.b16 %v3838
    %v4902 = vunpack.c.l.b16 %v3839
    %v4903 = vunpack.c.l.b16 %v3840
    %v4904 = vunpack.c.l.b16 %v3841
    %v4905 = vunpack.c.l.b16 %v3842
    %v4906 = vunpack.c.l.b16 %v3843
    %v4907 = vunpack.c.l.b16 %v3844
    %v4908 = vunpack.c.l.b16 %v3845
    %v4909 = vunpack.c.l.b16 %v3846
    %v4910 = vunpack.c.l.b16 %v3847
    %v4911 = vunpack.c.l.b16 %v3848
    %v4912 = vunpack.c.l.b16 %v3849
    %v4913 = vunpack.c.l.b16 %v3850
    %v4914 = vunpack.c.l.b16 %v3851
    %v4915 = vunpack.c.l.b16 %v3852
    %v4916 = vunpack.c.l.b16 %v3853
    %v4917 = vunpack.c.l.b16 %v3854
    %v4918 = vunpack.c.l.b16 %v3855
    %v4919 = vunpack.c.l.b16 %v3856
    %v4920 = vunpack.c.l.b16 %v3857
    %v4921 = vunpack.c.l.b16 %v3858
    %v4922 = vunpack.c.l.b16 %v3859
    %v4923 = vunpack.c.l.b16 %v3860
    %v4924 = vunpack.c.l.b16 %v3861
    %v4925 = vunpack.c.l.b16 %v3862
    %v4926 = vunpack.c.l.b16 %v3863
    %v4927 = vunpack.c.l.b16 %v3864
    %v4928 = vunpack.c.l.b16 %v3865
    %v4929 = vunpack.c.l.b16 %v3866
    %v4930 = vunpack.c.l.b16 %v3867
    %v4931 = vunpack.c.l.b16 %v3868
    %v4932 = vunpack.c.l.b16 %v3869
    %v4933 = vunpack.c.l.b16 %v3870
    %v4934 = vunpack.c.l.b16 %v3871
    %v4935 = vunpack.c.l.b16 %v3872
    %v4936 = vunpack.c.l.b16 %v3873
    %v4937 = vunpack.c.l.b16 %v3874
    %v4938 = vunpack.c.l.b16 %v3875
    %v4939 = vunpack.c.l.b16 %v3876
    %v4940 = vunpack.c.l.b16 %v3877
    %v4941 = vunpack.c.l.b16 %v3878
    %v4942 = vunpack.c.l.b16 %v3879
    %v4943 = vunpack.c.l.b16 %v3880
    %v4944 = vunpack.c.l.b16 %v3881
    %v4945 = vunpack.c.l.b16 %v3882
    %v4946 = vunpack.c.l.b16 %v3883
    %v4947 = vunpack.c.l.b16 %v3884
    %v4948 = vunpack.c.l.b16 %v3885
    %v4949 = vunpack.c.l.b16 %v3886
    %v4950 = vunpack.c.l.b16 %v3887
    %v4951 = vunpack.c.l.b16 %v3888
    %v4952 = vunpack.c.l.b16 %v3889
    %v4953 = vunpack.c.l.b16 %v3890
    %v4954 = vunpack.c.l.b16 %v3891
    %v4955 = vunpack.c.l.b16 %v3892
    %v4956 = vunpack.c.l.b16 %v3893
    %v4957 = vunpack.c.l.b16 %v3894
    %v4958 = vunpack.c.l.b16 %v3895
    %v4959 = vunpack.c.l.b16 %v3896
    %v4960 = vunpack.c.l.b16 %v3897
    %v4961 = vunpack.c.l.b16 %v3898
    %v4962 = vunpack.c.l.b16 %v3899
    %v4963 = vunpack.c.l.b16 %v3900
    %v4964 = vunpack.c.l.b16 %v3901
    %v4965 = vunpack.c.l.b16 %v3902
    %v4966 = vunpack.c.l.b16 %v3903
    %v4967 = vunpack.c.l.b16 %v3904
    %v4968 = vunpack.c.l.b16 %v3905
    %v4969 = vunpack.c.l.b16 %v3906
    %v4970 = vunpack.c.l.b16 %v3907
    %v4971 = vunpack.c.l.b16 %v3908
    %v4972 = vunpack.c.l.b16 %v3909
    %v4973 = vunpack.c.l.b16 %v3910
    %v4974 = vunpack.c.l.b16 %v3911
    %v4975 = vunpack.c.l.b16 %v3912
    %v4976 = vunpack.c.l.b16 %v3913
    %v4977 = vunpack.c.l.b16 %v3914
    %v4978 = vunpack.c.l.b16 %v3915
    %v4979 = vunpack.c.l.b16 %v3916
    %v4980 = vunpack.c.l.b16 %v3917
    %v4981 = vunpack.c.l.b16 %v3918
    %v4982 = vunpack.c.l.b16 %v3919
    %v4983 = vunpack.c.l.b16 %v3920
    %v4984 = vunpack.c.l.b16 %v3921
    %v4985 = vunpack.c.l.b16 %v3922
    %v4986 = vunpack.c.l.b16 %v3923
    %v4987 = vunpack.c.l.b16 %v3924
    %v4988 = vunpack.c.l.b16 %v3925
    %v4989 = vunpack.c.l.b16 %v3926
    %v4990 = vunpack.c.l.b16 %v3927
    %v4991 = vunpack.c.l.b16 %v3928
    %v4992 = vunpack.c.l.b16 %v3929
    %v4993 = vunpack.c.l.b16 %v3930
    %v4994 = vunpack.c.l.b16 %v3931
    %v4995 = vunpack.c.l.b16 %v3932
    %v4996 = vunpack.c.l.b16 %v3933
    %v4997 = vunpack.c.l.b16 %v3934
    %v4998 = vunpack.c.l.b16 %v3935
    %v4999 = vunpack.c.l.b16 %v3936
    %v5000 = vunpack.c.l.b16 %v3937
    %v5001 = vunpack.c.l.b16 %v3938
    %v5002 = vunpack.c.l.b16 %v3939
    %v5003 = vunpack.c.l.b16 %v3940
    %v5004 = vunpack.c.l.b16 %v3941
    %v5005 = vunpack.c.l.b16 %v3942
    %v5006 = vunpack.c.l.b16 %v3943
    %v5007 = vunpack.c.l.b16 %v3944
    %v5008 = vunpack.c.l.b16 %v3945
    %v5009 = vunpack.c.l.b16 %v3946
    %v5010 = vunpack.c.l.b16 %v3947
    %v5011 = vunpack.c.l.b16 %v3948
    %v5012 = vunpack.c.l.b16 %v3949
    %v5013 = vunpack.c.l.b16 %v3950
    %v5014 = vunpack.c.l.b16 %v3951
    %v5015 = vunpack.c.l.b16 %v3952
    %v5016 = vunpack.c.l.b16 %v3953
    %v5017 = vunpack.c.l.b16 %v3954
    %v5018 = vunpack.c.l.b16 %v3955
    %v5019 = vunpack.c.l.b16 %v3956
    %v5020 = vunpack.c.l.b16 %v3957
    %v5021 = vunpack.c.l.b16 %v3958
    %v5022 = vunpack.c.l.b16 %v3959
    %v5023 = vunpack.c.l.b16 %v3960
    %v5024 = vunpack.c.l.b16 %v3961
    %v5025 = vunpack.c.l.b16 %v3962
    %v5026 = vunpack.c.l.b16 %v3963
    %v5027 = vunpack.c.l.b16 %v3964
    %v5028 = vunpack.c.l.b16 %v3965
    %v5029 = vunpack.c.l.b16 %v3966
    %v5030 = vunpack.c.l.b16 %v3967
    %v5031 = vunpack.c.l.b16 %v3968
    %v5032 = vunpack.c.l.b16 %v3969
    %v5033 = vunpack.c.l.b16 %v3970
    %v5034 = vunpack.c.l.b16 %v3971
    %v5035 = vunpack.c.l.b16 %v3972
    %v5036 = vunpack.c.l.b16 %v3973
    %v5037 = vunpack.c.l.b16 %v3974
    %v5038 = vunpack.c.l.b16 %v3975
    %v5039 = vunpack.c.l.b16 %v3976
    %v5040 = vunpack.c.l.b16 %v3977
    %v5041 = vunpack.c.l.b16 %v3978
    %v5042 = vunpack.c.l.b16 %v3979
    %v5043 = vunpack.c.l.b16 %v3980
    %v5044 = vunpack.c.l.b16 %v3981
    %v5045 = vunpack.c.l.b16 %v3982
    %v5046 = vunpack.c.l.b16 %v3983
    %v5047 = vunpack.c.l.b16 %v3984
    %v5048 = vunpack.c.l.b16 %v3985
    %v5049 = vunpack.c.l.b16 %v3986
    %v5050 = vunpack.c.l.b16 %v3987
    %v5051 = vunpack.c.l.b16 %v3988
    %v5052 = vunpack.c.l.b16 %v3989
    %v5053 = vunpack.c.l.b16 %v3990
    %v5054 = vunpack.c.l.b16 %v3991
    %v5055 = vunpack.c.l.b16 %v3992
    %v5056 = vunpack.c.l.b16 %v3993
    %v5057 = vunpack.c.l.b16 %v3994
    %v5058 = vunpack.c.l.b16 %v3995
    %v5059 = vunpack.c.l.b16 %v3996
    %v5060 = vunpack.c.l.b16 %v3997
    %v5061 = vunpack.c.l.b16 %v3998
    %v5062 = vunpack.c.l.b16 %v3999
    %v5063 = vpack.c.b16 %v4536, %v4535
    %v5064 = vpack.c.b16 %v4538, %v4537
    %v5065 = vpack.c.b16 %v4540, %v4539
    %v5066 = vpack.c.b16 %v4542, %v4541
    %v5067 = vpack.c.b16 %v4544, %v4543
    %v5068 = vpack.c.b16 %v4546, %v4545
    %v5069 = vpack.c.b16 %v4548, %v4547
    %v5070 = vpack.c.b16 %v4550, %v4549
    %v5071 = vpack.c.b16 %v4552, %v4551
    %v5072 = vpack.c.b16 %v4554, %v4553
    %v5073 = vpack.c.b16 %v4556, %v4555
    %v5074 = vpack.c.b16 %v4558, %v4557
    %v5075 = vpack.c.b16 %v4560, %v4559
    %v5076 = vpack.c.b16 %v4562, %v4561
    %v5077 = vpack.c.b16 %v4564, %v4563
    %v5078 = vpack.c.b16 %v4566, %v4565
    %v5079 = vpack.c.b16 %v4568, %v4567
    %v5080 = vpack.c.b16 %v4570, %v4569
    %v5081 = vpack.c.b16 %v4572, %v4571
    %v5082 = vpack.c.b16 %v4574, %v4573
    %v5083 = vpack.c.b16 %v4576, %v4575
    %v5084 = vpack.c.b16 %v4578, %v4577
    %v5085 = vpack.c.b16 %v4580, %v4579
    %v5086 = vpack.c.b16 %v4582, %v4581
    %v5087 = vpack.c.b16 %v4584, %v4583
    %v5088 = vpack.c.b16 %v4586, %v4585
    %v5089 = vpack.c.b16 %v4588, %v4587
    %v5090 = vpack.c.b16 %v4590, %v4589
    %v5091 = vpack.c.b16 %v4592, %v4591
    %v5092 = vpack.c.b16 %v4594, %v4593
    %v5093 = vpack.c.b16 %v4596, %v4595
    %v5094 = vpack.c.b16 %v4598, %v4597
    %v5095 = vpack.c.b16 %v4600, %v4599
    %v5096 = vpack.c.b16 %v4602, %v4601
    %v5097 = vpack.c.b16 %v4604, %v4603
    %v5098 = vpack.c.b16 %v4606, %v4605
    %v5099 = vpack.c.b16 %v4608, %v4607
    %v5100 = vpack.c.b16 %v4610, %v4609
    %v5101 = vpack.c.b16 %v4612, %v4611
    %v5102 = vpack.c.b16 %v4614, %v4613
    %v5103 = vpack.c.b16 %v4616, %v4615
    %v5104 = vpack.c.b16 %v4618, %v4617
    %v5105 = vpack.c.b16 %v4620, %v4619
    %v5106 = vpack.c.b16 %v4622, %v4621
    %v5107 = vpack.c.b16 %v4624, %v4623
    %v5108 = vpack.c.b16 %v4626, %v4625
    %v5109 = vpack.c.b16 %v4628, %v4627
    %v5110 = vpack.c.b16 %v4630, %v4629
    %v5111 = vpack.c.b16 %v4632, %v4631
    %v5112 = vpack.c.b16 %v4634, %v4633
    %v5113 = vpack.c.b16 %v4636, %v4635
    %v5114 = vpack.c.b16 %v4638, %v4637
    %v5115 = vpack.c.b16 %v4640, %v4639
    %v5116 = vpack.c.b16 %v4642, %v4641
    %v5117 = vpack.c.b16 %v4644, %v4643
    %v5118 = vpack.c.b16 %v4646, %v4645
    %v5119 = vpack.c.b16 %v4648, %v4647
    %v5120 = vpack.c.b16 %v4650, %v4649
    %v5121 = vpack.c.b16 %v4652, %v4651
    %v5122 = vpack.c.b16 %v4654, %v4653
    %v5123 = vpack.c.b16 %v4656, %v4655
    %v5124 = vpack.c.b16 %v4658, %v4657
    %v5125 = vpack.c.b16 %v4660, %v4659
    %v5126 = vpack.c.b16 %v4662, %v4661
    %v5127 = vpack.c.b16 %v4664, %v4663
    %v5128 = vpack.c.b16 %v4666, %v4665
    %v5129 = vpack.c.b16 %v4668, %v4667
    %v5130 = vpack.c.b16 %v4670, %v4669
    %v5131 = vpack.c.b16 %v4672, %v4671
    %v5132 = vpack.c.b16 %v4674, %v4673
    %v5133 = vpack.c.b16 %v4676, %v4675
    %v5134 = vpack.c.b16 %v4678, %v4677
    %v5135 = vpack.c.b16 %v4680, %v4679
    %v5136 = vpack.c.b16 %v4682, %v4681
    %v5137 = vpack.c.b16 %v4684, %v4683
    %v5138 = vpack.c.b16 %v4686, %v4685
    %v5139 = vpack.c.b16 %v4688, %v4687
    %v5140 = vpack.c.b16 %v4690, %v4689
    %v5141 = vpack.c.b16 %v4692, %v4691
    %v5142 = vpack.c.b16 %v4694, %v4693
    %v5143 = vpack.c.b16 %v4696, %v4695
    %v5144 = vpack.c.b16 %v4698, %v4697
    %v5145 = vpack.c.b16 %v4700, %v4699
    %v5146 = vpack.c.b16 %v4702, %v4701
    %v5147 = vpack.c.b16 %v4704, %v4703
    %v5148 = vpack.c.b16 %v4706, %v4705
    %v5149 = vpack.c.b16 %v4708, %v4707
    %v5150 = vpack.c.b16 %v4710, %v4709
    %v5151 = vpack.c.b16 %v4712, %v4711
    %v5152 = vpack.c.b16 %v4714, %v4713
    %v5153 = vpack.c.b16 %v4716, %v4715
    %v5154 = vpack.c.b16 %v4718, %v4717
    %v5155 = vpack.c.b16 %v4720, %v4719
    %v5156 = vpack.c.b16 %v4722, %v4721
    %v5157 = vpack.c.b16 %v4724, %v4723
    %v5158 = vpack.c.b16 %v4726, %v4725
    %v5159 = vpack.c.b16 %v4728, %v4727
    %v5160 = vpack.c.b16 %v4730, %v4729
    %v5161 = vpack.c.b16 %v4732, %v4731
    %v5162 = vpack.c.b16 %v4734, %v4733
    %v5163 = vpack.c.b16 %v4736, %v4735
    %v5164 = vpack.c.b16 %v4738, %v4737
    %v5165 = vpack.c.b16 %v4740, %v4739
    %v5166 = vpack.c.b16 %v4742, %v4741
    %v5167 = vpack.c.b16 %v4744, %v4743
    %v5168 = vpack.c.b16 %v4746, %v4745
    %v5169 = vpack.c.b16 %v4748, %v4747
    %v5170 = vpack.c.b16 %v4750, %v4749
    %v5171 = vpack.c.b16 %v4752, %v4751
    %v5172 = vpack.c.b16 %v4754, %v4753
    %v5173 = vpack.c.b16 %v4756, %v4755
    %v5174 = vpack.c.b16 %v4758, %v4757
    %v5175 = vpack.c.b16 %v4760, %v4759
    %v5176 = vpack.c.b16 %v4762, %v4761
    %v5177 = vpack.c.b16 %v4764, %v4763
    %v5178 = vpack.c.b16 %v4766, %v4765
    %v5179 = vpack.c.b16 %v4768, %v4767
    %v5180 = vpack.c.b16 %v4770, %v4769
    %v5181 = vpack.c.b16 %v4772, %v4771
    %v5182 = vpack.c.b16 %v4774, %v4773
    %v5183 = vpack.c.b16 %v4776, %v4775
    %v5184 = vpack.c.b16 %v4778, %v4777
    %v5185 = vpack.c.b16 %v4780, %v4779
    %v5186 = vpack.c.b16 %v4782, %v4781
    %v5187 = vpack.c.b16 %v4784, %v4783
    %v5188 = vpack.c.b16 %v4786, %v4785
    %v5189 = vpack.c.b16 %v4788, %v4787
    %v5190 = vpack.c.b16 %v4790, %v4789
    %v5191 = vpack.c.b16 %v4792, %v4791
    %v5192 = vpack.c.b16 %v4794, %v4793
    %v5193 = vpack.c.b16 %v4796, %v4795
    %v5194 = vpack.c.b16 %v4798, %v4797
    %v5195 = vpack.c.b16 %v4800, %v4799
    %v5196 = vpack.c.b16 %v4802, %v4801
    %v5197 = vpack.c.b16 %v4804, %v4803
    %v5198 = vpack.c.b16 %v4806, %v4805
    %v5199 = vpack.c.b16 %v4808, %v4807
    %v5200 = vpack.c.b16 %v4810, %v4809
    %v5201 = vpack.c.b16 %v4812, %v4811
    %v5202 = vpack.c.b16 %v4814, %v4813
    %v5203 = vpack.c.b16 %v4816, %v4815
    %v5204 = vpack.c.b16 %v4818, %v4817
    %v5205 = vpack.c.b16 %v4820, %v4819
    %v5206 = vpack.c.b16 %v4822, %v4821
    %v5207 = vpack.c.b16 %v4824, %v4823
    %v5208 = vpack.c.b16 %v4826, %v4825
    %v5209 = vpack.c.b16 %v4828, %v4827
    %v5210 = vpack.c.b16 %v4830, %v4829
    %v5211 = vpack.c.b16 %v4832, %v4831
    %v5212 = vpack.c.b16 %v4834, %v4833
    %v5213 = vpack.c.b16 %v4836, %v4835
    %v5214 = vpack.c.b16 %v4838, %v4837
    %v5215 = vpack.c.b16 %v4840, %v4839
    %v5216 = vpack.c.b16 %v4842, %v4841
    %v5217 = vpack.c.b16 %v4844, %v4843
    %v5218 = vpack.c.b16 %v4846, %v4845
    %v5219 = vpack.c.b16 %v4848, %v4847
    %v5220 = vpack.c.b16 %v4850, %v4849
    %v5221 = vpack.c.b16 %v4852, %v4851
    %v5222 = vpack.c.b16 %v4854, %v4853
    %v5223 = vpack.c.b16 %v4856, %v4855
    %v5224 = vpack.c.b16 %v4858, %v4857
    %v5225 = vpack.c.b16 %v4860, %v4859
    %v5226 = vpack.c.b16 %v4862, %v4861
    %v5227 = vpack.c.b16 %v4864, %v4863
    %v5228 = vpack.c.b16 %v4866, %v4865
    %v5229 = vpack.c.b16 %v4868, %v4867
    %v5230 = vpack.c.b16 %v4870, %v4869
    %v5231 = vpack.c.b16 %v4872, %v4871
    %v5232 = vpack.c.b16 %v4874, %v4873
    %v5233 = vpack.c.b16 %v4876, %v4875
    %v5234 = vpack.c.b16 %v4878, %v4877
    %v5235 = vpack.c.b16 %v4880, %v4879
    %v5236 = vpack.c.b16 %v4882, %v4881
    %v5237 = vpack.c.b16 %v4884, %v4883
    %v5238 = vpack.c.b16 %v4886, %v4885
    %v5239 = vpack.c.b16 %v4888, %v4887
    %v5240 = vpack.c.b16 %v4890, %v4889
    %v5241 = vpack.c.b16 %v4892, %v4891
    %v5242 = vpack.c.b16 %v4894, %v4893
    %v5243 = vpack.c.b16 %v4896, %v4895
    %v5244 = vpack.c.b16 %v4898, %v4897
    %v5245 = vpack.c.b16 %v4900, %v4899
    %v5246 = vpack.c.b16 %v4902, %v4901
    %v5247 = vpack.c.b16 %v4904, %v4903
    %v5248 = vpack.c.b16 %v4906, %v4905
    %v5249 = vpack.c.b16 %v4908, %v4907
    %v5250 = vpack.c.b16 %v4910, %v4909
    %v5251 = vpack.c.b16 %v4912, %v4911
    %v5252 = vpack.c.b16 %v4914, %v4913
    %v5253 = vpack.c.b16 %v4916, %v4915
    %v5254 = vpack.c.b16 %v4918, %v4917
    %v5255 = vpack.c.b16 %v4920, %v4919
    %v5256 = vpack.c.b16 %v4922, %v4921
    %v5257 = vpack.c.b16 %v4924, %v4923
    %v5258 = vpack.c.b16 %v4926, %v4925
    %v5259 = vpack.c.b16 %v4928, %v4927
    %v5260 = vpack.c.b16 %v4930, %v4929
    %v5261 = vpack.c.b16 %v4932, %v4931
    %v5262 = vpack.c.b16 %v4934, %v4933
    %v5263 = vpack.c.b16 %v4936, %v4935
    %v5264 = vpack.c.b16 %v4938, %v4937
    %v5265 = vpack.c.b16 %v4940, %v4939
    %v5266 = vpack.c.b16 %v4942, %v4941
    %v5267 = vpack.c.b16 %v4944, %v4943
    %v5268 = vpack.c.b16 %v4946, %v4945
    %v5269 = vpack.c.b16 %v4948, %v4947
    %v5270 = vpack.c.b16 %v4950, %v4949
    %v5271 = vpack.c.b16 %v4952, %v4951
    %v5272 = vpack.c.b16 %v4954, %v4953
    %v5273 = vpack.c.b16 %v4956, %v4955
    %v5274 = vpack.c.b16 %v4958, %v4957
    %v5275 = vpack.c.b16 %v4960, %v4959
    %v5276 = vpack.c.b16 %v4962, %v4961
    %v5277 = vpack.c.b16 %v4964, %v4963
    %v5278 = vpack.c.b16 %v4966, %v4965
    %v5279 = vpack.c.b16 %v4968, %v4967
    %v5280 = vpack.c.b16 %v4970, %v4969
    %v5281 = vpack.c.b16 %v4972, %v4971
    %v5282 = vpack.c.b16 %v4974, %v4973
    %v5283 = vpack.c.b16 %v4976, %v4975
    %v5284 = vpack.c.b16 %v4978, %v4977
    %v5285 = vpack.c.b16 %v4980, %v4979
    %v5286 = vpack.c.b16 %v4982, %v4981
    %v5287 = vpack.c.b16 %v4984, %v4983
    %v5288 = vpack.c.b16 %v4986, %v4985
    %v5289 = vpack.c.b16 %v4988, %v4987
    %v5290 = vpack.c.b16 %v4990, %v4989
    %v5291 = vpack.c.b16 %v4992, %v4991
    %v5292 = vpack.c.b16 %v4994, %v4993
    %v5293 = vpack.c.b16 %v4996, %v4995
    %v5294 = vpack.c.b16 %v4998, %v4997
    %v5295 = vpack.c.b16 %v5000, %v4999
    %v5296 = vpack.c.b16 %v5002, %v5001
    %v5297 = vpack.c.b16 %v5004, %v5003
    %v5298 = vpack.c.b16 %v5006, %v5005
    %v5299 = vpack.c.b16 %v5008, %v5007
    %v5300 = vpack.c.b16 %v5010, %v5009
    %v5301 = vpack.c.b16 %v5012, %v5011
    %v5302 = vpack.c.b16 %v5014, %v5013
    %v5303 = vpack.c.b16 %v5016, %v5015
    %v5304 = vpack.c.b16 %v5018, %v5017
    %v5305 = vpack.c.b16 %v5020, %v5019
    %v5306 = vpack.c.b16 %v5022, %v5021
    %v5307 = vpack.c.b16 %v5024, %v5023
    %v5308 = vpack.c.b16 %v5026, %v5025
    %v5309 = vpack.c.b16 %v5028, %v5027
    %v5310 = vpack.c.b16 %v5030, %v5029
    %v5311 = vpack.c.b16 %v5032, %v5031
    %v5312 = vpack.c.b16 %v5034, %v5033
    %v5313 = vpack.c.b16 %v5036, %v5035
    %v5314 = vpack.c.b16 %v5038, %v5037
    %v5315 = vpack.c.b16 %v5040, %v5039
    %v5316 = vpack.c.b16 %v5042, %v5041
    %v5317 = vpack.c.b16 %v5044, %v5043
    %v5318 = vpack.c.b16 %v5046, %v5045
    %v5319 = vpack.c.b16 %v5048, %v5047
    %v5320 = vpack.c.b16 %v5050, %v5049
    %v5321 = vpack.c.b16 %v5052, %v5051
    %v5322 = vpack.c.b16 %v5054, %v5053
    %v5323 = vpack.c.b16 %v5056, %v5055
    %v5324 = vpack.c.b16 %v5058, %v5057
    %v5325 = vpack.c.b16 %v5060, %v5059
    %v5326 = vpack.c.b16 %v5062, %v5061
    %5591 = vmatprep.subr.bf16.mxu0 0
    %5592 = vmatpush1.bf16.msra.mxu0 %v5070
    %5593 = vmatprep.subr.bf16.mxu0 0
    %5594 = vmatpush1.bf16.msra.mxu0 %v5069
    %5595 = vmatprep.subr.bf16.mxu0 0
    %5596 = vmatpush1.bf16.msra.mxu0 %v5068
    %5597 = vmatprep.subr.bf16.mxu0 0
    %5598 = vmatpush1.bf16.msra.mxu0 %v5067
    %5599 = vmatprep.subr.bf16.mxu0 0
    %5600 = vmatpush1.bf16.msra.mxu0 %v5066
    %5601 = vmatprep.subr.bf16.mxu0 0
    %5602 = vmatpush1.bf16.msra.mxu0 %v5065
    %5603 = vmatprep.subr.bf16.mxu0 0
    %5604 = vmatpush1.bf16.msra.mxu0 %v5064
    %5605 = vmatprep.subr.bf16.mxu0 0
    %5606 = vmatpush1.bf16.msra.mxu0 %v5063
    %5607 = vmatprep.subr.bf16.mxu0 0
    %5608 = vmatpush2.bf16.msra.mxu0 %v5078
    %5609 = vmatprep.subr.bf16.mxu0 0
    %5610 = vmatpush2.bf16.msra.mxu0 %v5077
    %5611 = vmatprep.subr.bf16.mxu0 0
    %5612 = vmatpush2.bf16.msra.mxu0 %v5076
    %5613 = vmatprep.subr.bf16.mxu0 0
    %5614 = vmatpush2.bf16.msra.mxu0 %v5075
    %5615 = vmatprep.subr.bf16.mxu0 0
    %5616 = vmatpush2.bf16.msra.mxu0 %v5074
    %5617 = vmatprep.subr.bf16.mxu0 0
    %5618 = vmatpush2.bf16.msra.mxu0 %v5073
    %5619 = vmatprep.subr.bf16.mxu0 0
    %5620 = vmatpush2.bf16.msra.mxu0 %v5072
    %5621 = vmatprep.subr.bf16.mxu0 0
    %5622 = vmatpush2.bf16.msra.mxu0 %v5071
    %5623 = vmatprep.mubr.bf16.mxu0 %v3440
    %5624 = vmatmul.mubr.bf16.gmra.mxu0 %v3439
    %v5625 = vpop.f32.mrf.mxu0
    %v5626 = vadd.f32 %v4005, %v5625
    %v5627 = vpop.f32.mrf.mxu0
    %v5628 = vpop.f32.mrf.mxu0
    %v5629 = vpop.f32.mrf.mxu0
    %5630 = vdwg.mxu0
    %5631 = vmatprep.subr.bf16.mxu0 0
    %5632 = vmatpush1.bf16.msra.mxu0 %v5086
    %5633 = vmatprep.subr.bf16.mxu0 0
    %5634 = vmatpush1.bf16.msra.mxu0 %v5085
    %5635 = vmatprep.subr.bf16.mxu0 0
    %5636 = vmatpush1.bf16.msra.mxu0 %v5084
    %5637 = vmatprep.subr.bf16.mxu0 0
    %5638 = vmatpush1.bf16.msra.mxu0 %v5083
    %5639 = vmatprep.subr.bf16.mxu0 0
    %5640 = vmatpush1.bf16.msra.mxu0 %v5082
    %5641 = vmatprep.subr.bf16.mxu0 0
    %5642 = vmatpush1.bf16.msra.mxu0 %v5081
    %5643 = vmatprep.subr.bf16.mxu0 0
    %5644 = vmatpush1.bf16.msra.mxu0 %v5080
    %5645 = vmatprep.subr.bf16.mxu0 0
    %5646 = vmatpush1.bf16.msra.mxu0 %v5079
    %5647 = vmatprep.subr.bf16.mxu0 0
    %5648 = vmatpush2.bf16.msra.mxu0 %v5094
    %5649 = vmatprep.subr.bf16.mxu0 0
    %5650 = vmatpush2.bf16.msra.mxu0 %v5093
    %5651 = vmatprep.subr.bf16.mxu0 0
    %5652 = vmatpush2.bf16.msra.mxu0 %v5092
    %5653 = vmatprep.subr.bf16.mxu0 0
    %5654 = vmatpush2.bf16.msra.mxu0 %v5091
    %5655 = vmatprep.subr.bf16.mxu0 0
    %5656 = vmatpush2.bf16.msra.mxu0 %v5090
    %5657 = vmatprep.subr.bf16.mxu0 0
    %5658 = vmatpush2.bf16.msra.mxu0 %v5089
    %5659 = vmatprep.subr.bf16.mxu0 0
    %5660 = vmatpush2.bf16.msra.mxu0 %v5088
    %5661 = vmatprep.subr.bf16.mxu0 0
    %5662 = vmatpush2.bf16.msra.mxu0 %v5087
    %5663 = vmatprep.mubr.bf16.mxu0 %v3442
    %5664 = vmatmul.mubr.bf16.gmra.mxu0 %v3441
    %v5665 = vpop.f32.mrf.mxu0
    %v5666 = vadd.f32 %v5626, %v5665
    %v5667 = vpop.f32.mrf.mxu0
    %v5668 = vpop.f32.mrf.mxu0
    %v5669 = vpop.f32.mrf.mxu0
    %5670 = vdwg.mxu0
    %5671 = vmatprep.subr.bf16.mxu0 0
    %5672 = vmatpush1.bf16.msra.mxu0 %v5102
    %5673 = vmatprep.subr.bf16.mxu0 0
    %5674 = vmatpush1.bf16.msra.mxu0 %v5101
    %5675 = vmatprep.subr.bf16.mxu0 0
    %5676 = vmatpush1.bf16.msra.mxu0 %v5100
    %5677 = vmatprep.subr.bf16.mxu0 0
    %5678 = vmatpush1.bf16.msra.mxu0 %v5099
    %5679 = vmatprep.subr.bf16.mxu0 0
    %5680 = vmatpush1.bf16.msra.mxu0 %v5098
    %5681 = vmatprep.subr.bf16.mxu0 0
    %5682 = vmatpush1.bf16.msra.mxu0 %v5097
    %5683 = vmatprep.subr.bf16.mxu0 0
    %5684 = vmatpush1.bf16.msra.mxu0 %v5096
    %5685 = vmatprep.subr.bf16.mxu0 0
    %5686 = vmatpush1.bf16.msra.mxu0 %v5095
    %5687 = vmatprep.subr.bf16.mxu0 0
    %5688 = vmatpush2.bf16.msra.mxu0 %v5110
    %5689 = vmatprep.subr.bf16.mxu0 0
    %5690 = vmatpush2.bf16.msra.mxu0 %v5109
    %5691 = vmatprep.subr.bf16.mxu0 0
    %5692 = vmatpush2.bf16.msra.mxu0 %v5108
    %5693 = vmatprep.subr.bf16.mxu0 0
    %5694 = vmatpush2.bf16.msra.mxu0 %v5107
    %5695 = vmatprep.subr.bf16.mxu0 0
    %5696 = vmatpush2.bf16.msra.mxu0 %v5106
    %5697 = vmatprep.subr.bf16.mxu0 0
    %5698 = vmatpush2.bf16.msra.mxu0 %v5105
    %5699 = vmatprep.subr.bf16.mxu0 0
    %5700 = vmatpush2.bf16.msra.mxu0 %v5104
    %5701 = vmatprep.subr.bf16.mxu0 0
    %5702 = vmatpush2.bf16.msra.mxu0 %v5103
    %5703 = vmatprep.mubr.bf16.mxu0 %v3444
    %5704 = vmatmul.mubr.bf16.gmra.mxu0 %v3443
    %v5705 = vpop.f32.mrf.mxu0
    %v5706 = vadd.f32 %v5666, %v5705
    %v5707 = vpop.f32.mrf.mxu0
    %v5708 = vpop.f32.mrf.mxu0
    %v5709 = vpop.f32.mrf.mxu0
    %5710 = vdwg.mxu0
    %5711 = vmatprep.subr.bf16.mxu0 0
    %5712 = vmatpush1.bf16.msra.mxu0 %v5118
    %5713 = vmatprep.subr.bf16.mxu0 0
    %5714 = vmatpush1.bf16.msra.mxu0 %v5117
    %5715 = vmatprep.subr.bf16.mxu0 0
    %5716 = vmatpush1.bf16.msra.mxu0 %v5116
    %5717 = vmatprep.subr.bf16.mxu0 0
    %5718 = vmatpush1.bf16.msra.mxu0 %v5115
    %5719 = vmatprep.subr.bf16.mxu0 0
    %5720 = vmatpush1.bf16.msra.mxu0 %v5114
    %5721 = vmatprep.subr.bf16.mxu0 0
    %5722 = vmatpush1.bf16.msra.mxu0 %v5113
    %5723 = vmatprep.subr.bf16.mxu0 0
    %5724 = vmatpush1.bf16.msra.mxu0 %v5112
    %5725 = vmatprep.subr.bf16.mxu0 0
    %5726 = vmatpush1.bf16.msra.mxu0 %v5111
    %5727 = vmatprep.subr.bf16.mxu0 0
    %5728 = vmatpush2.bf16.msra.mxu0 %v5126
    %5729 = vmatprep.subr.bf16.mxu0 0
    %5730 = vmatpush2.bf16.msra.mxu0 %v5125
    %5731 = vmatprep.subr.bf16.mxu0 0
    %5732 = vmatpush2.bf16.msra.mxu0 %v5124
    %5733 = vmatprep.subr.bf16.mxu0 0
    %5734 = vmatpush2.bf16.msra.mxu0 %v5123
    %5735 = vmatprep.subr.bf16.mxu0 0
    %5736 = vmatpush2.bf16.msra.mxu0 %v5122
    %5737 = vmatprep.subr.bf16.mxu0 0
    %5738 = vmatpush2.bf16.msra.mxu0 %v5121
    %5739 = vmatprep.subr.bf16.mxu0 0
    %5740 = vmatpush2.bf16.msra.mxu0 %v5120
    %5741 = vmatprep.subr.bf16.mxu0 0
    %5742 = vmatpush2.bf16.msra.mxu0 %v5119
    %5743 = vmatprep.mubr.bf16.mxu0 %v3446
    %5744 = vmatmul.mubr.bf16.gmra.mxu0 %v3445
    %v5745 = vpop.f32.mrf.mxu0
    %v5746 = vadd.f32 %v5706, %v5745
    %v5747 = vpop.f32.mrf.mxu0
    %v5748 = vpop.f32.mrf.mxu0
    %v5749 = vpop.f32.mrf.mxu0
    %5750 = vdwg.mxu0
    %5751 = vmatprep.subr.bf16.mxu0 0
    %5752 = vmatpush1.bf16.msra.mxu0 %v5134
    %5753 = vmatprep.subr.bf16.mxu0 0
    %5754 = vmatpush1.bf16.msra.mxu0 %v5133
    %5755 = vmatprep.subr.bf16.mxu0 0
    %5756 = vmatpush1.bf16.msra.mxu0 %v5132
    %5757 = vmatprep.subr.bf16.mxu0 0
    %5758 = vmatpush1.bf16.msra.mxu0 %v5131
    %5759 = vmatprep.subr.bf16.mxu0 0
    %5760 = vmatpush1.bf16.msra.mxu0 %v5130
    %5761 = vmatprep.subr.bf16.mxu0 0
    %5762 = vmatpush1.bf16.msra.mxu0 %v5129
    %5763 = vmatprep.subr.bf16.mxu0 0
    %5764 = vmatpush1.bf16.msra.mxu0 %v5128
    %5765 = vmatprep.subr.bf16.mxu0 0
    %5766 = vmatpush1.bf16.msra.mxu0 %v5127
    %5767 = vmatprep.subr.bf16.mxu0 0
    %5768 = vmatpush2.bf16.msra.mxu0 %v5142
    %5769 = vmatprep.subr.bf16.mxu0 0
    %5770 = vmatpush2.bf16.msra.mxu0 %v5141
    %5771 = vmatprep.subr.bf16.mxu0 0
    %5772 = vmatpush2.bf16.msra.mxu0 %v5140
    %5773 = vmatprep.subr.bf16.mxu0 0
    %5774 = vmatpush2.bf16.msra.mxu0 %v5139
    %5775 = vmatprep.subr.bf16.mxu0 0
    %5776 = vmatpush2.bf16.msra.mxu0 %v5138
    %5777 = vmatprep.subr.bf16.mxu0 0
    %5778 = vmatpush2.bf16.msra.mxu0 %v5137
    %5779 = vmatprep.subr.bf16.mxu0 0
    %5780 = vmatpush2.bf16.msra.mxu0 %v5136
    %5781 = vmatprep.subr.bf16.mxu0 0
    %5782 = vmatpush2.bf16.msra.mxu0 %v5135
    %5783 = vmatprep.mubr.bf16.mxu0 %v3448
    %5784 = vmatmul.mubr.bf16.gmra.mxu0 %v3447
    %v5785 = vpop.f32.mrf.mxu0
    %v5786 = vadd.f32 %v5746, %v5785
    %v5787 = vpop.f32.mrf.mxu0
    %v5788 = vpop.f32.mrf.mxu0
    %v5789 = vpop.f32.mrf.mxu0
    %5790 = vdwg.mxu0
    %5791 = vmatprep.subr.bf16.mxu0 0
    %5792 = vmatpush1.bf16.msra.mxu0 %v5150
    %5793 = vmatprep.subr.bf16.mxu0 0
    %5794 = vmatpush1.bf16.msra.mxu0 %v5149
    %5795 = vmatprep.subr.bf16.mxu0 0
    %5796 = vmatpush1.bf16.msra.mxu0 %v5148
    %5797 = vmatprep.subr.bf16.mxu0 0
    %5798 = vmatpush1.bf16.msra.mxu0 %v5147
    %5799 = vmatprep.subr.bf16.mxu0 0
    %5800 = vmatpush1.bf16.msra.mxu0 %v5146
    %5801 = vmatprep.subr.bf16.mxu0 0
    %5802 = vmatpush1.bf16.msra.mxu0 %v5145
    %5803 = vmatprep.subr.bf16.mxu0 0
    %5804 = vmatpush1.bf16.msra.mxu0 %v5144
    %5805 = vmatprep.subr.bf16.mxu0 0
    %5806 = vmatpush1.bf16.msra.mxu0 %v5143
    %5807 = vmatprep.subr.bf16.mxu0 0
    %5808 = vmatpush2.bf16.msra.mxu0 %v5158
    %5809 = vmatprep.subr.bf16.mxu0 0
    %5810 = vmatpush2.bf16.msra.mxu0 %v5157
    %5811 = vmatprep.subr.bf16.mxu0 0
    %5812 = vmatpush2.bf16.msra.mxu0 %v5156
    %5813 = vmatprep.subr.bf16.mxu0 0
    %5814 = vmatpush2.bf16.msra.mxu0 %v5155
    %5815 = vmatprep.subr.bf16.mxu0 0
    %5816 = vmatpush2.bf16.msra.mxu0 %v5154
    %5817 = vmatprep.subr.bf16.mxu0 0
    %5818 = vmatpush2.bf16.msra.mxu0 %v5153
    %5819 = vmatprep.subr.bf16.mxu0 0
    %5820 = vmatpush2.bf16.msra.mxu0 %v5152
    %5821 = vmatprep.subr.bf16.mxu0 0
    %5822 = vmatpush2.bf16.msra.mxu0 %v5151
    %5823 = vmatprep.mubr.bf16.mxu0 %v3450
    %5824 = vmatmul.mubr.bf16.gmra.mxu0 %v3449
    %v5825 = vpop.f32.mrf.mxu0
    %v5826 = vadd.f32 %v5786, %v5825
    %v5827 = vpop.f32.mrf.mxu0
    %v5828 = vpop.f32.mrf.mxu0
    %v5829 = vpop.f32.mrf.mxu0
    %5830 = vdwg.mxu0
    %5831 = vmatprep.subr.bf16.mxu0 0
    %5832 = vmatpush1.bf16.msra.mxu0 %v5166
    %5833 = vmatprep.subr.bf16.mxu0 0
    %5834 = vmatpush1.bf16.msra.mxu0 %v5165
    %5835 = vmatprep.subr.bf16.mxu0 0
    %5836 = vmatpush1.bf16.msra.mxu0 %v5164
    %5837 = vmatprep.subr.bf16.mxu0 0
    %5838 = vmatpush1.bf16.msra.mxu0 %v5163
    %5839 = vmatprep.subr.bf16.mxu0 0
    %5840 = vmatpush1.bf16.msra.mxu0 %v5162
    %5841 = vmatprep.subr.bf16.mxu0 0
    %5842 = vmatpush1.bf16.msra.mxu0 %v5161
    %5843 = vmatprep.subr.bf16.mxu0 0
    %5844 = vmatpush1.bf16.msra.mxu0 %v5160
    %5845 = vmatprep.subr.bf16.mxu0 0
    %5846 = vmatpush1.bf16.msra.mxu0 %v5159
    %5847 = vmatprep.subr.bf16.mxu0 0
    %5848 = vmatpush2.bf16.msra.mxu0 %v5174
    %5849 = vmatprep.subr.bf16.mxu0 0
    %5850 = vmatpush2.bf16.msra.mxu0 %v5173
    %5851 = vmatprep.subr.bf16.mxu0 0
    %5852 = vmatpush2.bf16.msra.mxu0 %v5172
    %5853 = vmatprep.subr.bf16.mxu0 0
    %5854 = vmatpush2.bf16.msra.mxu0 %v5171
    %5855 = vmatprep.subr.bf16.mxu0 0
    %5856 = vmatpush2.bf16.msra.mxu0 %v5170
    %5857 = vmatprep.subr.bf16.mxu0 0
    %5858 = vmatpush2.bf16.msra.mxu0 %v5169
    %5859 = vmatprep.subr.bf16.mxu0 0
    %5860 = vmatpush2.bf16.msra.mxu0 %v5168
    %5861 = vmatprep.subr.bf16.mxu0 0
    %5862 = vmatpush2.bf16.msra.mxu0 %v5167
    %5863 = vmatprep.mubr.bf16.mxu0 %v3452
    %5864 = vmatmul.mubr.bf16.gmra.mxu0 %v3451
    %v5865 = vpop.f32.mrf.mxu0
    %v5866 = vadd.f32 %v5826, %v5865
    %v5867 = vpop.f32.mrf.mxu0
    %v5868 = vpop.f32.mrf.mxu0
    %v5869 = vpop.f32.mrf.mxu0
    %5870 = vdwg.mxu0
    %5871 = vmatprep.subr.bf16.mxu0 0
    %5872 = vmatpush1.bf16.msra.mxu0 %v5182
    %5873 = vmatprep.subr.bf16.mxu0 0
    %5874 = vmatpush1.bf16.msra.mxu0 %v5181
    %5875 = vmatprep.subr.bf16.mxu0 0
    %5876 = vmatpush1.bf16.msra.mxu0 %v5180
    %5877 = vmatprep.subr.bf16.mxu0 0
    %5878 = vmatpush1.bf16.msra.mxu0 %v5179
    %5879 = vmatprep.subr.bf16.mxu0 0
    %5880 = vmatpush1.bf16.msra.mxu0 %v5178
    %5881 = vmatprep.subr.bf16.mxu0 0
    %5882 = vmatpush1.bf16.msra.mxu0 %v5177
    %5883 = vmatprep.subr.bf16.mxu0 0
    %5884 = vmatpush1.bf16.msra.mxu0 %v5176
    %5885 = vmatprep.subr.bf16.mxu0 0
    %5886 = vmatpush1.bf16.msra.mxu0 %v5175
    %5887 = vmatprep.subr.bf16.mxu0 0
    %5888 = vmatpush2.bf16.msra.mxu0 %v5190
    %5889 = vmatprep.subr.bf16.mxu0 0
    %5890 = vmatpush2.bf16.msra.mxu0 %v5189
    %5891 = vmatprep.subr.bf16.mxu0 0
    %5892 = vmatpush2.bf16.msra.mxu0 %v5188
    %5893 = vmatprep.subr.bf16.mxu0 0
    %5894 = vmatpush2.bf16.msra.mxu0 %v5187
    %5895 = vmatprep.subr.bf16.mxu0 0
    %5896 = vmatpush2.bf16.msra.mxu0 %v5186
    %5897 = vmatprep.subr.bf16.mxu0 0
    %5898 = vmatpush2.bf16.msra.mxu0 %v5185
    %5899 = vmatprep.subr.bf16.mxu0 0
    %5900 = vmatpush2.bf16.msra.mxu0 %v5184
    %5901 = vmatprep.subr.bf16.mxu0 0
    %5902 = vmatpush2.bf16.msra.mxu0 %v5183
    %5903 = vmatprep.mubr.bf16.mxu0 %v3454
    %5904 = vmatmul.mubr.bf16.gmra.mxu0 %v3453
    %v5905 = vpop.f32.mrf.mxu0
    %v5906 = vadd.f32 %v5866, %v5905
    %v5907 = vpop.f32.mrf.mxu0
    %v5908 = vpop.f32.mrf.mxu0
    %v5909 = vpop.f32.mrf.mxu0
    %5910 = vdwg.mxu0
    %5911 = vmatprep.subr.bf16.mxu0 0
    %5912 = vmatpush1.bf16.msra.mxu0 %v5198
    %5913 = vmatprep.subr.bf16.mxu0 0
    %5914 = vmatpush1.bf16.msra.mxu0 %v5197
    %5915 = vmatprep.subr.bf16.mxu0 0
    %5916 = vmatpush1.bf16.msra.mxu0 %v5196
    %5917 = vmatprep.subr.bf16.mxu0 0
    %5918 = vmatpush1.bf16.msra.mxu0 %v5195
    %5919 = vmatprep.subr.bf16.mxu0 0
    %5920 = vmatpush1.bf16.msra.mxu0 %v5194
    %5921 = vmatprep.subr.bf16.mxu0 0
    %5922 = vmatpush1.bf16.msra.mxu0 %v5193
    %5923 = vmatprep.subr.bf16.mxu0 0
    %5924 = vmatpush1.bf16.msra.mxu0 %v5192
    %5925 = vmatprep.subr.bf16.mxu0 0
    %5926 = vmatpush1.bf16.msra.mxu0 %v5191
    %5927 = vmatprep.subr.bf16.mxu0 0
    %5928 = vmatpush2.bf16.msra.mxu0 %v5206
    %5929 = vmatprep.subr.bf16.mxu0 0
    %5930 = vmatpush2.bf16.msra.mxu0 %v5205
    %5931 = vmatprep.subr.bf16.mxu0 0
    %5932 = vmatpush2.bf16.msra.mxu0 %v5204
    %5933 = vmatprep.subr.bf16.mxu0 0
    %5934 = vmatpush2.bf16.msra.mxu0 %v5203
    %5935 = vmatprep.subr.bf16.mxu0 0
    %5936 = vmatpush2.bf16.msra.mxu0 %v5202
    %5937 = vmatprep.subr.bf16.mxu0 0
    %5938 = vmatpush2.bf16.msra.mxu0 %v5201
    %5939 = vmatprep.subr.bf16.mxu0 0
    %5940 = vmatpush2.bf16.msra.mxu0 %v5200
    %5941 = vmatprep.subr.bf16.mxu0 0
    %5942 = vmatpush2.bf16.msra.mxu0 %v5199
    %5943 = vmatprep.mubr.bf16.mxu0 %v3456
    %5944 = vmatmul.mubr.bf16.gmra.mxu0 %v3455
    %v5945 = vpop.f32.mrf.mxu0
    %v5946 = vadd.f32 %v5906, %v5945
    %v5947 = vpop.f32.mrf.mxu0
    %v5948 = vpop.f32.mrf.mxu0
    %v5949 = vpop.f32.mrf.mxu0
    %5950 = vdwg.mxu0
    %5951 = vmatprep.subr.bf16.mxu0 0
    %5952 = vmatpush1.bf16.msra.mxu0 %v5214
    %5953 = vmatprep.subr.bf16.mxu0 0
    %5954 = vmatpush1.bf16.msra.mxu0 %v5213
    %5955 = vmatprep.subr.bf16.mxu0 0
    %5956 = vmatpush1.bf16.msra.mxu0 %v5212
    %5957 = vmatprep.subr.bf16.mxu0 0
    %5958 = vmatpush1.bf16.msra.mxu0 %v5211
    %5959 = vmatprep.subr.bf16.mxu0 0
    %5960 = vmatpush1.bf16.msra.mxu0 %v5210
    %5961 = vmatprep.subr.bf16.mxu0 0
    %5962 = vmatpush1.bf16.msra.mxu0 %v5209
    %5963 = vmatprep.subr.bf16.mxu0 0
    %5964 = vmatpush1.bf16.msra.mxu0 %v5208
    %5965 = vmatprep.subr.bf16.mxu0 0
    %5966 = vmatpush1.bf16.msra.mxu0 %v5207
    %5967 = vmatprep.subr.bf16.mxu0 0
    %5968 = vmatpush2.bf16.msra.mxu0 %v5222
    %5969 = vmatprep.subr.bf16.mxu0 0
    %5970 = vmatpush2.bf16.msra.mxu0 %v5221
    %5971 = vmatprep.subr.bf16.mxu0 0
    %5972 = vmatpush2.bf16.msra.mxu0 %v5220
    %5973 = vmatprep.subr.bf16.mxu0 0
    %5974 = vmatpush2.bf16.msra.mxu0 %v5219
    %5975 = vmatprep.subr.bf16.mxu0 0
    %5976 = vmatpush2.bf16.msra.mxu0 %v5218
    %5977 = vmatprep.subr.bf16.mxu0 0
    %5978 = vmatpush2.bf16.msra.mxu0 %v5217
    %5979 = vmatprep.subr.bf16.mxu0 0
    %5980 = vmatpush2.bf16.msra.mxu0 %v5216
    %5981 = vmatprep.subr.bf16.mxu0 0
    %5982 = vmatpush2.bf16.msra.mxu0 %v5215
    %5983 = vmatprep.mubr.bf16.mxu0 %v3458
    %5984 = vmatmul.mubr.bf16.gmra.mxu0 %v3457
    %v5985 = vpop.f32.mrf.mxu0
    %v5986 = vadd.f32 %v5946, %v5985
    %v5987 = vpop.f32.mrf.mxu0
    %v5988 = vpop.f32.mrf.mxu0
    %v5989 = vpop.f32.mrf.mxu0
    %5990 = vdwg.mxu0
    %5991 = vmatprep.subr.bf16.mxu0 0
    %5992 = vmatpush1.bf16.msra.mxu0 %v5230
    %5993 = vmatprep.subr.bf16.mxu0 0
    %5994 = vmatpush1.bf16.msra.mxu0 %v5229
    %5995 = vmatprep.subr.bf16.mxu0 0
    %5996 = vmatpush1.bf16.msra.mxu0 %v5228
    %5997 = vmatprep.subr.bf16.mxu0 0
    %5998 = vmatpush1.bf16.msra.mxu0 %v5227
    %5999 = vmatprep.subr.bf16.mxu0 0
    %6000 = vmatpush1.bf16.msra.mxu0 %v5226
    %6001 = vmatprep.subr.bf16.mxu0 0
    %6002 = vmatpush1.bf16.msra.mxu0 %v5225
    %6003 = vmatprep.subr.bf16.mxu0 0
    %6004 = vmatpush1.bf16.msra.mxu0 %v5224
    %6005 = vmatprep.subr.bf16.mxu0 0
    %6006 = vmatpush1.bf16.msra.mxu0 %v5223
    %6007 = vmatprep.subr.bf16.mxu0 0
    %6008 = vmatpush2.bf16.msra.mxu0 %v5238
    %6009 = vmatprep.subr.bf16.mxu0 0
    %6010 = vmatpush2.bf16.msra.mxu0 %v5237
    %6011 = vmatprep.subr.bf16.mxu0 0
    %6012 = vmatpush2.bf16.msra.mxu0 %v5236
    %6013 = vmatprep.subr.bf16.mxu0 0
    %6014 = vmatpush2.bf16.msra.mxu0 %v5235
    %6015 = vmatprep.subr.bf16.mxu0 0
    %6016 = vmatpush2.bf16.msra.mxu0 %v5234
    %6017 = vmatprep.subr.bf16.mxu0 0
    %6018 = vmatpush2.bf16.msra.mxu0 %v5233
    %6019 = vmatprep.subr.bf16.mxu0 0
    %6020 = vmatpush2.bf16.msra.mxu0 %v5232
    %6021 = vmatprep.subr.bf16.mxu0 0
    %6022 = vmatpush2.bf16.msra.mxu0 %v5231
    %6023 = vmatprep.mubr.bf16.mxu0 %v3460
    %6024 = vmatmul.mubr.bf16.gmra.mxu0 %v3459
    %v6025 = vpop.f32.mrf.mxu0
    %v6026 = vadd.f32 %v5986, %v6025
    %v6027 = vpop.f32.mrf.mxu0
    %v6028 = vpop.f32.mrf.mxu0
    %v6029 = vpop.f32.mrf.mxu0
    %6030 = vdwg.mxu0
    %6031 = vmatprep.subr.bf16.mxu0 0
    %6032 = vmatpush1.bf16.msra.mxu0 %v5246
    %6033 = vmatprep.subr.bf16.mxu0 0
    %6034 = vmatpush1.bf16.msra.mxu0 %v5245
    %6035 = vmatprep.subr.bf16.mxu0 0
    %6036 = vmatpush1.bf16.msra.mxu0 %v5244
    %6037 = vmatprep.subr.bf16.mxu0 0
    %6038 = vmatpush1.bf16.msra.mxu0 %v5243
    %6039 = vmatprep.subr.bf16.mxu0 0
    %6040 = vmatpush1.bf16.msra.mxu0 %v5242
    %6041 = vmatprep.subr.bf16.mxu0 0
    %6042 = vmatpush1.bf16.msra.mxu0 %v5241
    %6043 = vmatprep.subr.bf16.mxu0 0
    %6044 = vmatpush1.bf16.msra.mxu0 %v5240
    %6045 = vmatprep.subr.bf16.mxu0 0
    %6046 = vmatpush1.bf16.msra.mxu0 %v5239
    %6047 = vmatprep.subr.bf16.mxu0 0
    %6048 = vmatpush2.bf16.msra.mxu0 %v5254
    %6049 = vmatprep.subr.bf16.mxu0 0
    %6050 = vmatpush2.bf16.msra.mxu0 %v5253
    %6051 = vmatprep.subr.bf16.mxu0 0
    %6052 = vmatpush2.bf16.msra.mxu0 %v5252
    %6053 = vmatprep.subr.bf16.mxu0 0
    %6054 = vmatpush2.bf16.msra.mxu0 %v5251
    %6055 = vmatprep.subr.bf16.mxu0 0
    %6056 = vmatpush2.bf16.msra.mxu0 %v5250
    %6057 = vmatprep.subr.bf16.mxu0 0
    %6058 = vmatpush2.bf16.msra.mxu0 %v5249
    %6059 = vmatprep.subr.bf16.mxu0 0
    %6060 = vmatpush2.bf16.msra.mxu0 %v5248
    %6061 = vmatprep.subr.bf16.mxu0 0
    %6062 = vmatpush2.bf16.msra.mxu0 %v5247
    %6063 = vmatprep.mubr.bf16.mxu0 %v3462
    %6064 = vmatmul.mubr.bf16.gmra.mxu0 %v3461
    %v6065 = vpop.f32.mrf.mxu0
    %v6066 = vadd.f32 %v6026, %v6065
    %v6067 = vpop.f32.mrf.mxu0
    %v6068 = vpop.f32.mrf.mxu0
    %v6069 = vpop.f32.mrf.mxu0
    %6070 = vdwg.mxu0
    %6071 = vmatprep.subr.bf16.mxu0 0
    %6072 = vmatpush1.bf16.msra.mxu0 %v5262
    %6073 = vmatprep.subr.bf16.mxu0 0
    %6074 = vmatpush1.bf16.msra.mxu0 %v5261
    %6075 = vmatprep.subr.bf16.mxu0 0
    %6076 = vmatpush1.bf16.msra.mxu0 %v5260
    %6077 = vmatprep.subr.bf16.mxu0 0
    %6078 = vmatpush1.bf16.msra.mxu0 %v5259
    %6079 = vmatprep.subr.bf16.mxu0 0
    %6080 = vmatpush1.bf16.msra.mxu0 %v5258
    %6081 = vmatprep.subr.bf16.mxu0 0
    %6082 = vmatpush1.bf16.msra.mxu0 %v5257
    %6083 = vmatprep.subr.bf16.mxu0 0
    %6084 = vmatpush1.bf16.msra.mxu0 %v5256
    %6085 = vmatprep.subr.bf16.mxu0 0
    %6086 = vmatpush1.bf16.msra.mxu0 %v5255
    %6087 = vmatprep.subr.bf16.mxu0 0
    %6088 = vmatpush2.bf16.msra.mxu0 %v5270
    %6089 = vmatprep.subr.bf16.mxu0 0
    %6090 = vmatpush2.bf16.msra.mxu0 %v5269
    %6091 = vmatprep.subr.bf16.mxu0 0
    %6092 = vmatpush2.bf16.msra.mxu0 %v5268
    %6093 = vmatprep.subr.bf16.mxu0 0
    %6094 = vmatpush2.bf16.msra.mxu0 %v5267
    %6095 = vmatprep.subr.bf16.mxu0 0
    %6096 = vmatpush2.bf16.msra.mxu0 %v5266
    %6097 = vmatprep.subr.bf16.mxu0 0
    %6098 = vmatpush2.bf16.msra.mxu0 %v5265
    %6099 = vmatprep.subr.bf16.mxu0 0
    %6100 = vmatpush2.bf16.msra.mxu0 %v5264
    %6101 = vmatprep.subr.bf16.mxu0 0
    %6102 = vmatpush2.bf16.msra.mxu0 %v5263
    %6103 = vmatprep.mubr.bf16.mxu0 %v3464
    %6104 = vmatmul.mubr.bf16.gmra.mxu0 %v3463
    %v6105 = vpop.f32.mrf.mxu0
    %v6106 = vadd.f32 %v6066, %v6105
    %v6107 = vpop.f32.mrf.mxu0
    %v6108 = vpop.f32.mrf.mxu0
    %v6109 = vpop.f32.mrf.mxu0
    %6110 = vdwg.mxu0
    %6111 = vmatprep.subr.bf16.mxu0 0
    %6112 = vmatpush1.bf16.msra.mxu0 %v5278
    %6113 = vmatprep.subr.bf16.mxu0 0
    %6114 = vmatpush1.bf16.msra.mxu0 %v5277
    %6115 = vmatprep.subr.bf16.mxu0 0
    %6116 = vmatpush1.bf16.msra.mxu0 %v5276
    %6117 = vmatprep.subr.bf16.mxu0 0
    %6118 = vmatpush1.bf16.msra.mxu0 %v5275
    %6119 = vmatprep.subr.bf16.mxu0 0
    %6120 = vmatpush1.bf16.msra.mxu0 %v5274
    %6121 = vmatprep.subr.bf16.mxu0 0
    %6122 = vmatpush1.bf16.msra.mxu0 %v5273
    %6123 = vmatprep.subr.bf16.mxu0 0
    %6124 = vmatpush1.bf16.msra.mxu0 %v5272
    %6125 = vmatprep.subr.bf16.mxu0 0
    %6126 = vmatpush1.bf16.msra.mxu0 %v5271
    %6127 = vmatprep.subr.bf16.mxu0 0
    %6128 = vmatpush2.bf16.msra.mxu0 %v5286
    %6129 = vmatprep.subr.bf16.mxu0 0
    %6130 = vmatpush2.bf16.msra.mxu0 %v5285
    %6131 = vmatprep.subr.bf16.mxu0 0
    %6132 = vmatpush2.bf16.msra.mxu0 %v5284
    %6133 = vmatprep.subr.bf16.mxu0 0
    %6134 = vmatpush2.bf16.msra.mxu0 %v5283
    %6135 = vmatprep.subr.bf16.mxu0 0
    %6136 = vmatpush2.bf16.msra.mxu0 %v5282
    %6137 = vmatprep.subr.bf16.mxu0 0
    %6138 = vmatpush2.bf16.msra.mxu0 %v5281
    %6139 = vmatprep.subr.bf16.mxu0 0
    %6140 = vmatpush2.bf16.msra.mxu0 %v5280
    %6141 = vmatprep.subr.bf16.mxu0 0
    %6142 = vmatpush2.bf16.msra.mxu0 %v5279
    %6143 = vmatprep.mubr.bf16.mxu0 %v3466
    %6144 = vmatmul.mubr.bf16.gmra.mxu0 %v3465
    %v6145 = vpop.f32.mrf.mxu0
    %v6146 = vadd.f32 %v6106, %v6145
    %v6147 = vpop.f32.mrf.mxu0
    %v6148 = vpop.f32.mrf.mxu0
    %v6149 = vpop.f32.mrf.mxu0
    %6150 = vdwg.mxu0
    %6151 = vmatprep.subr.bf16.mxu0 0
    %6152 = vmatpush1.bf16.msra.mxu0 %v5294
    %6153 = vmatprep.subr.bf16.mxu0 0
    %6154 = vmatpush1.bf16.msra.mxu0 %v5293
    %6155 = vmatprep.subr.bf16.mxu0 0
    %6156 = vmatpush1.bf16.msra.mxu0 %v5292
    %6157 = vmatprep.subr.bf16.mxu0 0
    %6158 = vmatpush1.bf16.msra.mxu0 %v5291
    %6159 = vmatprep.subr.bf16.mxu0 0
    %6160 = vmatpush1.bf16.msra.mxu0 %v5290
    %6161 = vmatprep.subr.bf16.mxu0 0
    %6162 = vmatpush1.bf16.msra.mxu0 %v5289
    %6163 = vmatprep.subr.bf16.mxu0 0
    %6164 = vmatpush1.bf16.msra.mxu0 %v5288
    %6165 = vmatprep.subr.bf16.mxu0 0
    %6166 = vmatpush1.bf16.msra.mxu0 %v5287
    %6167 = vmatprep.subr.bf16.mxu0 0
    %6168 = vmatpush2.bf16.msra.mxu0 %v5302
    %6169 = vmatprep.subr.bf16.mxu0 0
    %6170 = vmatpush2.bf16.msra.mxu0 %v5301
    %6171 = vmatprep.subr.bf16.mxu0 0
    %6172 = vmatpush2.bf16.msra.mxu0 %v5300
    %6173 = vmatprep.subr.bf16.mxu0 0
    %6174 = vmatpush2.bf16.msra.mxu0 %v5299
    %6175 = vmatprep.subr.bf16.mxu0 0
    %6176 = vmatpush2.bf16.msra.mxu0 %v5298
    %6177 = vmatprep.subr.bf16.mxu0 0
    %6178 = vmatpush2.bf16.msra.mxu0 %v5297
    %6179 = vmatprep.subr.bf16.mxu0 0
    %6180 = vmatpush2.bf16.msra.mxu0 %v5296
    %6181 = vmatprep.subr.bf16.mxu0 0
    %6182 = vmatpush2.bf16.msra.mxu0 %v5295
    %6183 = vmatprep.mubr.bf16.mxu0 %v3468
    %6184 = vmatmul.mubr.bf16.gmra.mxu0 %v3467
    %v6185 = vpop.f32.mrf.mxu0
    %v6186 = vadd.f32 %v6146, %v6185
    %v6187 = vpop.f32.mrf.mxu0
    %v6188 = vpop.f32.mrf.mxu0
    %v6189 = vpop.f32.mrf.mxu0
    %6190 = vdwg.mxu0
    %6191 = vmatprep.subr.bf16.mxu0 0
    %6192 = vmatpush1.bf16.msra.mxu0 %v5310
    %6193 = vmatprep.subr.bf16.mxu0 0
    %6194 = vmatpush1.bf16.msra.mxu0 %v5309
    %6195 = vmatprep.subr.bf16.mxu0 0
    %6196 = vmatpush1.bf16.msra.mxu0 %v5308
    %6197 = vmatprep.subr.bf16.mxu0 0
    %6198 = vmatpush1.bf16.msra.mxu0 %v5307
    %6199 = vmatprep.subr.bf16.mxu0 0
    %6200 = vmatpush1.bf16.msra.mxu0 %v5306
    %6201 = vmatprep.subr.bf16.mxu0 0
    %6202 = vmatpush1.bf16.msra.mxu0 %v5305
    %6203 = vmatprep.subr.bf16.mxu0 0
    %6204 = vmatpush1.bf16.msra.mxu0 %v5304
    %6205 = vmatprep.subr.bf16.mxu0 0
    %6206 = vmatpush1.bf16.msra.mxu0 %v5303
    %6207 = vmatprep.subr.bf16.mxu0 0
    %6208 = vmatpush2.bf16.msra.mxu0 %v5318
    %6209 = vmatprep.subr.bf16.mxu0 0
    %6210 = vmatpush2.bf16.msra.mxu0 %v5317
    %6211 = vmatprep.subr.bf16.mxu0 0
    %6212 = vmatpush2.bf16.msra.mxu0 %v5316
    %6213 = vmatprep.subr.bf16.mxu0 0
    %6214 = vmatpush2.bf16.msra.mxu0 %v5315
    %6215 = vmatprep.subr.bf16.mxu0 0
    %6216 = vmatpush2.bf16.msra.mxu0 %v5314
    %6217 = vmatprep.subr.bf16.mxu0 0
    %6218 = vmatpush2.bf16.msra.mxu0 %v5313
    %6219 = vmatprep.subr.bf16.mxu0 0
    %6220 = vmatpush2.bf16.msra.mxu0 %v5312
    %6221 = vmatprep.subr.bf16.mxu0 0
    %6222 = vmatpush2.bf16.msra.mxu0 %v5311
    %6223 = vmatprep.mubr.bf16.mxu0 %v3470
    %6224 = vmatmul.mubr.bf16.gmra.mxu0 %v3469
    %v6225 = vpop.f32.mrf.mxu0
    %v6226 = vadd.f32 %v6186, %v6225
    %v6227 = vpop.f32.mrf.mxu0
    %v6228 = vpop.f32.mrf.mxu0
    %v6229 = vpop.f32.mrf.mxu0
    %6230 = vdwg.mxu0
    %6231 = vmatprep.subr.bf16.mxu0 0
    %6232 = vmatpush1.bf16.msra.mxu0 %v5326
    %6233 = vmatprep.subr.bf16.mxu0 0
    %6234 = vmatpush1.bf16.msra.mxu0 %v5325
    %6235 = vmatprep.subr.bf16.mxu0 0
    %6236 = vmatpush1.bf16.msra.mxu0 %v5324
    %6237 = vmatprep.subr.bf16.mxu0 0
    %6238 = vmatpush1.bf16.msra.mxu0 %v5323
    %6239 = vmatprep.subr.bf16.mxu0 0
    %6240 = vmatpush1.bf16.msra.mxu0 %v5322
    %6241 = vmatprep.subr.bf16.mxu0 0
    %6242 = vmatpush1.bf16.msra.mxu0 %v5321
    %6243 = vmatprep.subr.bf16.mxu0 0
    %6244 = vmatpush1.bf16.msra.mxu0 %v5320
    %6245 = vmatprep.subr.bf16.mxu0 0
    %6246 = vmatpush1.bf16.msra.mxu0 %v5319
    %6247 = vmatprep.subr.bf16.mxu0 0
    %6248 = vmatpush2.bf16.msra.mxu0 0
    %6249 = vmatprep.subr.bf16.mxu0 0
    %6250 = vmatpush2.bf16.msra.mxu0 0
    %6251 = vmatprep.subr.bf16.mxu0 0
    %6252 = vmatpush2.bf16.msra.mxu0 0
    %6253 = vmatprep.subr.bf16.mxu0 0
    %6254 = vmatpush2.bf16.msra.mxu0 0
    %6255 = vmatprep.subr.bf16.mxu0 0
    %6256 = vmatpush2.bf16.msra.mxu0 0
    %6257 = vmatprep.subr.bf16.mxu0 0
    %6258 = vmatpush2.bf16.msra.mxu0 0
    %6259 = vmatprep.subr.bf16.mxu0 0
    %6260 = vmatpush2.bf16.msra.mxu0 0
    %6261 = vmatprep.subr.bf16.mxu0 0
    %6262 = vmatpush2.bf16.msra.mxu0 0
    %6263 = vmatprep.mubr.bf16.mxu0 0
    %6264 = vmatmul.mubr.bf16.gmra.mxu0 %v3471
    %v6265 = vpop.f32.mrf.mxu0
    %v6266 = vadd.f32 %v6226, %v6265
    %v6267 = vpop.f32.mrf.mxu0
    %v6268 = vpop.f32.mrf.mxu0
    %v6269 = vpop.f32.mrf.mxu0
    %6270 = vdwg.mxu0
    %v6271 = vmax.f32 %v6266, 0.0
    %v6272 = vmul.f32 %v6271, %v6271
    %6273 = vrot.lane.b32.xlu0 %v6272, 2
    %v6274 = vpop.permute.xlu0 %6273
    %v6275 = vadd.f32 %v6272, %v6274
    %6276 = vrot.lane.b32.xlu0 %v6272, 1
    %v6277 = vpop.permute.xlu0 %6276
    %v6278 = vadd.f32 %v6275, %v6277
    %6279 = vrot.lane.b32.xlu0 %v6272, 127
    %v6280 = vpop.permute.xlu0 %6279
    %v6281 = vadd.f32 %v6278, %v6280
    %v6282 = vmul.f32 %v6281, 2.5e-05
    %v6283 = vadd.f32 %v6282, 2.0
    %v6284 = vrsqrt.pop %v6283
    %v6285 = vrsqrt.pop %v6284
    %v6286 = vmul.f32 %v6284, %v6285
    %vm6287 = vcmp.eq.f32.partialorder %v6284, inf
    %v6288 = vsel %vm6287, %v6284, %v6286
    %vm6289 = vcmp.eq.f32.partialorder %v6284, 0.0
    %v6290 = vand.u32 %v6284, 2147483648
    %v6291 = vsel %vm6289, %v6290, %v6288
    %v6292 = vmul.f32 %v6284, %v6291
    %v6293 = vmul.f32 %v6271, %v6292
    %v6294 = vpack.c.bf16 %v6293, %v6293
    %v6295 = vld [vmem:[#allocation9] sm:$0xf]
    %v6296 = vld [vmem:[#allocation9 + $0x4] sm:$0xf]
    %v6297 = vld [vmem:[#allocation9 + $0x8] sm:$0xf]
    %v6298 = vld [vmem:[#allocation9 + $0xc] sm:$0xf]
    %v6299 = vld [vmem:[#allocation9 + $0x10] sm:$0xf]
    %v6300 = vld [vmem:[#allocation9 + $0x14] sm:$0xf]
    %v6301 = vld [vmem:[#allocation9 + $0x18] sm:$0xf]
    %v6302 = vld [vmem:[#allocation9 + $0x1c] sm:$0xf]
    %v6303 = vld [vmem:[#allocation9 + $0x20] sm:$0xf]
    %v6304 = vld [vmem:[#allocation9 + $0x24] sm:$0xf]
    %v6305 = vld [vmem:[#allocation9 + $0x28] sm:$0xf]
    %v6306 = vld [vmem:[#allocation9 + $0x2c] sm:$0xf]
    %v6307 = vld [vmem:[#allocation9 + $0x30] sm:$0xf]
    %v6308 = vld [vmem:[#allocation9 + $0x34] sm:$0xf]
    %v6309 = vld [vmem:[#allocation9 + $0x38] sm:$0xf]
    %v6310 = vld [vmem:[#allocation9 + $0x3c] sm:$0xf]
    %v6311 = vld [vmem:[#allocation10] sm:$0x1]
    %v6313 = vlaneseq
    %v6314 = vshrl.u32 %v6313, 7
    %v6315 = vsub.s32 0, %v6314
    %v6316 = vrot.slane %v6311, %v6315
    %v6334 = vunpack.c.l.b16 %v6295
    %v6335 = vunpack.c.l.b16 %v6296
    %v6336 = vunpack.c.l.b16 %v6297
    %v6337 = vunpack.c.l.b16 %v6298
    %v6338 = vunpack.c.l.b16 %v6299
    %v6339 = vunpack.c.l.b16 %v6300
    %v6340 = vunpack.c.l.b16 %v6301
    %v6341 = vunpack.c.l.b16 %v6302
    %v6342 = vunpack.c.l.b16 %v6303
    %v6343 = vunpack.c.l.b16 %v6304
    %v6344 = vunpack.c.l.b16 %v6305
    %v6345 = vunpack.c.l.b16 %v6306
    %v6346 = vunpack.c.l.b16 %v6307
    %v6347 = vunpack.c.l.b16 %v6308
    %v6348 = vunpack.c.l.b16 %v6309
    %v6349 = vunpack.c.l.b16 %v6310
    %v6350 = vpack.c.b16 %v6335, %v6334
    %v6351 = vpack.c.b16 %v6337, %v6336
    %v6352 = vpack.c.b16 %v6339, %v6338
    %v6353 = vpack.c.b16 %v6341, %v6340
    %v6354 = vpack.c.b16 %v6343, %v6342
    %v6355 = vpack.c.b16 %v6345, %v6344
    %v6356 = vpack.c.b16 %v6347, %v6346
    %v6357 = vpack.c.b16 %v6349, %v6348
    %6366 = vmatprep.subr.bf16.mxu0 0
    %6367 = vmatpush1.bf16.msra.mxu0 %v6357
    %6368 = vmatprep.subr.bf16.mxu0 0
    %6369 = vmatpush1.bf16.msra.mxu0 %v6356
    %6370 = vmatprep.subr.bf16.mxu0 0
    %6371 = vmatpush1.bf16.msra.mxu0 %v6355
    %6372 = vmatprep.subr.bf16.mxu0 0
    %6373 = vmatpush1.bf16.msra.mxu0 %v6354
    %6374 = vmatprep.subr.bf16.mxu0 0
    %6375 = vmatpush1.bf16.msra.mxu0 %v6353
    %6376 = vmatprep.subr.bf16.mxu0 0
    %6377 = vmatpush1.bf16.msra.mxu0 %v6352
    %6378 = vmatprep.subr.bf16.mxu0 0
    %6379 = vmatpush1.bf16.msra.mxu0 %v6351
    %6380 = vmatprep.subr.bf16.mxu0 0
    %6381 = vmatpush1.bf16.msra.mxu0 %v6350
    %6382 = vmatprep.subr.bf16.mxu0 0
    %6383 = vmatpush2.bf16.msra.mxu0 0
    %6384 = vmatprep.subr.bf16.mxu0 0
    %6385 = vmatpush2.bf16.msra.mxu0 0
    %6386 = vmatprep.subr.bf16.mxu0 0
    %6387 = vmatpush2.bf16.msra.mxu0 0
    %6388 = vmatprep.subr.bf16.mxu0 0
    %6389 = vmatpush2.bf16.msra.mxu0 0
    %6390 = vmatprep.subr.bf16.mxu0 0
    %6391 = vmatpush2.bf16.msra.mxu0 0
    %6392 = vmatprep.subr.bf16.mxu0 0
    %6393 = vmatpush2.bf16.msra.mxu0 0
    %6394 = vmatprep.subr.bf16.mxu0 0
    %6395 = vmatpush2.bf16.msra.mxu0 0
    %6396 = vmatprep.subr.bf16.mxu0 0
    %6397 = vmatpush2.bf16.msra.mxu0 0
    %6398 = vmatprep.mubr.bf16.mxu0 0
    %6399 = vmatmul.mubr.bf16.gmra.mxu0 %v6294
    %v6400 = vpop.f32.mrf.mxu0
    %v6401 = vadd.f32 %v6316, %v6400
    %v6402 = vpop.f32.mrf.mxu0
    %v6403 = vpop.f32.mrf.mxu0
    %v6404 = vpop.f32.mrf.mxu0
    %6405 = vdwg.mxu0
    %v6406 = vtanh.pop %v6401
    %6407 = vst [vmem:[%s7] sm:$0xff] %v6406
    // Predicated region
    $region54: #{_lambda_.1} parent=1 // pred_check
      _
    $region55: #{_lambda_.1} parent=1 // pred_check_branch
      %6409 = sbr.rel (0) target = $region57
    $region56: #{_lambda_.1} parent=1 // pred_region
      _
    $region57: #{_lambda_.1} parent=1 // pred_fallthru
      _
    // Predicated region
    $region58: #{_lambda_.1} parent=1 // pred_check
      _
    $region59: #{_lambda_.1} parent=1 // pred_check_branch
      %6411 = sbr.rel (0) target = $region61
    $region60: #{_lambda_.1} parent=1 // pred_region
      _
    $region61: #{_lambda_.1} parent=1 // pred_fallthru
      _
    %6412 = vsyncpa [#allocation3], 1
    %6413 = vsyncpa [#allocation5], 1
    %6414 = vsyncpa [#allocation8], 1
    %6415 = vsyncpa [#allocation11], 1

</llo_original>
